<compile_context>
chip_gen: v7x
topology: tpu7x:2x2x1
jax: 0.10.0
libtpu: 0.0.40
codegen_flags: <defaults>
</compile_context>

<pallas_src>
import jax
import jax.numpy as jnp
import numpy as np
from jax.experimental import pallas as pl
from jax.experimental.pallas import tpu as pltpu

CONV_DTYPE = jnp.bfloat16   # MXU operand dtype; accumulation is always f32
_SUBLANE = 16               # row rounding safe for both f32 (8) and bf16 (16) tiling


def _round_up(x, m):
    return ((x + m - 1) // m) * m


# ---------------------------------------------------------------------------
# Kernel 1: conv1 (im2col matmul) + 2x2 max-pool + bias + relu, gridded over rows
# ---------------------------------------------------------------------------
def conv_pool_relu_kernel(p_ref, w_ref, b_ref, o_ref):
    # p_ref: (4, MT, K) bf16 — one slab per 2x2 pool offset (im2col rows)
    # w_ref: (K, Cout)  bf16 — flattened conv weight (VMEM-resident, constant index_map)
    # b_ref: (1, Cout)  f32
    # o_ref: (MT, Cout) f32  — relu(maxpool(conv(x)))
    g, mt, k = p_ref.shape
    cout = w_ref.shape[1]
    # Single MXU push over all 4 pool offsets (4*MT rows) instead of 4 small dots.
    y = jnp.dot(p_ref[...].reshape(g * mt, k), w_ref[...],
                preferred_element_type=jnp.float32)
    y = jnp.max(y.reshape(g, mt, cout), axis=0)       # 2x2 max pooling
    o_ref[...] = jnp.maximum(y + b_ref[...], 0.0)     # bias hoisted past the max, relu


def conv_pool_relu(patches, w_mat, b_row, *, m_tile=1024):
    # m_tile=1024 keeps the live block ~1-2 MiB (bf16), well inside even v5e's
    # 16 MiB scoped-VMEM default; raise on v6e if desired.
    g, m, k = patches.shape
    cout = w_mat.shape[1]
    mt = min(m_tile, _round_up(m, _SUBLANE))
    m_pad = _round_up(m, mt)
    if m_pad != m:
        patches = jnp.pad(patches, ((0, 0), (0, m_pad - m), (0, 0)))
    out = pl.pallas_call(
        conv_pool_relu_kernel,
        out_shape=jax.ShapeDtypeStruct((m_pad, cout), jnp.float32),
        grid=(m_pad // mt,),
        in_specs=[
            pl.BlockSpec((g, mt, k), lambda i: (0, i, 0)),
            pl.BlockSpec((k, cout), lambda i: (0, 0)),   # weight stays VMEM-resident
            pl.BlockSpec((1, cout), lambda i: (0, 0)),   # bias stays VMEM-resident
        ],
        out_specs=pl.BlockSpec((mt, cout), lambda i: (i, 0)),
        compiler_params=pltpu.CompilerParams(dimension_semantics=("parallel",)),
    )(patches, w_mat, b_row)
    return out[:m]


# ---------------------------------------------------------------------------
# Kernel 2: fused conv2 + 2x2 max-pool + relu + flatten + ffn1 + ffn2 + log_softmax,
#           gridded over batch tiles
# ---------------------------------------------------------------------------
def conv2_head_kernel(p_ref, wc_ref, bc_ref, w1_ref, b1_ref, w2_ref, b2_ref,
                      o_ref, flat_ref):
    # p_ref : (4, NT*P, K) bf16 im2col rows for conv2 (P = pooled positions / image)
    # wc/bc : conv2 weight (K, C2) bf16 / bias (1, C2) f32
    # w1/b1 : head layer 1; w1 rows pre-permuted so the NHWC flatten below matches
    #         torch's NCHW .view(N, -1)
    # w2/b2 : head layer 2
    # o_ref : (NT, 10) f32 log-probabilities
    # flat  : (NT, P*C2) f32 VMEM scratch — lane-dense head input
    g, rows, k = p_ref.shape
    c2 = wc_ref.shape[1]
    nt = o_ref.shape[0]
    pos = rows // nt

    y = jnp.dot(p_ref[...].reshape(g * rows, k), wc_ref[...],
                preferred_element_type=jnp.float32)
    y = jnp.max(y.reshape(g, rows, c2), axis=0)       # 2x2 max pooling
    y = jnp.maximum(y + bc_ref[...], 0.0)             # bias (hoisted) + relu
    y = y.reshape(nt, pos, c2)

    # Flatten per image into (NT, pos*c2); conv2 activations never leave VMEM.
    for p in range(pos):
        flat_ref[:, p * c2:(p + 1) * c2] = y[:, p, :]

    h = jnp.dot(flat_ref[...], w1_ref[...], preferred_element_type=jnp.float32) + b1_ref[...]
    h = jnp.maximum(h, 0.0)                           # relu(ffn1)
    z = jnp.dot(h, w2_ref[...], preferred_element_type=jnp.float32) + b2_ref[...]
    z = jnp.maximum(z, 0.0)                           # relu(ffn2)
    m = jnp.max(z, axis=-1, keepdims=True)            # stable log_softmax(dim=1)
    lse = m + jnp.log(jnp.sum(jnp.exp(z - m), axis=-1, keepdims=True))
    o_ref[...] = z - lse


def conv2_head(patches, wc, bc, w1, b1, w2, b2, n, *, n_tile=64):
    g, rows, k = patches.shape
    pos = rows // n                      # pooled positions per image (16)
    nt = min(n_tile, _round_up(n, 8))
    n_pad = _round_up(n, nt)
    if n_pad != n:
        patches = jnp.pad(patches, ((0, 0), (0, (n_pad - n) * pos), (0, 0)))
    out = pl.pallas_call(
        conv2_head_kernel,
        out_shape=jax.ShapeDtypeStruct((n_pad, w2.shape[1]), jnp.float32),
        grid=(n_pad // nt,),
        in_specs=[
            pl.BlockSpec((g, nt * pos, k), lambda i: (0, i, 0)),
            pl.BlockSpec(wc.shape, lambda i: (0, 0)),
            pl.BlockSpec(bc.shape, lambda i: (0, 0)),
            pl.BlockSpec(w1.shape, lambda i: (0, 0)),
            pl.BlockSpec(b1.shape, lambda i: (0, 0)),
            pl.BlockSpec(w2.shape, lambda i: (0, 0)),
            pl.BlockSpec(b2.shape, lambda i: (0, 0)),
        ],
        out_specs=pl.BlockSpec((nt, w2.shape[1]), lambda i: (i, 0)),
        scratch_shapes=[pltpu.VMEM((nt, w1.shape[0]), jnp.float32)],
        compiler_params=pltpu.CompilerParams(dimension_semantics=("parallel",)),
    )(patches, wc, bc, w1, b1, w2, b2)
    return out[:n]


# ---------------------------------------------------------------------------
# Plain-JAX glue: im2col + pooling-group row arrangement (trace-time only).
# Feature order per row is (Cin, Kh, Kw), matching torch's conv-weight flatten.
# ---------------------------------------------------------------------------
def im2col_pool_groups(x_nhwc, kh, kw):
    n, h, w, c = x_nhwc.shape
    ho, wo = h - kh + 1, w - kw + 1
    cols = []
    for i in range(kh):
        for j in range(kw):
            cols.append(x_nhwc[:, i:i + ho, j:j + wo, :])    # (N, Ho, Wo, C)
    p = jnp.stack(cols, axis=-1)                  # (N, Ho, Wo, C, Kh*Kw)
    p = p.reshape(n, ho, wo, c * kh * kw)         # feature order (ci, kh, kw)
    hp, wp = ho // 2, wo // 2
    p = p.reshape(n, hp, 2, wp, 2, c * kh * kw)
    p = p.transpose(2, 4, 0, 1, 3, 5)             # (2, 2, N, Hp, Wp, K)
    return p.reshape(4, n * hp * wp, c * kh * kw), (n, hp, wp)


def head_params(params, hp, wp):
    # Permute ffn1 weight rows so the kernel's NHWC flatten (p = h*wp + w fast over c)
    # matches torch's NCHW .view(N, -1) flatten (index = c*hp*wp + p).
    cout = params["cnn2_b"].shape[0]              # 20
    pos = hp * wp                                 # 16
    w1_t = params["ffn1_w"].T                     # (320, 100), rows ordered (c, h, w)
    perm = (np.arange(cout)[None, :] * pos + np.arange(pos)[:, None]).reshape(-1)
    w1_perm = w1_t[perm, :]                       # rows now ordered (h*wp + w, c)
    b1 = params["ffn1_b"].reshape(1, -1)
    w2_t = params["ffn2_w"].T                     # (100, 10)
    b2 = params["ffn2_b"].reshape(1, -1)
    return w1_perm, b1, w2_t, b2


def init_params(key):
    ks = jax.random.split(key, 8)
    s = 0.1
    return {
        "cnn1_w": jax.random.normal(ks[0], (10, 1, 5, 5), jnp.float32) * s,   # (Cout,Cin,Kh,Kw)
        "cnn1_b": jax.random.normal(ks[1], (10,), jnp.float32) * s,
        "cnn2_w": jax.random.normal(ks[2], (20, 10, 5, 5), jnp.float32) * s,
        "cnn2_b": jax.random.normal(ks[3], (20,), jnp.float32) * s,
        "ffn1_w": jax.random.normal(ks[4], (100, 320), jnp.float32) * s,      # torch (out, in)
        "ffn1_b": jax.random.normal(ks[5], (100,), jnp.float32) * s,
        "ffn2_w": jax.random.normal(ks[6], (10, 100), jnp.float32) * s,
        "ffn2_b": jax.random.normal(ks[7], (10,), jnp.float32) * s,
    }


@jax.jit
def cnn_forward(x_nchw, params):
    n = x_nchw.shape[0]
    x = jnp.transpose(x_nchw, (0, 2, 3, 1))                 # NCHW -> NHWC

    # block 1: relu(maxpool(conv2d(1->10, 5x5)))  — gridded Pallas kernel
    p1, (_, hp1, wp1) = im2col_pool_groups(x, 5, 5)         # (4, N*144, 25)
    w1c = params["cnn1_w"].reshape(10, -1).T.astype(CONV_DTYPE)   # (25, 10)
    b1c = params["cnn1_b"].reshape(1, -1).astype(jnp.float32)
    y1 = conv_pool_relu(p1.astype(CONV_DTYPE), w1c, b1c)    # (N*144, 10) f32
    y1 = y1.reshape(n, hp1, wp1, 10)                        # NHWC

    # block 2 + head: fused conv2/pool/relu/flatten/ffn1/ffn2/log_softmax kernel
    p2, (_, hp2, wp2) = im2col_pool_groups(y1, 5, 5)        # (4, N*16, 250)
    w2c = params["cnn2_w"].reshape(20, -1).T.astype(CONV_DTYPE)   # (250, 20)
    b2c = params["cnn2_b"].reshape(1, -1).astype(jnp.float32)
    w1h, b1h, w2h, b2h = head_params(params, hp2, wp2)
    out = conv2_head(p2.astype(CONV_DTYPE), w2c, b2c, w1h, b1h, w2h, b2h, n)
    return out                                              # (N, 10) log-probs


if __name__ == "__main__":
    key = jax.random.PRNGKey(0)
    kx, kp = jax.random.split(key)
    # spatial size must be 28x28: ffn1 is hardwired to 4*4*20 = 320 inputs
    x = jax.random.normal(kx, (2, 1, 28, 28), jnp.float32)
    params = init_params(kp)

    out = jax.block_until_ready(cnn_forward(x, params))
    assert out.shape == (2, 10), out.shape
    assert out.dtype == jnp.float32
    probs = np.exp(np.asarray(out))
    assert np.allclose(probs.sum(axis=1), 1.0, atol=1e-3)   # valid log_softmax rows
    print("KERNEL_OK")
</pallas_src>

<mosaic_0001>
module attributes {stable_mosaic.version = 11 : i64} {
  func.func @conv_pool_relu_kernel(%arg0: i32, %arg1: memref<4x288x25xbf16, #tpu.memory_space<vmem>>, %arg2: memref<25x10xbf16, #tpu.memory_space<vmem>>, %arg3: memref<1x10xf32, #tpu.memory_space<vmem>>, %arg4: memref<288x10xf32, #tpu.memory_space<vmem>>) attributes {dimension_semantics = [#tpu.dimension_semantics<parallel>], iteration_bounds = array<i64: 1>, scalar_prefetch = 0 : i64, scratch_operands = 0 : i64, tpu.core_type = #tpu.core_type<tc>, window_params = [{transform_indices = @transform_0, window_bounds = array<i64: 4, 288, 25>}, {pipeline_mode = #tpu.pipeline_mode<synchronous>, transform_indices = @transform_1, window_bounds = array<i64: 25, 10>}, {pipeline_mode = #tpu.pipeline_mode<synchronous>, transform_indices = @transform_2, window_bounds = array<i64: 1, 10>}, {transform_indices = @transform_3, window_bounds = array<i64: 288, 10>}]} {
    %c0 = arith.constant 0 : index
    %c0_0 = arith.constant 0 : index
    %c0_1 = arith.constant 0 : index
    %0 = vector.load %arg1[%c0, %c0_0, %c0_1] : memref<4x288x25xbf16, #tpu.memory_space<vmem>>, vector<4x288x25xbf16>
    %1 = vector.shape_cast %0 : vector<4x288x25xbf16> to vector<1152x25xbf16>
    %c0_2 = arith.constant 0 : index
    %c0_3 = arith.constant 0 : index
    %2 = vector.load %arg2[%c0_2, %c0_3] : memref<25x10xbf16, #tpu.memory_space<vmem>>, vector<25x10xbf16>
    %cst = arith.constant dense<0.000000e+00> : vector<1152x10xf32>
    %3 = tpu.matmul %1, %2, %cst {dimension_numbers = #tpu.dot_dimension_numbers<[1], [0], [0], [1], [0, 0, 1, 1], [], []>} : vector<1152x25xbf16>, vector<25x10xbf16>, vector<1152x10xf32> -> vector<1152x10xf32>
    %4 = vector.shape_cast %3 : vector<1152x10xf32> to vector<4x288x10xf32>
    %cst_4 = arith.constant dense<0xFF800000> : vector<288x10xf32>
    %5 = vector.multi_reduction <maximumf>, %4, %cst_4 [0] : vector<4x288x10xf32> to vector<288x10xf32>
    %c0_5 = arith.constant 0 : index
    %c0_6 = arith.constant 0 : index
    %6 = vector.load %arg3[%c0_5, %c0_6] : memref<1x10xf32, #tpu.memory_space<vmem>>, vector<1x10xf32>
    %7 = vector.broadcast %6 : vector<1x10xf32> to vector<288x10xf32>
    %8 = arith.addf %5, %7 : vector<288x10xf32>
    %cst_7 = arith.constant 0.000000e+00 : f32
    %9 = vector.broadcast %cst_7 : f32 to vector<288x10xf32>
    %10 = arith.maximumf %8, %9 : vector<288x10xf32>
    %c0_8 = arith.constant 0 : index
    %c0_9 = arith.constant 0 : index
    %11 = vector.load %arg4[%c0_8, %c0_9] : memref<288x10xf32, #tpu.memory_space<vmem>>, vector<288x10xf32>
    tpu.vector_store %arg4[%c0_8, %c0_9], %10 {strides = array<i32>} : memref<288x10xf32, #tpu.memory_space<vmem>>, vector<288x10xf32>,
    return
  }
  func.func @transform_0(%arg0: i32) -> (i32, i32, i32) {
    %c0_i32 = arith.constant 0 : i32
    %c0_i32_0 = arith.constant 0 : i32
    %c0_i32_1 = arith.constant 0 : i32
    return %c0_i32, %arg0, %c0_i32_0 : i32, i32, i32
  }
  func.func @transform_1(%arg0: i32) -> (i32, i32) {
    %c0_i32 = arith.constant 0 : i32
    %c0_i32_0 = arith.constant 0 : i32
    %c0_i32_1 = arith.constant 0 : i32
    return %c0_i32, %c0_i32_0 : i32, i32
  }
  func.func @transform_2(%arg0: i32) -> (i32, i32) {
    %c0_i32 = arith.constant 0 : i32
    %c0_i32_0 = arith.constant 0 : i32
    %c0_i32_1 = arith.constant 0 : i32
    return %c0_i32, %c0_i32_0 : i32, i32
  }
  func.func @transform_3(%arg0: i32) -> (i32, i32) {
    %c0_i32 = arith.constant 0 : i32
    %c0_i32_0 = arith.constant 0 : i32
    return %arg0, %c0_i32 : i32, i32
  }
}

module attributes {stable_mosaic.version = 11 : i64} {
  func.func @conv2_head_kernel(%arg0: i32, %arg1: memref<4x128x250xbf16, #tpu.memory_space<vmem>>, %arg2: memref<250x20xbf16, #tpu.memory_space<vmem>>, %arg3: memref<1x20xf32, #tpu.memory_space<vmem>>, %arg4: memref<320x100xf32, #tpu.memory_space<vmem>>, %arg5: memref<1x100xf32, #tpu.memory_space<vmem>>, %arg6: memref<100x10xf32, #tpu.memory_space<vmem>>, %arg7: memref<1x10xf32, #tpu.memory_space<vmem>>, %arg8: memref<8x10xf32, #tpu.memory_space<vmem>>, %arg9: memref<8x320xf32, #tpu.memory_space<vmem>>) attributes {dimension_semantics = [#tpu.dimension_semantics<parallel>], iteration_bounds = array<i64: 1>, scalar_prefetch = 0 : i64, scratch_operands = 1 : i64, tpu.core_type = #tpu.core_type<tc>, window_params = [{transform_indices = @transform_0, window_bounds = array<i64: 4, 128, 250>}, {pipeline_mode = #tpu.pipeline_mode<synchronous>, transform_indices = @transform_1, window_bounds = array<i64: 250, 20>}, {pipeline_mode = #tpu.pipeline_mode<synchronous>, transform_indices = @transform_2, window_bounds = array<i64: 1, 20>}, {pipeline_mode = #tpu.pipeline_mode<synchronous>, transform_indices = @transform_3, window_bounds = array<i64: 320, 100>}, {pipeline_mode = #tpu.pipeline_mode<synchronous>, transform_indices = @transform_4, window_bounds = array<i64: 1, 100>}, {pipeline_mode = #tpu.pipeline_mode<synchronous>, transform_indices = @transform_5, window_bounds = array<i64: 100, 10>}, {pipeline_mode = #tpu.pipeline_mode<synchronous>, transform_indices = @transform_6, window_bounds = array<i64: 1, 10>}, {transform_indices = @transform_7, window_bounds = array<i64: 8, 10>}]} {
    %c0 = arith.constant 0 : index
    %c0_0 = arith.constant 0 : index
    %c0_1 = arith.constant 0 : index
    %0 = vector.load %arg1[%c0, %c0_0, %c0_1] : memref<4x128x250xbf16, #tpu.memory_space<vmem>>, vector<4x128x250xbf16>
    %1 = vector.shape_cast %0 : vector<4x128x250xbf16> to vector<512x250xbf16>
    %c0_2 = arith.constant 0 : index
    %c0_3 = arith.constant 0 : index
    %2 = vector.load %arg2[%c0_2, %c0_3] : memref<250x20xbf16, #tpu.memory_space<vmem>>, vector<250x20xbf16>
    %cst = arith.constant dense<0.000000e+00> : vector<512x20xf32>
    %3 = tpu.matmul %1, %2, %cst {dimension_numbers = #tpu.dot_dimension_numbers<[1], [0], [0], [1], [0, 0, 1, 1], [], []>} : vector<512x250xbf16>, vector<250x20xbf16>, vector<512x20xf32> -> vector<512x20xf32>
    %4 = vector.shape_cast %3 : vector<512x20xf32> to vector<4x128x20xf32>
    %cst_4 = arith.constant dense<0xFF800000> : vector<128x20xf32>
    %5 = vector.multi_reduction <maximumf>, %4, %cst_4 [0] : vector<4x128x20xf32> to vector<128x20xf32>
    %c0_5 = arith.constant 0 : index
    %c0_6 = arith.constant 0 : index
    %6 = vector.load %arg3[%c0_5, %c0_6] : memref<1x20xf32, #tpu.memory_space<vmem>>, vector<1x20xf32>
    %7 = vector.broadcast %6 : vector<1x20xf32> to vector<128x20xf32>
    %8 = arith.addf %5, %7 : vector<128x20xf32>
    %cst_7 = arith.constant 0.000000e+00 : f32
    %9 = vector.broadcast %cst_7 : f32 to vector<128x20xf32>
    %10 = arith.maximumf %8, %9 : vector<128x20xf32>
    %11 = vector.shape_cast %10 : vector<128x20xf32> to vector<8x16x20xf32>
    %12 = vector.extract_strided_slice %11 {offsets = [0, 0, 0], sizes = [8, 1, 20], strides = [1, 1, 1]} : vector<8x16x20xf32> to vector<8x1x20xf32>
    %13 = vector.shape_cast %12 : vector<8x1x20xf32> to vector<8x20xf32>
    %c0_8 = arith.constant 0 : index
    %c0_9 = arith.constant 0 : index
    %14 = vector.load %arg9[%c0_8, %c0_9] : memref<8x320xf32, #tpu.memory_space<vmem>>, vector<8x20xf32>
    tpu.vector_store %arg9[%c0_8, %c0_9], %13 {strides = array<i32>} : memref<8x320xf32, #tpu.memory_space<vmem>>, vector<8x20xf32>,
    %15 = vector.extract_strided_slice %11 {offsets = [0, 1, 0], sizes = [8, 1, 20], strides = [1, 1, 1]} : vector<8x16x20xf32> to vector<8x1x20xf32>
    %16 = vector.shape_cast %15 : vector<8x1x20xf32> to vector<8x20xf32>
    %c0_10 = arith.constant 0 : index
    %c20 = arith.constant 20 : index
    %17 = vector.load %arg9[%c0_10, %c20] : memref<8x320xf32, #tpu.memory_space<vmem>>, vector<8x20xf32>
    tpu.vector_store %arg9[%c0_10, %c20], %16 {strides = array<i32>} : memref<8x320xf32, #tpu.memory_space<vmem>>, vector<8x20xf32>,
    %18 = vector.extract_strided_slice %11 {offsets = [0, 2, 0], sizes = [8, 1, 20], strides = [1, 1, 1]} : vector<8x16x20xf32> to vector<8x1x20xf32>
    %19 = vector.shape_cast %18 : vector<8x1x20xf32> to vector<8x20xf32>
    %c0_11 = arith.constant 0 : index
    %c40 = arith.constant 40 : index
    %20 = vector.load %arg9[%c0_11, %c40] : memref<8x320xf32, #tpu.memory_space<vmem>>, vector<8x20xf32>
    tpu.vector_store %arg9[%c0_11, %c40], %19 {strides = array<i32>} : memref<8x320xf32, #tpu.memory_space<vmem>>, vector<8x20xf32>,
    %21 = vector.extract_strided_slice %11 {offsets = [0, 3, 0], sizes = [8, 1, 20], strides = [1, 1, 1]} : vector<8x16x20xf32> to vector<8x1x20xf32>
    %22 = vector.shape_cast %21 : vector<8x1x20xf32> to vector<8x20xf32>
    %c0_12 = arith.constant 0 : index
    %c60 = arith.constant 60 : index
    %23 = vector.load %arg9[%c0_12, %c60] : memref<8x320xf32, #tpu.memory_space<vmem>>, vector<8x20xf32>
    tpu.vector_store %arg9[%c0_12, %c60], %22 {strides = array<i32>} : memref<8x320xf32, #tpu.memory_space<vmem>>, vector<8x20xf32>,
    %24 = vector.extract_strided_slice %11 {offsets = [0, 4, 0], sizes = [8, 1, 20], strides = [1, 1, 1]} : vector<8x16x20xf32> to vector<8x1x20xf32>
    %25 = vector.shape_cast %24 : vector<8x1x20xf32> to vector<8x20xf32>
    %c0_13 = arith.constant 0 : index
    %c80 = arith.constant 80 : index
    %26 = vector.load %arg9[%c0_13, %c80] : memref<8x320xf32, #tpu.memory_space<vmem>>, vector<8x20xf32>
    tpu.vector_store %arg9[%c0_13, %c80], %25 {strides = array<i32>} : memref<8x320xf32, #tpu.memory_space<vmem>>, vector<8x20xf32>,
    %27 = vector.extract_strided_slice %11 {offsets = [0, 5, 0], sizes = [8, 1, 20], strides = [1, 1, 1]} : vector<8x16x20xf32> to vector<8x1x20xf32>
    %28 = vector.shape_cast %27 : vector<8x1x20xf32> to vector<8x20xf32>
    %c0_14 = arith.constant 0 : index
    %c100 = arith.constant 100 : index
    %29 = vector.load %arg9[%c0_14, %c100] : memref<8x320xf32, #tpu.memory_space<vmem>>, vector<8x20xf32>
    tpu.vector_store %arg9[%c0_14, %c100], %28 {strides = array<i32>} : memref<8x320xf32, #tpu.memory_space<vmem>>, vector<8x20xf32>,
    %30 = vector.extract_strided_slice %11 {offsets = [0, 6, 0], sizes = [8, 1, 20], strides = [1, 1, 1]} : vector<8x16x20xf32> to vector<8x1x20xf32>
    %31 = vector.shape_cast %30 : vector<8x1x20xf32> to vector<8x20xf32>
    %c0_15 = arith.constant 0 : index
    %c120 = arith.constant 120 : index
    %32 = vector.load %arg9[%c0_15, %c120] : memref<8x320xf32, #tpu.memory_space<vmem>>, vector<8x20xf32>
    tpu.vector_store %arg9[%c0_15, %c120], %31 {strides = array<i32>} : memref<8x320xf32, #tpu.memory_space<vmem>>, vector<8x20xf32>,
    %33 = vector.extract_strided_slice %11 {offsets = [0, 7, 0], sizes = [8, 1, 20], strides = [1, 1, 1]} : vector<8x16x20xf32> to vector<8x1x20xf32>
    %34 = vector.shape_cast %33 : vector<8x1x20xf32> to vector<8x20xf32>
    %c0_16 = arith.constant 0 : index
    %c140 = arith.constant 140 : index
    %35 = vector.load %arg9[%c0_16, %c140] : memref<8x320xf32, #tpu.memory_space<vmem>>, vector<8x20xf32>
    tpu.vector_store %arg9[%c0_16, %c140], %34 {strides = array<i32>} : memref<8x320xf32, #tpu.memory_space<vmem>>, vector<8x20xf32>,
    %36 = vector.extract_strided_slice %11 {offsets = [0, 8, 0], sizes = [8, 1, 20], strides = [1, 1, 1]} : vector<8x16x20xf32> to vector<8x1x20xf32>
    %37 = vector.shape_cast %36 : vector<8x1x20xf32> to vector<8x20xf32>
    %c0_17 = arith.constant 0 : index
    %c160 = arith.constant 160 : index
    %38 = vector.load %arg9[%c0_17, %c160] : memref<8x320xf32, #tpu.memory_space<vmem>>, vector<8x20xf32>
    tpu.vector_store %arg9[%c0_17, %c160], %37 {strides = array<i32>} : memref<8x320xf32, #tpu.memory_space<vmem>>, vector<8x20xf32>,
    %39 = vector.extract_strided_slice %11 {offsets = [0, 9, 0], sizes = [8, 1, 20], strides = [1, 1, 1]} : vector<8x16x20xf32> to vector<8x1x20xf32>
    %40 = vector.shape_cast %39 : vector<8x1x20xf32> to vector<8x20xf32>
    %c0_18 = arith.constant 0 : index
    %c180 = arith.constant 180 : index
    %41 = vector.load %arg9[%c0_18, %c180] : memref<8x320xf32, #tpu.memory_space<vmem>>, vector<8x20xf32>
    tpu.vector_store %arg9[%c0_18, %c180], %40 {strides = array<i32>} : memref<8x320xf32, #tpu.memory_space<vmem>>, vector<8x20xf32>,
    %42 = vector.extract_strided_slice %11 {offsets = [0, 10, 0], sizes = [8, 1, 20], strides = [1, 1, 1]} : vector<8x16x20xf32> to vector<8x1x20xf32>
    %43 = vector.shape_cast %42 : vector<8x1x20xf32> to vector<8x20xf32>
    %c0_19 = arith.constant 0 : index
    %c200 = arith.constant 200 : index
    %44 = vector.load %arg9[%c0_19, %c200] : memref<8x320xf32, #tpu.memory_space<vmem>>, vector<8x20xf32>
    tpu.vector_store %arg9[%c0_19, %c200], %43 {strides = array<i32>} : memref<8x320xf32, #tpu.memory_space<vmem>>, vector<8x20xf32>,
    %45 = vector.extract_strided_slice %11 {offsets = [0, 11, 0], sizes = [8, 1, 20], strides = [1, 1, 1]} : vector<8x16x20xf32> to vector<8x1x20xf32>
    %46 = vector.shape_cast %45 : vector<8x1x20xf32> to vector<8x20xf32>
    %c0_20 = arith.constant 0 : index
    %c220 = arith.constant 220 : index
    %47 = vector.load %arg9[%c0_20, %c220] : memref<8x320xf32, #tpu.memory_space<vmem>>, vector<8x20xf32>
    tpu.vector_store %arg9[%c0_20, %c220], %46 {strides = array<i32>} : memref<8x320xf32, #tpu.memory_space<vmem>>, vector<8x20xf32>,
    %48 = vector.extract_strided_slice %11 {offsets = [0, 12, 0], sizes = [8, 1, 20], strides = [1, 1, 1]} : vector<8x16x20xf32> to vector<8x1x20xf32>
    %49 = vector.shape_cast %48 : vector<8x1x20xf32> to vector<8x20xf32>
    %c0_21 = arith.constant 0 : index
    %c240 = arith.constant 240 : index
    %50 = vector.load %arg9[%c0_21, %c240] : memref<8x320xf32, #tpu.memory_space<vmem>>, vector<8x20xf32>
    tpu.vector_store %arg9[%c0_21, %c240], %49 {strides = array<i32>} : memref<8x320xf32, #tpu.memory_space<vmem>>, vector<8x20xf32>,
    %51 = vector.extract_strided_slice %11 {offsets = [0, 13, 0], sizes = [8, 1, 20], strides = [1, 1, 1]} : vector<8x16x20xf32> to vector<8x1x20xf32>
    %52 = vector.shape_cast %51 : vector<8x1x20xf32> to vector<8x20xf32>
    %c0_22 = arith.constant 0 : index
    %c260 = arith.constant 260 : index
    %53 = vector.load %arg9[%c0_22, %c260] : memref<8x320xf32, #tpu.memory_space<vmem>>, vector<8x20xf32>
    tpu.vector_store %arg9[%c0_22, %c260], %52 {strides = array<i32>} : memref<8x320xf32, #tpu.memory_space<vmem>>, vector<8x20xf32>,
    %54 = vector.extract_strided_slice %11 {offsets = [0, 14, 0], sizes = [8, 1, 20], strides = [1, 1, 1]} : vector<8x16x20xf32> to vector<8x1x20xf32>
    %55 = vector.shape_cast %54 : vector<8x1x20xf32> to vector<8x20xf32>
    %c0_23 = arith.constant 0 : index
    %c280 = arith.constant 280 : index
    %56 = vector.load %arg9[%c0_23, %c280] : memref<8x320xf32, #tpu.memory_space<vmem>>, vector<8x20xf32>
    tpu.vector_store %arg9[%c0_23, %c280], %55 {strides = array<i32>} : memref<8x320xf32, #tpu.memory_space<vmem>>, vector<8x20xf32>,
    %57 = vector.extract_strided_slice %11 {offsets = [0, 15, 0], sizes = [8, 1, 20], strides = [1, 1, 1]} : vector<8x16x20xf32> to vector<8x1x20xf32>
    %58 = vector.shape_cast %57 : vector<8x1x20xf32> to vector<8x20xf32>
    %c0_24 = arith.constant 0 : index
    %c300 = arith.constant 300 : index
    %59 = vector.load %arg9[%c0_24, %c300] : memref<8x320xf32, #tpu.memory_space<vmem>>, vector<8x20xf32>
    tpu.vector_store %arg9[%c0_24, %c300], %58 {strides = array<i32>} : memref<8x320xf32, #tpu.memory_space<vmem>>, vector<8x20xf32>,
    %c0_25 = arith.constant 0 : index
    %c0_26 = arith.constant 0 : index
    %60 = vector.load %arg9[%c0_25, %c0_26] : memref<8x320xf32, #tpu.memory_space<vmem>>, vector<8x320xf32>
    %c0_27 = arith.constant 0 : index
    %c0_28 = arith.constant 0 : index
    %61 = vector.load %arg4[%c0_27, %c0_28] : memref<320x100xf32, #tpu.memory_space<vmem>>, vector<320x100xf32>
    %cst_29 = arith.constant dense<0.000000e+00> : vector<8x100xf32>
    %62 = tpu.matmul %60, %61, %cst_29 {dimension_numbers = #tpu.dot_dimension_numbers<[1], [0], [0], [1], [0, 0, 1, 1], [], []>} : vector<8x320xf32>, vector<320x100xf32>, vector<8x100xf32> -> vector<8x100xf32>
    %c0_30 = arith.constant 0 : index
    %c0_31 = arith.constant 0 : index
    %63 = vector.load %arg5[%c0_30, %c0_31] : memref<1x100xf32, #tpu.memory_space<vmem>>, vector<1x100xf32>
    %64 = vector.broadcast %63 : vector<1x100xf32> to vector<8x100xf32>
    %65 = arith.addf %62, %64 : vector<8x100xf32>
    %cst_32 = arith.constant 0.000000e+00 : f32
    %66 = vector.broadcast %cst_32 : f32 to vector<8x100xf32>
    %67 = arith.maximumf %65, %66 : vector<8x100xf32>
    %c0_33 = arith.constant 0 : index
    %c0_34 = arith.constant 0 : index
    %68 = vector.load %arg6[%c0_33, %c0_34] : memref<100x10xf32, #tpu.memory_space<vmem>>, vector<100x10xf32>
    %cst_35 = arith.constant dense<0.000000e+00> : vector<8x10xf32>
    %69 = tpu.matmul %67, %68, %cst_35 {dimension_numbers = #tpu.dot_dimension_numbers<[1], [0], [0], [1], [0, 0, 1, 1], [], []>} : vector<8x100xf32>, vector<100x10xf32>, vector<8x10xf32> -> vector<8x10xf32>
    %c0_36 = arith.constant 0 : index
    %c0_37 = arith.constant 0 : index
    %70 = vector.load %arg7[%c0_36, %c0_37] : memref<1x10xf32, #tpu.memory_space<vmem>>, vector<1x10xf32>
    %71 = vector.broadcast %70 : vector<1x10xf32> to vector<8x10xf32>
    %72 = arith.addf %69, %71 : vector<8x10xf32>
    %cst_38 = arith.constant 0.000000e+00 : f32
    %73 = vector.broadcast %cst_38 : f32 to vector<8x10xf32>
    %74 = arith.maximumf %72, %73 : vector<8x10xf32>
    %cst_39 = arith.constant dense<0xFF800000> : vector<8xf32>
    %75 = vector.multi_reduction <maximumf>, %74, %cst_39 [1] : vector<8x10xf32> to vector<8xf32>
    %76 = vector.shape_cast %75 : vector<8xf32> to vector<8x1xf32>
    %77 = vector.broadcast %76 : vector<8x1xf32> to vector<8x10xf32>
    %78 = arith.subf %74, %77 : vector<8x10xf32>
    %79 = math.exp %78 : vector<8x10xf32>
    %cst_40 = arith.constant dense<0.000000e+00> : vector<8xf32>
    %80 = vector.multi_reduction <add>, %79, %cst_40 [1] : vector<8x10xf32> to vector<8xf32>
    %81 = vector.shape_cast %80 : vector<8xf32> to vector<8x1xf32>
    %82 = math.log %81 : vector<8x1xf32>
    %83 = arith.addf %76, %82 : vector<8x1xf32>
    %84 = vector.broadcast %83 : vector<8x1xf32> to vector<8x10xf32>
    %85 = arith.subf %74, %84 : vector<8x10xf32>
    %c0_41 = arith.constant 0 : index
    %c0_42 = arith.constant 0 : index
    %86 = vector.load %arg8[%c0_41, %c0_42] : memref<8x10xf32, #tpu.memory_space<vmem>>, vector<8x10xf32>
    tpu.vector_store %arg8[%c0_41, %c0_42], %85 {strides = array<i32>} : memref<8x10xf32, #tpu.memory_space<vmem>>, vector<8x10xf32>,
    return
  }
  func.func @transform_0(%arg0: i32) -> (i32, i32, i32) {
    %c0_i32 = arith.constant 0 : i32
    %c0_i32_0 = arith.constant 0 : i32
    %c0_i32_1 = arith.constant 0 : i32
    return %c0_i32, %arg0, %c0_i32_0 : i32, i32, i32
  }
  func.func @transform_1(%arg0: i32) -> (i32, i32) {
    %c0_i32 = arith.constant 0 : i32
    %c0_i32_0 = arith.constant 0 : i32
    %c0_i32_1 = arith.constant 0 : i32
    return %c0_i32, %c0_i32_0 : i32, i32
  }
  func.func @transform_2(%arg0: i32) -> (i32, i32) {
    %c0_i32 = arith.constant 0 : i32
    %c0_i32_0 = arith.constant 0 : i32
    %c0_i32_1 = arith.constant 0 : i32
    return %c0_i32, %c0_i32_0 : i32, i32
  }
  func.func @transform_3(%arg0: i32) -> (i32, i32) {
    %c0_i32 = arith.constant 0 : i32
    %c0_i32_0 = arith.constant 0 : i32
    %c0_i32_1 = arith.constant 0 : i32
    return %c0_i32, %c0_i32_0 : i32, i32
  }
  func.func @transform_4(%arg0: i32) -> (i32, i32) {
    %c0_i32 = arith.constant 0 : i32
    %c0_i32_0 = arith.constant 0 : i32
    %c0_i32_1 = arith.constant 0 : i32
    return %c0_i32, %c0_i32_0 : i32, i32
  }
  func.func @transform_5(%arg0: i32) -> (i32, i32) {
    %c0_i32 = arith.constant 0 : i32
    %c0_i32_0 = arith.constant 0 : i32
    %c0_i32_1 = arith.constant 0 : i32
    return %c0_i32, %c0_i32_0 : i32, i32
  }
  func.func @transform_6(%arg0: i32) -> (i32, i32) {
    %c0_i32 = arith.constant 0 : i32
    %c0_i32_0 = arith.constant 0 : i32
    %c0_i32_1 = arith.constant 0 : i32
    return %c0_i32, %c0_i32_0 : i32, i32
  }
  func.func @transform_7(%arg0: i32) -> (i32, i32) {
    %c0_i32 = arith.constant 0 : i32
    %c0_i32_0 = arith.constant 0 : i32
    return %arg0, %c0_i32 : i32, i32
  }
}

</mosaic_0001>

<llo_original>
// kernel: cnn_forward.2
$region0: #{cnn_forward.2}
  #allocation0 [shape = 'u32[]', space=smem, size = 0x4, offset = 0x4, fixed_abs, tag = 'smem constant byte address 0x4 - core index']
  #allocation1 [shape = 'u32[144,128]{1,0:T(1,128)}', space=vmem, size = 0x12000, scoped, tag = 'internal scratch']
  %s0 = inlined_call_operand.vmem [shape: bf16[4,288,25], index: 0, kind: input, shape index: {}]
  %s1 = inlined_call_operand.vmem [shape: bf16[25,10], index: 1, kind: input, shape index: {}]
  %s2 = inlined_call_operand.vmem [shape: f32[1,10], index: 2, kind: input, shape index: {}]
  %s3 = inlined_call_operand.vmem [shape: f32[288,10], index: 3, kind: output, shape index: {}]
  %s4 = sld [smem:[#allocation0]]
  $region22: #{cnn_forward.2} parent=0
    _
  %s6 = ssub.s32 1, %s4
  %s7 = scalar_select 0, %s6, %s4
  // Predicated region
  $region2: #{cnn_forward.2} parent=0 // pred_check
    _
  $region3: #{cnn_forward.2} parent=0 // pred_check_branch
    %9 = sbr.rel (0) target = $region5
  $region4: #{cnn_forward.2} parent=0 // pred_region
    _
  $region5: #{cnn_forward.2} parent=0 // pred_fallthru
    _
  // Predicated region
  $region6: #{cnn_forward.2} parent=0 // pred_check
    _
  $region7: #{cnn_forward.2} parent=0 // pred_check_branch
    %11 = sbr.rel (0) target = $region9
  $region8: #{cnn_forward.2} parent=0 // pred_region
    _
  $region9: #{cnn_forward.2} parent=0 // pred_fallthru
    _
  // Predicated region
  $region10: #{cnn_forward.2} parent=0 // pred_check
    _
  $region11: #{cnn_forward.2} parent=0 // pred_check_branch
    %13 = sbr.rel (0) target = $region13
  $region12: #{cnn_forward.2} parent=0 // pred_region
    _
  $region13: #{cnn_forward.2} parent=0 // pred_fallthru
    _
  %v15 = vld [vmem:[%s0] sm:$0xf]
  %v16 = vld [vmem:[%s0 + $0x4] sm:$0xf]
  %v17 = vld [vmem:[%s0 + $0x8] sm:$0xf]
  %v18 = vld [vmem:[%s0 + $0xc] sm:$0xf]
  %v19 = vld [vmem:[%s0 + $0x10] sm:$0xf]
  %v20 = vld [vmem:[%s0 + $0x14] sm:$0xf]
  %v21 = vld [vmem:[%s0 + $0x18] sm:$0xf]
  %v22 = vld [vmem:[%s0 + $0x1c] sm:$0xf]
  %v23 = vld [vmem:[%s0 + $0x20] sm:$0xf]
  %v24 = vld [vmem:[%s0 + $0x24] sm:$0xf]
  %v25 = vld [vmem:[%s0 + $0x28] sm:$0xf]
  %v26 = vld [vmem:[%s0 + $0x2c] sm:$0xf]
  %v27 = vld [vmem:[%s0 + $0x30] sm:$0xf]
  %v28 = vld [vmem:[%s0 + $0x34] sm:$0xf]
  %v29 = vld [vmem:[%s0 + $0x38] sm:$0xf]
  %v30 = vld [vmem:[%s0 + $0x3c] sm:$0xf]
  %v31 = vld [vmem:[%s0 + $0x40] sm:$0xf]
  %v32 = vld [vmem:[%s0 + $0x44] sm:$0xf]
  %v33 = vld [vmem:[%s0 + $0x48] sm:$0xf]
  %v34 = vld [vmem:[%s0 + $0x4c] sm:$0xf]
  %v35 = vld [vmem:[%s0 + $0x50] sm:$0xf]
  %v36 = vld [vmem:[%s0 + $0x54] sm:$0xf]
  %v37 = vld [vmem:[%s0 + $0x58] sm:$0xf]
  %v38 = vld [vmem:[%s0 + $0x5c] sm:$0xf]
  %v39 = vld [vmem:[%s0 + $0x60] sm:$0xf]
  %v40 = vld [vmem:[%s0 + $0x64] sm:$0xf]
  %v41 = vld [vmem:[%s0 + $0x68] sm:$0xf]
  %v42 = vld [vmem:[%s0 + $0x6c] sm:$0xf]
  %v43 = vld [vmem:[%s0 + $0x70] sm:$0xf]
  %v44 = vld [vmem:[%s0 + $0x74] sm:$0xf]
  %v45 = vld [vmem:[%s0 + $0x78] sm:$0xf]
  %v46 = vld [vmem:[%s0 + $0x7c] sm:$0xf]
  %v47 = vld [vmem:[%s0 + $0x80] sm:$0xf]
  %v48 = vld [vmem:[%s0 + $0x84] sm:$0xf]
  %v49 = vld [vmem:[%s0 + $0x88] sm:$0xf]
  %v50 = vld [vmem:[%s0 + $0x8c] sm:$0xf]
  %v51 = vld [vmem:[%s0 + $0x90] sm:$0xf]
  %v52 = vld [vmem:[%s0 + $0x94] sm:$0xf]
  %v53 = vld [vmem:[%s0 + $0x98] sm:$0xf]
  %v54 = vld [vmem:[%s0 + $0x9c] sm:$0xf]
  %v55 = vld [vmem:[%s0 + $0xa0] sm:$0xf]
  %v56 = vld [vmem:[%s0 + $0xa4] sm:$0xf]
  %v57 = vld [vmem:[%s0 + $0xa8] sm:$0xf]
  %v58 = vld [vmem:[%s0 + $0xac] sm:$0xf]
  %v59 = vld [vmem:[%s0 + $0xb0] sm:$0xf]
  %v60 = vld [vmem:[%s0 + $0xb4] sm:$0xf]
  %v61 = vld [vmem:[%s0 + $0xb8] sm:$0xf]
  %v62 = vld [vmem:[%s0 + $0xbc] sm:$0xf]
  %v63 = vld [vmem:[%s0 + $0xc0] sm:$0xf]
  %v64 = vld [vmem:[%s0 + $0xc4] sm:$0xf]
  %v65 = vld [vmem:[%s0 + $0xc8] sm:$0xf]
  %v66 = vld [vmem:[%s0 + $0xcc] sm:$0xf]
  %v67 = vld [vmem:[%s0 + $0xd0] sm:$0xf]
  %v68 = vld [vmem:[%s0 + $0xd4] sm:$0xf]
  %v69 = vld [vmem:[%s0 + $0xd8] sm:$0xf]
  %v70 = vld [vmem:[%s0 + $0xdc] sm:$0xf]
  %v71 = vld [vmem:[%s0 + $0xe0] sm:$0xf]
  %v72 = vld [vmem:[%s0 + $0xe4] sm:$0xf]
  %v73 = vld [vmem:[%s0 + $0xe8] sm:$0xf]
  %v74 = vld [vmem:[%s0 + $0xec] sm:$0xf]
  %v75 = vld [vmem:[%s0 + $0xf0] sm:$0xf]
  %v76 = vld [vmem:[%s0 + $0xf4] sm:$0xf]
  %v77 = vld [vmem:[%s0 + $0xf8] sm:$0xf]
  %v78 = vld [vmem:[%s0 + $0xfc] sm:$0xf]
  %v79 = vld [vmem:[%s0 + $0x100] sm:$0xf]
  %v80 = vld [vmem:[%s0 + $0x104] sm:$0xf]
  %v81 = vld [vmem:[%s0 + $0x108] sm:$0xf]
  %v82 = vld [vmem:[%s0 + $0x10c] sm:$0xf]
  %v83 = vld [vmem:[%s0 + $0x110] sm:$0xf]
  %v84 = vld [vmem:[%s0 + $0x114] sm:$0xf]
  %v85 = vld [vmem:[%s0 + $0x118] sm:$0xf]
  %v86 = vld [vmem:[%s0 + $0x11c] sm:$0xf]
  %v87 = vld [vmem:[%s0 + $0x120] sm:$0xf]
  %v88 = vld [vmem:[%s0 + $0x124] sm:$0xf]
  %v89 = vld [vmem:[%s0 + $0x128] sm:$0xf]
  %v90 = vld [vmem:[%s0 + $0x12c] sm:$0xf]
  %v91 = vld [vmem:[%s0 + $0x130] sm:$0xf]
  %v92 = vld [vmem:[%s0 + $0x134] sm:$0xf]
  %v93 = vld [vmem:[%s0 + $0x138] sm:$0xf]
  %v94 = vld [vmem:[%s0 + $0x13c] sm:$0xf]
  %v95 = vld [vmem:[%s0 + $0x140] sm:$0xf]
  %v96 = vld [vmem:[%s0 + $0x144] sm:$0xf]
  %v97 = vld [vmem:[%s0 + $0x148] sm:$0xf]
  %v98 = vld [vmem:[%s0 + $0x14c] sm:$0xf]
  %v99 = vld [vmem:[%s0 + $0x150] sm:$0xf]
  %v100 = vld [vmem:[%s0 + $0x154] sm:$0xf]
  %v101 = vld [vmem:[%s0 + $0x158] sm:$0xf]
  %v102 = vld [vmem:[%s0 + $0x15c] sm:$0xf]
  %v103 = vld [vmem:[%s0 + $0x160] sm:$0xf]
  %v104 = vld [vmem:[%s0 + $0x164] sm:$0xf]
  %v105 = vld [vmem:[%s0 + $0x168] sm:$0xf]
  %v106 = vld [vmem:[%s0 + $0x16c] sm:$0xf]
  %v107 = vld [vmem:[%s0 + $0x170] sm:$0xf]
  %v108 = vld [vmem:[%s0 + $0x174] sm:$0xf]
  %v109 = vld [vmem:[%s0 + $0x178] sm:$0xf]
  %v110 = vld [vmem:[%s0 + $0x17c] sm:$0xf]
  %v111 = vld [vmem:[%s0 + $0x180] sm:$0xf]
  %v112 = vld [vmem:[%s0 + $0x184] sm:$0xf]
  %v113 = vld [vmem:[%s0 + $0x188] sm:$0xf]
  %v114 = vld [vmem:[%s0 + $0x18c] sm:$0xf]
  %v115 = vld [vmem:[%s0 + $0x190] sm:$0xf]
  %v116 = vld [vmem:[%s0 + $0x194] sm:$0xf]
  %v117 = vld [vmem:[%s0 + $0x198] sm:$0xf]
  %v118 = vld [vmem:[%s0 + $0x19c] sm:$0xf]
  %v119 = vld [vmem:[%s0 + $0x1a0] sm:$0xf]
  %v120 = vld [vmem:[%s0 + $0x1a4] sm:$0xf]
  %v121 = vld [vmem:[%s0 + $0x1a8] sm:$0xf]
  %v122 = vld [vmem:[%s0 + $0x1ac] sm:$0xf]
  %v123 = vld [vmem:[%s0 + $0x1b0] sm:$0xf]
  %v124 = vld [vmem:[%s0 + $0x1b4] sm:$0xf]
  %v125 = vld [vmem:[%s0 + $0x1b8] sm:$0xf]
  %v126 = vld [vmem:[%s0 + $0x1bc] sm:$0xf]
  %v127 = vld [vmem:[%s0 + $0x1c0] sm:$0xf]
  %v128 = vld [vmem:[%s0 + $0x1c4] sm:$0xf]
  %v129 = vld [vmem:[%s0 + $0x1c8] sm:$0xf]
  %v130 = vld [vmem:[%s0 + $0x1cc] sm:$0xf]
  %v131 = vld [vmem:[%s0 + $0x1d0] sm:$0xf]
  %v132 = vld [vmem:[%s0 + $0x1d4] sm:$0xf]
  %v133 = vld [vmem:[%s0 + $0x1d8] sm:$0xf]
  %v134 = vld [vmem:[%s0 + $0x1dc] sm:$0xf]
  %v135 = vld [vmem:[%s0 + $0x1e0] sm:$0xf]
  %v136 = vld [vmem:[%s0 + $0x1e4] sm:$0xf]
  %v137 = vld [vmem:[%s0 + $0x1e8] sm:$0xf]
  %v138 = vld [vmem:[%s0 + $0x1ec] sm:$0xf]
  %v139 = vld [vmem:[%s0 + $0x1f0] sm:$0xf]
  %v140 = vld [vmem:[%s0 + $0x1f4] sm:$0xf]
  %v141 = vld [vmem:[%s0 + $0x1f8] sm:$0xf]
  %v142 = vld [vmem:[%s0 + $0x1fc] sm:$0xf]
  %v143 = vld [vmem:[%s0 + $0x200] sm:$0xf]
  %v144 = vld [vmem:[%s0 + $0x204] sm:$0xf]
  %v145 = vld [vmem:[%s0 + $0x208] sm:$0xf]
  %v146 = vld [vmem:[%s0 + $0x20c] sm:$0xf]
  %v147 = vld [vmem:[%s0 + $0x210] sm:$0xf]
  %v148 = vld [vmem:[%s0 + $0x214] sm:$0xf]
  %v149 = vld [vmem:[%s0 + $0x218] sm:$0xf]
  %v150 = vld [vmem:[%s0 + $0x21c] sm:$0xf]
  %v151 = vld [vmem:[%s0 + $0x220] sm:$0xf]
  %v152 = vld [vmem:[%s0 + $0x224] sm:$0xf]
  %v153 = vld [vmem:[%s0 + $0x228] sm:$0xf]
  %v154 = vld [vmem:[%s0 + $0x22c] sm:$0xf]
  %v155 = vld [vmem:[%s0 + $0x230] sm:$0xf]
  %v156 = vld [vmem:[%s0 + $0x234] sm:$0xf]
  %v157 = vld [vmem:[%s0 + $0x238] sm:$0xf]
  %v158 = vld [vmem:[%s0 + $0x23c] sm:$0xf]
  %v159 = vld [vmem:[%s1] sm:$0xf]
  %v160 = vld [vmem:[%s1 + $0x4] sm:$0xf]
  %v161 = vld [vmem:[%s1 + $0x8] sm:$0xf]
  %v162 = vld [vmem:[%s1 + $0xc] sm:$0x1]
  %v307 = vunpack.c.l.b16 %v15
  %v308 = vunpack.c.l.b16 %v16
  %v309 = vunpack.c.l.b16 %v17
  %v310 = vunpack.c.l.b16 %v18
  %v311 = vunpack.c.l.b16 %v19
  %v312 = vunpack.c.l.b16 %v20
  %v313 = vunpack.c.l.b16 %v21
  %v314 = vunpack.c.l.b16 %v22
  %v315 = vunpack.c.l.b16 %v23
  %v316 = vunpack.c.l.b16 %v24
  %v317 = vunpack.c.l.b16 %v25
  %v318 = vunpack.c.l.b16 %v26
  %v319 = vunpack.c.l.b16 %v27
  %v320 = vunpack.c.l.b16 %v28
  %v321 = vunpack.c.l.b16 %v29
  %v322 = vunpack.c.l.b16 %v30
  %v323 = vunpack.c.l.b16 %v31
  %v324 = vunpack.c.l.b16 %v32
  %v325 = vunpack.c.l.b16 %v33
  %v326 = vunpack.c.l.b16 %v34
  %v327 = vunpack.c.l.b16 %v35
  %v328 = vunpack.c.l.b16 %v36
  %v329 = vunpack.c.l.b16 %v37
  %v330 = vunpack.c.l.b16 %v38
  %v331 = vunpack.c.l.b16 %v39
  %v332 = vunpack.c.l.b16 %v40
  %v333 = vunpack.c.l.b16 %v41
  %v334 = vunpack.c.l.b16 %v42
  %v335 = vunpack.c.l.b16 %v43
  %v336 = vunpack.c.l.b16 %v44
  %v337 = vunpack.c.l.b16 %v45
  %v338 = vunpack.c.l.b16 %v46
  %v339 = vunpack.c.l.b16 %v47
  %v340 = vunpack.c.l.b16 %v48
  %v341 = vunpack.c.l.b16 %v49
  %v342 = vunpack.c.l.b16 %v50
  %v343 = vunpack.c.l.b16 %v51
  %v344 = vunpack.c.l.b16 %v52
  %v345 = vunpack.c.l.b16 %v53
  %v346 = vunpack.c.l.b16 %v54
  %v347 = vunpack.c.l.b16 %v55
  %v348 = vunpack.c.l.b16 %v56
  %v349 = vunpack.c.l.b16 %v57
  %v350 = vunpack.c.l.b16 %v58
  %v351 = vunpack.c.l.b16 %v59
  %v352 = vunpack.c.l.b16 %v60
  %v353 = vunpack.c.l.b16 %v61
  %v354 = vunpack.c.l.b16 %v62
  %v355 = vunpack.c.l.b16 %v63
  %v356 = vunpack.c.l.b16 %v64
  %v357 = vunpack.c.l.b16 %v65
  %v358 = vunpack.c.l.b16 %v66
  %v359 = vunpack.c.l.b16 %v67
  %v360 = vunpack.c.l.b16 %v68
  %v361 = vunpack.c.l.b16 %v69
  %v362 = vunpack.c.l.b16 %v70
  %v363 = vunpack.c.l.b16 %v71
  %v364 = vunpack.c.l.b16 %v72
  %v365 = vunpack.c.l.b16 %v73
  %v366 = vunpack.c.l.b16 %v74
  %v367 = vunpack.c.l.b16 %v75
  %v368 = vunpack.c.l.b16 %v76
  %v369 = vunpack.c.l.b16 %v77
  %v370 = vunpack.c.l.b16 %v78
  %v371 = vunpack.c.l.b16 %v79
  %v372 = vunpack.c.l.b16 %v80
  %v373 = vunpack.c.l.b16 %v81
  %v374 = vunpack.c.l.b16 %v82
  %v375 = vunpack.c.l.b16 %v83
  %v376 = vunpack.c.l.b16 %v84
  %v377 = vunpack.c.l.b16 %v85
  %v378 = vunpack.c.l.b16 %v86
  %v379 = vunpack.c.l.b16 %v87
  %v380 = vunpack.c.l.b16 %v88
  %v381 = vunpack.c.l.b16 %v89
  %v382 = vunpack.c.l.b16 %v90
  %v383 = vunpack.c.l.b16 %v91
  %v384 = vunpack.c.l.b16 %v92
  %v385 = vunpack.c.l.b16 %v93
  %v386 = vunpack.c.l.b16 %v94
  %v387 = vunpack.c.l.b16 %v95
  %v388 = vunpack.c.l.b16 %v96
  %v389 = vunpack.c.l.b16 %v97
  %v390 = vunpack.c.l.b16 %v98
  %v391 = vunpack.c.l.b16 %v99
  %v392 = vunpack.c.l.b16 %v100
  %v393 = vunpack.c.l.b16 %v101
  %v394 = vunpack.c.l.b16 %v102
  %v395 = vunpack.c.l.b16 %v103
  %v396 = vunpack.c.l.b16 %v104
  %v397 = vunpack.c.l.b16 %v105
  %v398 = vunpack.c.l.b16 %v106
  %v399 = vunpack.c.l.b16 %v107
  %v400 = vunpack.c.l.b16 %v108
  %v401 = vunpack.c.l.b16 %v109
  %v402 = vunpack.c.l.b16 %v110
  %v403 = vunpack.c.l.b16 %v111
  %v404 = vunpack.c.l.b16 %v112
  %v405 = vunpack.c.l.b16 %v113
  %v406 = vunpack.c.l.b16 %v114
  %v407 = vunpack.c.l.b16 %v115
  %v408 = vunpack.c.l.b16 %v116
  %v409 = vunpack.c.l.b16 %v117
  %v410 = vunpack.c.l.b16 %v118
  %v411 = vunpack.c.l.b16 %v119
  %v412 = vunpack.c.l.b16 %v120
  %v413 = vunpack.c.l.b16 %v121
  %v414 = vunpack.c.l.b16 %v122
  %v415 = vunpack.c.l.b16 %v123
  %v416 = vunpack.c.l.b16 %v124
  %v417 = vunpack.c.l.b16 %v125
  %v418 = vunpack.c.l.b16 %v126
  %v419 = vunpack.c.l.b16 %v127
  %v420 = vunpack.c.l.b16 %v128
  %v421 = vunpack.c.l.b16 %v129
  %v422 = vunpack.c.l.b16 %v130
  %v423 = vunpack.c.l.b16 %v131
  %v424 = vunpack.c.l.b16 %v132
  %v425 = vunpack.c.l.b16 %v133
  %v426 = vunpack.c.l.b16 %v134
  %v427 = vunpack.c.l.b16 %v135
  %v428 = vunpack.c.l.b16 %v136
  %v429 = vunpack.c.l.b16 %v137
  %v430 = vunpack.c.l.b16 %v138
  %v431 = vunpack.c.l.b16 %v139
  %v432 = vunpack.c.l.b16 %v140
  %v433 = vunpack.c.l.b16 %v141
  %v434 = vunpack.c.l.b16 %v142
  %v435 = vunpack.c.l.b16 %v143
  %v436 = vunpack.c.l.b16 %v144
  %v437 = vunpack.c.l.b16 %v145
  %v438 = vunpack.c.l.b16 %v146
  %v439 = vunpack.c.l.b16 %v147
  %v440 = vunpack.c.l.b16 %v148
  %v441 = vunpack.c.l.b16 %v149
  %v442 = vunpack.c.l.b16 %v150
  %v443 = vunpack.c.l.b16 %v151
  %v444 = vunpack.c.l.b16 %v152
  %v445 = vunpack.c.l.b16 %v153
  %v446 = vunpack.c.l.b16 %v154
  %v447 = vunpack.c.l.b16 %v155
  %v448 = vunpack.c.l.b16 %v156
  %v449 = vunpack.c.l.b16 %v157
  %v450 = vunpack.c.l.b16 %v158
  %v451 = vpack.c.b16 %v308, %v307
  %v452 = vpack.c.b16 %v310, %v309
  %v453 = vpack.c.b16 %v312, %v311
  %v454 = vpack.c.b16 %v314, %v313
  %v455 = vpack.c.b16 %v316, %v315
  %v456 = vpack.c.b16 %v318, %v317
  %v457 = vpack.c.b16 %v320, %v319
  %v458 = vpack.c.b16 %v322, %v321
  %v459 = vpack.c.b16 %v324, %v323
  %v460 = vpack.c.b16 %v326, %v325
  %v461 = vpack.c.b16 %v328, %v327
  %v462 = vpack.c.b16 %v330, %v329
  %v463 = vpack.c.b16 %v332, %v331
  %v464 = vpack.c.b16 %v334, %v333
  %v465 = vpack.c.b16 %v336, %v335
  %v466 = vpack.c.b16 %v338, %v337
  %v467 = vpack.c.b16 %v340, %v339
  %v468 = vpack.c.b16 %v342, %v341
  %v469 = vpack.c.b16 %v344, %v343
  %v470 = vpack.c.b16 %v346, %v345
  %v471 = vpack.c.b16 %v348, %v347
  %v472 = vpack.c.b16 %v350, %v349
  %v473 = vpack.c.b16 %v352, %v351
  %v474 = vpack.c.b16 %v354, %v353
  %v475 = vpack.c.b16 %v356, %v355
  %v476 = vpack.c.b16 %v358, %v357
  %v477 = vpack.c.b16 %v360, %v359
  %v478 = vpack.c.b16 %v362, %v361
  %v479 = vpack.c.b16 %v364, %v363
  %v480 = vpack.c.b16 %v366, %v365
  %v481 = vpack.c.b16 %v368, %v367
  %v482 = vpack.c.b16 %v370, %v369
  %v483 = vpack.c.b16 %v372, %v371
  %v484 = vpack.c.b16 %v374, %v373
  %v485 = vpack.c.b16 %v376, %v375
  %v486 = vpack.c.b16 %v378, %v377
  %v487 = vpack.c.b16 %v380, %v379
  %v488 = vpack.c.b16 %v382, %v381
  %v489 = vpack.c.b16 %v384, %v383
  %v490 = vpack.c.b16 %v386, %v385
  %v491 = vpack.c.b16 %v388, %v387
  %v492 = vpack.c.b16 %v390, %v389
  %v493 = vpack.c.b16 %v392, %v391
  %v494 = vpack.c.b16 %v394, %v393
  %v495 = vpack.c.b16 %v396, %v395
  %v496 = vpack.c.b16 %v398, %v397
  %v497 = vpack.c.b16 %v400, %v399
  %v498 = vpack.c.b16 %v402, %v401
  %v499 = vpack.c.b16 %v404, %v403
  %v500 = vpack.c.b16 %v406, %v405
  %v501 = vpack.c.b16 %v408, %v407
  %v502 = vpack.c.b16 %v410, %v409
  %v503 = vpack.c.b16 %v412, %v411
  %v504 = vpack.c.b16 %v414, %v413
  %v505 = vpack.c.b16 %v416, %v415
  %v506 = vpack.c.b16 %v418, %v417
  %v507 = vpack.c.b16 %v420, %v419
  %v508 = vpack.c.b16 %v422, %v421
  %v509 = vpack.c.b16 %v424, %v423
  %v510 = vpack.c.b16 %v426, %v425
  %v511 = vpack.c.b16 %v428, %v427
  %v512 = vpack.c.b16 %v430, %v429
  %v513 = vpack.c.b16 %v432, %v431
  %v514 = vpack.c.b16 %v434, %v433
  %v515 = vpack.c.b16 %v436, %v435
  %v516 = vpack.c.b16 %v438, %v437
  %v517 = vpack.c.b16 %v440, %v439
  %v518 = vpack.c.b16 %v442, %v441
  %v519 = vpack.c.b16 %v444, %v443
  %v520 = vpack.c.b16 %v446, %v445
  %v521 = vpack.c.b16 %v448, %v447
  %v522 = vpack.c.b16 %v450, %v449
  %v527 = vunpack.c.l.b16 %v159
  %v528 = vunpack.c.l.b16 %v160
  %v529 = vunpack.c.l.b16 %v161
  %v530 = vunpack.c.l.b16 %v162
  %v531 = vpack.c.b16 %v528, %v527
  %v532 = vpack.c.b16 %v530, %v529
  %vm534 = vcmask 203776
  %v536 = vsel %vm534, %v451, 0
  %v539 = vsel %vm534, %v452, 0
  %v542 = vsel %vm534, %v453, 0
  %v545 = vsel %vm534, %v454, 0
  %v548 = vsel %vm534, %v455, 0
  %v551 = vsel %vm534, %v456, 0
  %v554 = vsel %vm534, %v457, 0
  %v557 = vsel %vm534, %v458, 0
  %v560 = vsel %vm534, %v459, 0
  %v563 = vsel %vm534, %v460, 0
  %v566 = vsel %vm534, %v461, 0
  %v569 = vsel %vm534, %v462, 0
  %v572 = vsel %vm534, %v463, 0
  %v575 = vsel %vm534, %v464, 0
  %v578 = vsel %vm534, %v465, 0
  %v581 = vsel %vm534, %v466, 0
  %v584 = vsel %vm534, %v467, 0
  %v587 = vsel %vm534, %v468, 0
  %v590 = vsel %vm534, %v469, 0
  %v593 = vsel %vm534, %v470, 0
  %v596 = vsel %vm534, %v471, 0
  %v599 = vsel %vm534, %v472, 0
  %v602 = vsel %vm534, %v473, 0
  %v605 = vsel %vm534, %v474, 0
  %v608 = vsel %vm534, %v475, 0
  %v611 = vsel %vm534, %v476, 0
  %v614 = vsel %vm534, %v477, 0
  %v617 = vsel %vm534, %v478, 0
  %v620 = vsel %vm534, %v479, 0
  %v623 = vsel %vm534, %v480, 0
  %v626 = vsel %vm534, %v481, 0
  %v629 = vsel %vm534, %v482, 0
  %v632 = vsel %vm534, %v483, 0
  %v635 = vsel %vm534, %v484, 0
  %v638 = vsel %vm534, %v485, 0
  %v641 = vsel %vm534, %v486, 0
  %v644 = vsel %vm534, %v487, 0
  %v647 = vsel %vm534, %v488, 0
  %v650 = vsel %vm534, %v489, 0
  %v653 = vsel %vm534, %v490, 0
  %v656 = vsel %vm534, %v491, 0
  %v659 = vsel %vm534, %v492, 0
  %v662 = vsel %vm534, %v493, 0
  %v665 = vsel %vm534, %v494, 0
  %v668 = vsel %vm534, %v495, 0
  %v671 = vsel %vm534, %v496, 0
  %v674 = vsel %vm534, %v497, 0
  %v677 = vsel %vm534, %v498, 0
  %v680 = vsel %vm534, %v499, 0
  %v683 = vsel %vm534, %v500, 0
  %v686 = vsel %vm534, %v501, 0
  %v689 = vsel %vm534, %v502, 0
  %v692 = vsel %vm534, %v503, 0
  %v695 = vsel %vm534, %v504, 0
  %v698 = vsel %vm534, %v505, 0
  %v701 = vsel %vm534, %v506, 0
  %v704 = vsel %vm534, %v507, 0
  %v707 = vsel %vm534, %v508, 0
  %v710 = vsel %vm534, %v509, 0
  %v713 = vsel %vm534, %v510, 0
  %v716 = vsel %vm534, %v511, 0
  %v719 = vsel %vm534, %v512, 0
  %v722 = vsel %vm534, %v513, 0
  %v725 = vsel %vm534, %v514, 0
  %v728 = vsel %vm534, %v515, 0
  %v731 = vsel %vm534, %v516, 0
  %v734 = vsel %vm534, %v517, 0
  %v737 = vsel %vm534, %v518, 0
  %v740 = vsel %vm534, %v519, 0
  %v743 = vsel %vm534, %v520, 0
  %v746 = vsel %vm534, %v521, 0
  %v749 = vsel %vm534, %v522, 0
  %vm751 = vcmask 1043456
  %vm752 = vcmask 1044480
  %v753 = vsel %vm751, 4294967295, 65535
  %v754 = vsel %vm752, %v753, 0
  %v756 = vand.u32 %v532, %v754
  %758 = vmatprep.subr.bf16.mxu0 0
  %759 = vmatpush1.bf16.msra.mxu0 %v531
  %760 = vmatprep.subr.bf16.mxu0 0
  %761 = vmatpush1.bf16.msra.mxu0 %v756
  %762 = vmatprep.subr.bf16.mxu0 0
  %763 = vmatpush1.bf16.msra.mxu0 0
  %764 = vmatprep.subr.bf16.mxu0 0
  %765 = vmatpush1.bf16.msra.mxu0 0
  %766 = vmatprep.subr.bf16.mxu0 0
  %767 = vmatpush1.bf16.msra.mxu0 0
  %768 = vmatprep.subr.bf16.mxu0 0
  %769 = vmatpush1.bf16.msra.mxu0 0
  %770 = vmatprep.subr.bf16.mxu0 0
  %771 = vmatpush1.bf16.msra.mxu0 0
  %772 = vmatprep.subr.bf16.mxu0 0
  %773 = vmatpush1.bf16.msra.mxu0 0
  %774 = vmatprep.subr.bf16.mxu0 0
  %775 = vmatpush1.bf16.msra.mxu0 0
  %776 = vmatprep.subr.bf16.mxu0 0
  %777 = vmatpush1.bf16.msra.mxu0 0
  %778 = vmatprep.subr.bf16.mxu0 0
  %779 = vmatpush1.bf16.msra.mxu0 0
  %780 = vmatprep.subr.bf16.mxu0 0
  %781 = vmatpush1.bf16.msra.mxu0 0
  %782 = vmatprep.subr.bf16.mxu0 0
  %783 = vmatpush1.bf16.msra.mxu0 0
  %784 = vmatprep.subr.bf16.mxu0 0
  %785 = vmatpush1.bf16.msra.mxu0 0
  %786 = vmatprep.subr.bf16.mxu0 0
  %787 = vmatpush1.bf16.msra.mxu0 0
  %788 = vmatprep.subr.bf16.mxu0 0
  %789 = vmatpush1.bf16.msra.mxu0 0
  %790 = vmatprep.mubr.bf16.mxu0 0
  %791 = vmatmul.mubr.bf16.gmra.mrb[0].mxu0 %v536
  %v792 = vpop.f32.mrb[0].mxu0
  %v793 = vadd.f32 0.0, %v792
  %v794 = vpop.f32.mrb[0].mxu0
  %v795 = vpop.f32.mrb[0].mxu0
  %v796 = vadd.f32 0.0, %v795
  %v797 = vpop.f32.mrb[0].mxu0
  %798 = vmatprep.mubr.bf16.mxu0 0
  %799 = vmatmul.mubr.bf16.gmra.mrb[0].mxu0 %v539
  %v800 = vpop.f32.mrb[0].mxu0
  %v801 = vadd.f32 0.0, %v800
  %v802 = vpop.f32.mrb[0].mxu0
  %v803 = vpop.f32.mrb[0].mxu0
  %v804 = vadd.f32 0.0, %v803
  %v805 = vpop.f32.mrb[0].mxu0
  %806 = vmatprep.mubr.bf16.mxu0 0
  %807 = vmatmul.mubr.bf16.gmra.mrb[0].mxu0 %v542
  %v808 = vpop.f32.mrb[0].mxu0
  %v809 = vadd.f32 0.0, %v808
  %v810 = vpop.f32.mrb[0].mxu0
  %v811 = vpop.f32.mrb[0].mxu0
  %v812 = vadd.f32 0.0, %v811
  %v813 = vpop.f32.mrb[0].mxu0
  %814 = vmatprep.mubr.bf16.mxu0 0
  %815 = vmatmul.mubr.bf16.gmra.mrb[0].mxu0 %v545
  %v816 = vpop.f32.mrb[0].mxu0
  %v817 = vadd.f32 0.0, %v816
  %v818 = vpop.f32.mrb[0].mxu0
  %v819 = vpop.f32.mrb[0].mxu0
  %v820 = vadd.f32 0.0, %v819
  %v821 = vpop.f32.mrb[0].mxu0
  %822 = vmatprep.mubr.bf16.mxu0 0
  %823 = vmatmul.mubr.bf16.gmra.mrb[0].mxu0 %v548
  %v824 = vpop.f32.mrb[0].mxu0
  %v825 = vadd.f32 0.0, %v824
  %v826 = vpop.f32.mrb[0].mxu0
  %v827 = vpop.f32.mrb[0].mxu0
  %v828 = vadd.f32 0.0, %v827
  %v829 = vpop.f32.mrb[0].mxu0
  %830 = vmatprep.mubr.bf16.mxu0 0
  %831 = vmatmul.mubr.bf16.gmra.mrb[0].mxu0 %v551
  %v832 = vpop.f32.mrb[0].mxu0
  %v833 = vadd.f32 0.0, %v832
  %v834 = vpop.f32.mrb[0].mxu0
  %v835 = vpop.f32.mrb[0].mxu0
  %v836 = vadd.f32 0.0, %v835
  %v837 = vpop.f32.mrb[0].mxu0
  %838 = vmatprep.mubr.bf16.mxu0 0
  %839 = vmatmul.mubr.bf16.gmra.mrb[0].mxu0 %v554
  %v840 = vpop.f32.mrb[0].mxu0
  %v841 = vadd.f32 0.0, %v840
  %v842 = vpop.f32.mrb[0].mxu0
  %v843 = vpop.f32.mrb[0].mxu0
  %v844 = vadd.f32 0.0, %v843
  %v845 = vpop.f32.mrb[0].mxu0
  %846 = vmatprep.mubr.bf16.mxu0 0
  %847 = vmatmul.mubr.bf16.gmra.mrb[0].mxu0 %v557
  %v848 = vpop.f32.mrb[0].mxu0
  %v849 = vadd.f32 0.0, %v848
  %v850 = vpop.f32.mrb[0].mxu0
  %v851 = vpop.f32.mrb[0].mxu0
  %v852 = vadd.f32 0.0, %v851
  %v853 = vpop.f32.mrb[0].mxu0
  %854 = vmatprep.mubr.bf16.mxu0 0
  %855 = vmatmul.mubr.bf16.gmra.mrb[0].mxu0 %v560
  %v856 = vpop.f32.mrb[0].mxu0
  %v857 = vadd.f32 0.0, %v856
  %v858 = vpop.f32.mrb[0].mxu0
  %v859 = vpop.f32.mrb[0].mxu0
  %v860 = vadd.f32 0.0, %v859
  %v861 = vpop.f32.mrb[0].mxu0
  %862 = vmatprep.mubr.bf16.mxu0 0
  %863 = vmatmul.mubr.bf16.gmra.mrb[0].mxu0 %v563
  %v864 = vpop.f32.mrb[0].mxu0
  %v865 = vadd.f32 0.0, %v864
  %v866 = vpop.f32.mrb[0].mxu0
  %v867 = vpop.f32.mrb[0].mxu0
  %v868 = vadd.f32 0.0, %v867
  %v869 = vpop.f32.mrb[0].mxu0
  %870 = vmatprep.mubr.bf16.mxu0 0
  %871 = vmatmul.mubr.bf16.gmra.mrb[0].mxu0 %v566
  %v872 = vpop.f32.mrb[0].mxu0
  %v873 = vadd.f32 0.0, %v872
  %v874 = vpop.f32.mrb[0].mxu0
  %v875 = vpop.f32.mrb[0].mxu0
  %v876 = vadd.f32 0.0, %v875
  %v877 = vpop.f32.mrb[0].mxu0
  %878 = vmatprep.mubr.bf16.mxu0 0
  %879 = vmatmul.mubr.bf16.gmra.mrb[0].mxu0 %v569
  %v880 = vpop.f32.mrb[0].mxu0
  %v881 = vadd.f32 0.0, %v880
  %v882 = vpop.f32.mrb[0].mxu0
  %v883 = vpop.f32.mrb[0].mxu0
  %v884 = vadd.f32 0.0, %v883
  %v885 = vpop.f32.mrb[0].mxu0
  %886 = vmatprep.mubr.bf16.mxu0 0
  %887 = vmatmul.mubr.bf16.gmra.mrb[0].mxu0 %v572
  %v888 = vpop.f32.mrb[0].mxu0
  %v889 = vadd.f32 0.0, %v888
  %v890 = vpop.f32.mrb[0].mxu0
  %v891 = vpop.f32.mrb[0].mxu0
  %v892 = vadd.f32 0.0, %v891
  %v893 = vpop.f32.mrb[0].mxu0
  %894 = vmatprep.mubr.bf16.mxu0 0
  %895 = vmatmul.mubr.bf16.gmra.mrb[0].mxu0 %v575
  %v896 = vpop.f32.mrb[0].mxu0
  %v897 = vadd.f32 0.0, %v896
  %v898 = vpop.f32.mrb[0].mxu0
  %v899 = vpop.f32.mrb[0].mxu0
  %v900 = vadd.f32 0.0, %v899
  %v901 = vpop.f32.mrb[0].mxu0
  %902 = vmatprep.mubr.bf16.mxu0 0
  %903 = vmatmul.mubr.bf16.gmra.mrb[0].mxu0 %v578
  %v904 = vpop.f32.mrb[0].mxu0
  %v905 = vadd.f32 0.0, %v904
  %v906 = vpop.f32.mrb[0].mxu0
  %v907 = vpop.f32.mrb[0].mxu0
  %v908 = vadd.f32 0.0, %v907
  %v909 = vpop.f32.mrb[0].mxu0
  %910 = vmatprep.mubr.bf16.mxu0 0
  %911 = vmatmul.mubr.bf16.gmra.mrb[0].mxu0 %v581
  %v912 = vpop.f32.mrb[0].mxu0
  %v913 = vadd.f32 0.0, %v912
  %v914 = vpop.f32.mrb[0].mxu0
  %v915 = vpop.f32.mrb[0].mxu0
  %v916 = vadd.f32 0.0, %v915
  %v917 = vpop.f32.mrb[0].mxu0
  %918 = vmatprep.mubr.bf16.mxu0 0
  %919 = vmatmul.mubr.bf16.gmra.mrb[0].mxu0 %v584
  %v920 = vpop.f32.mrb[0].mxu0
  %v921 = vadd.f32 0.0, %v920
  %v922 = vpop.f32.mrb[0].mxu0
  %v923 = vpop.f32.mrb[0].mxu0
  %v924 = vadd.f32 0.0, %v923
  %v925 = vpop.f32.mrb[0].mxu0
  %926 = vmatprep.mubr.bf16.mxu0 0
  %927 = vmatmul.mubr.bf16.gmra.mrb[0].mxu0 %v587
  %v928 = vpop.f32.mrb[0].mxu0
  %v929 = vadd.f32 0.0, %v928
  %v930 = vpop.f32.mrb[0].mxu0
  %v931 = vpop.f32.mrb[0].mxu0
  %v932 = vadd.f32 0.0, %v931
  %v933 = vpop.f32.mrb[0].mxu0
  %934 = vmatprep.mubr.bf16.mxu0 0
  %935 = vmatmul.mubr.bf16.gmra.mrb[0].mxu0 %v590
  %v936 = vpop.f32.mrb[0].mxu0
  %v937 = vadd.f32 0.0, %v936
  %v938 = vpop.f32.mrb[0].mxu0
  %v939 = vpop.f32.mrb[0].mxu0
  %v940 = vadd.f32 0.0, %v939
  %v941 = vpop.f32.mrb[0].mxu0
  %942 = vmatprep.mubr.bf16.mxu0 0
  %943 = vmatmul.mubr.bf16.gmra.mrb[0].mxu0 %v593
  %v944 = vpop.f32.mrb[0].mxu0
  %v945 = vadd.f32 0.0, %v944
  %v946 = vpop.f32.mrb[0].mxu0
  %v947 = vpop.f32.mrb[0].mxu0
  %v948 = vadd.f32 0.0, %v947
  %v949 = vpop.f32.mrb[0].mxu0
  %950 = vmatprep.mubr.bf16.mxu0 0
  %951 = vmatmul.mubr.bf16.gmra.mrb[0].mxu0 %v596
  %v952 = vpop.f32.mrb[0].mxu0
  %v953 = vadd.f32 0.0, %v952
  %v954 = vpop.f32.mrb[0].mxu0
  %v955 = vpop.f32.mrb[0].mxu0
  %v956 = vadd.f32 0.0, %v955
  %v957 = vpop.f32.mrb[0].mxu0
  %958 = vmatprep.mubr.bf16.mxu0 0
  %959 = vmatmul.mubr.bf16.gmra.mrb[0].mxu0 %v599
  %v960 = vpop.f32.mrb[0].mxu0
  %v961 = vadd.f32 0.0, %v960
  %v962 = vpop.f32.mrb[0].mxu0
  %v963 = vpop.f32.mrb[0].mxu0
  %v964 = vadd.f32 0.0, %v963
  %v965 = vpop.f32.mrb[0].mxu0
  %966 = vmatprep.mubr.bf16.mxu0 0
  %967 = vmatmul.mubr.bf16.gmra.mrb[0].mxu0 %v602
  %v968 = vpop.f32.mrb[0].mxu0
  %v969 = vadd.f32 0.0, %v968
  %v970 = vpop.f32.mrb[0].mxu0
  %v971 = vpop.f32.mrb[0].mxu0
  %v972 = vadd.f32 0.0, %v971
  %v973 = vpop.f32.mrb[0].mxu0
  %974 = vmatprep.mubr.bf16.mxu0 0
  %975 = vmatmul.mubr.bf16.gmra.mrb[0].mxu0 %v605
  %v976 = vpop.f32.mrb[0].mxu0
  %v977 = vadd.f32 0.0, %v976
  %v978 = vpop.f32.mrb[0].mxu0
  %v979 = vpop.f32.mrb[0].mxu0
  %v980 = vadd.f32 0.0, %v979
  %v981 = vpop.f32.mrb[0].mxu0
  %982 = vmatprep.mubr.bf16.mxu0 0
  %983 = vmatmul.mubr.bf16.gmra.mrb[0].mxu0 %v608
  %v984 = vpop.f32.mrb[0].mxu0
  %v985 = vadd.f32 0.0, %v984
  %v986 = vpop.f32.mrb[0].mxu0
  %v987 = vpop.f32.mrb[0].mxu0
  %v988 = vadd.f32 0.0, %v987
  %v989 = vpop.f32.mrb[0].mxu0
  %990 = vmatprep.mubr.bf16.mxu0 0
  %991 = vmatmul.mubr.bf16.gmra.mrb[0].mxu0 %v611
  %v992 = vpop.f32.mrb[0].mxu0
  %v993 = vadd.f32 0.0, %v992
  %v994 = vpop.f32.mrb[0].mxu0
  %v995 = vpop.f32.mrb[0].mxu0
  %v996 = vadd.f32 0.0, %v995
  %v997 = vpop.f32.mrb[0].mxu0
  %998 = vmatprep.mubr.bf16.mxu0 0
  %999 = vmatmul.mubr.bf16.gmra.mrb[0].mxu0 %v614
  %v1000 = vpop.f32.mrb[0].mxu0
  %v1001 = vadd.f32 0.0, %v1000
  %v1002 = vpop.f32.mrb[0].mxu0
  %v1003 = vpop.f32.mrb[0].mxu0
  %v1004 = vadd.f32 0.0, %v1003
  %v1005 = vpop.f32.mrb[0].mxu0
  %1006 = vmatprep.mubr.bf16.mxu0 0
  %1007 = vmatmul.mubr.bf16.gmra.mrb[0].mxu0 %v617
  %v1008 = vpop.f32.mrb[0].mxu0
  %v1009 = vadd.f32 0.0, %v1008
  %v1010 = vpop.f32.mrb[0].mxu0
  %v1011 = vpop.f32.mrb[0].mxu0
  %v1012 = vadd.f32 0.0, %v1011
  %v1013 = vpop.f32.mrb[0].mxu0
  %1014 = vmatprep.mubr.bf16.mxu0 0
  %1015 = vmatmul.mubr.bf16.gmra.mrb[0].mxu0 %v620
  %v1016 = vpop.f32.mrb[0].mxu0
  %v1017 = vadd.f32 0.0, %v1016
  %v1018 = vpop.f32.mrb[0].mxu0
  %v1019 = vpop.f32.mrb[0].mxu0
  %v1020 = vadd.f32 0.0, %v1019
  %v1021 = vpop.f32.mrb[0].mxu0
  %1022 = vmatprep.mubr.bf16.mxu0 0
  %1023 = vmatmul.mubr.bf16.gmra.mrb[0].mxu0 %v623
  %v1024 = vpop.f32.mrb[0].mxu0
  %v1025 = vadd.f32 0.0, %v1024
  %v1026 = vpop.f32.mrb[0].mxu0
  %v1027 = vpop.f32.mrb[0].mxu0
  %v1028 = vadd.f32 0.0, %v1027
  %v1029 = vpop.f32.mrb[0].mxu0
  %1030 = vmatprep.mubr.bf16.mxu0 0
  %1031 = vmatmul.mubr.bf16.gmra.mrb[0].mxu0 %v626
  %v1032 = vpop.f32.mrb[0].mxu0
  %v1033 = vadd.f32 0.0, %v1032
  %v1034 = vpop.f32.mrb[0].mxu0
  %v1035 = vpop.f32.mrb[0].mxu0
  %v1036 = vadd.f32 0.0, %v1035
  %v1037 = vpop.f32.mrb[0].mxu0
  %1038 = vmatprep.mubr.bf16.mxu0 0
  %1039 = vmatmul.mubr.bf16.gmra.mrb[0].mxu0 %v629
  %v1040 = vpop.f32.mrb[0].mxu0
  %v1041 = vadd.f32 0.0, %v1040
  %v1042 = vpop.f32.mrb[0].mxu0
  %v1043 = vpop.f32.mrb[0].mxu0
  %v1044 = vadd.f32 0.0, %v1043
  %v1045 = vpop.f32.mrb[0].mxu0
  %1046 = vmatprep.mubr.bf16.mxu0 0
  %1047 = vmatmul.mubr.bf16.gmra.mrb[0].mxu0 %v632
  %v1048 = vpop.f32.mrb[0].mxu0
  %v1049 = vadd.f32 0.0, %v1048
  %v1050 = vpop.f32.mrb[0].mxu0
  %v1051 = vpop.f32.mrb[0].mxu0
  %v1052 = vadd.f32 0.0, %v1051
  %v1053 = vpop.f32.mrb[0].mxu0
  %1054 = vmatprep.mubr.bf16.mxu0 0
  %1055 = vmatmul.mubr.bf16.gmra.mrb[0].mxu0 %v635
  %v1056 = vpop.f32.mrb[0].mxu0
  %v1057 = vadd.f32 0.0, %v1056
  %v1058 = vpop.f32.mrb[0].mxu0
  %v1059 = vpop.f32.mrb[0].mxu0
  %v1060 = vadd.f32 0.0, %v1059
  %v1061 = vpop.f32.mrb[0].mxu0
  %1062 = vmatprep.mubr.bf16.mxu0 0
  %1063 = vmatmul.mubr.bf16.gmra.mrb[0].mxu0 %v638
  %v1064 = vpop.f32.mrb[0].mxu0
  %v1065 = vadd.f32 0.0, %v1064
  %v1066 = vpop.f32.mrb[0].mxu0
  %v1067 = vpop.f32.mrb[0].mxu0
  %v1068 = vadd.f32 0.0, %v1067
  %v1069 = vpop.f32.mrb[0].mxu0
  %1070 = vmatprep.mubr.bf16.mxu0 0
  %1071 = vmatmul.mubr.bf16.gmra.mrb[0].mxu0 %v641
  %v1072 = vpop.f32.mrb[0].mxu0
  %v1073 = vadd.f32 0.0, %v1072
  %v1074 = vpop.f32.mrb[0].mxu0
  %v1075 = vpop.f32.mrb[0].mxu0
  %v1076 = vadd.f32 0.0, %v1075
  %v1077 = vpop.f32.mrb[0].mxu0
  %1078 = vmatprep.mubr.bf16.mxu0 0
  %1079 = vmatmul.mubr.bf16.gmra.mrb[0].mxu0 %v644
  %v1080 = vpop.f32.mrb[0].mxu0
  %v1081 = vadd.f32 0.0, %v1080
  %v1082 = vpop.f32.mrb[0].mxu0
  %v1083 = vpop.f32.mrb[0].mxu0
  %v1084 = vadd.f32 0.0, %v1083
  %v1085 = vpop.f32.mrb[0].mxu0
  %1086 = vmatprep.mubr.bf16.mxu0 0
  %1087 = vmatmul.mubr.bf16.gmra.mrb[0].mxu0 %v647
  %v1088 = vpop.f32.mrb[0].mxu0
  %v1089 = vadd.f32 0.0, %v1088
  %v1090 = vpop.f32.mrb[0].mxu0
  %v1091 = vpop.f32.mrb[0].mxu0
  %v1092 = vadd.f32 0.0, %v1091
  %v1093 = vpop.f32.mrb[0].mxu0
  %1094 = vmatprep.mubr.bf16.mxu0 0
  %1095 = vmatmul.mubr.bf16.gmra.mrb[0].mxu0 %v650
  %v1096 = vpop.f32.mrb[0].mxu0
  %v1097 = vadd.f32 0.0, %v1096
  %v1098 = vpop.f32.mrb[0].mxu0
  %v1099 = vpop.f32.mrb[0].mxu0
  %v1100 = vadd.f32 0.0, %v1099
  %v1101 = vpop.f32.mrb[0].mxu0
  %1102 = vmatprep.mubr.bf16.mxu0 0
  %1103 = vmatmul.mubr.bf16.gmra.mrb[0].mxu0 %v653
  %v1104 = vpop.f32.mrb[0].mxu0
  %v1105 = vadd.f32 0.0, %v1104
  %v1106 = vpop.f32.mrb[0].mxu0
  %v1107 = vpop.f32.mrb[0].mxu0
  %v1108 = vadd.f32 0.0, %v1107
  %v1109 = vpop.f32.mrb[0].mxu0
  %1110 = vmatprep.mubr.bf16.mxu0 0
  %1111 = vmatmul.mubr.bf16.gmra.mrb[0].mxu0 %v656
  %v1112 = vpop.f32.mrb[0].mxu0
  %v1113 = vadd.f32 0.0, %v1112
  %v1114 = vpop.f32.mrb[0].mxu0
  %v1115 = vpop.f32.mrb[0].mxu0
  %v1116 = vadd.f32 0.0, %v1115
  %v1117 = vpop.f32.mrb[0].mxu0
  %1118 = vmatprep.mubr.bf16.mxu0 0
  %1119 = vmatmul.mubr.bf16.gmra.mrb[0].mxu0 %v659
  %v1120 = vpop.f32.mrb[0].mxu0
  %v1121 = vadd.f32 0.0, %v1120
  %v1122 = vpop.f32.mrb[0].mxu0
  %v1123 = vpop.f32.mrb[0].mxu0
  %v1124 = vadd.f32 0.0, %v1123
  %v1125 = vpop.f32.mrb[0].mxu0
  %1126 = vmatprep.mubr.bf16.mxu0 0
  %1127 = vmatmul.mubr.bf16.gmra.mrb[0].mxu0 %v662
  %v1128 = vpop.f32.mrb[0].mxu0
  %v1129 = vadd.f32 0.0, %v1128
  %v1130 = vpop.f32.mrb[0].mxu0
  %v1131 = vpop.f32.mrb[0].mxu0
  %v1132 = vadd.f32 0.0, %v1131
  %v1133 = vpop.f32.mrb[0].mxu0
  %1134 = vmatprep.mubr.bf16.mxu0 0
  %1135 = vmatmul.mubr.bf16.gmra.mrb[0].mxu0 %v665
  %v1136 = vpop.f32.mrb[0].mxu0
  %v1137 = vadd.f32 0.0, %v1136
  %v1138 = vpop.f32.mrb[0].mxu0
  %v1139 = vpop.f32.mrb[0].mxu0
  %v1140 = vadd.f32 0.0, %v1139
  %v1141 = vpop.f32.mrb[0].mxu0
  %1142 = vmatprep.mubr.bf16.mxu0 0
  %1143 = vmatmul.mubr.bf16.gmra.mrb[0].mxu0 %v668
  %v1144 = vpop.f32.mrb[0].mxu0
  %v1145 = vadd.f32 0.0, %v1144
  %v1146 = vpop.f32.mrb[0].mxu0
  %v1147 = vpop.f32.mrb[0].mxu0
  %v1148 = vadd.f32 0.0, %v1147
  %v1149 = vpop.f32.mrb[0].mxu0
  %1150 = vmatprep.mubr.bf16.mxu0 0
  %1151 = vmatmul.mubr.bf16.gmra.mrb[0].mxu0 %v671
  %v1152 = vpop.f32.mrb[0].mxu0
  %v1153 = vadd.f32 0.0, %v1152
  %v1154 = vpop.f32.mrb[0].mxu0
  %v1155 = vpop.f32.mrb[0].mxu0
  %v1156 = vadd.f32 0.0, %v1155
  %v1157 = vpop.f32.mrb[0].mxu0
  %1158 = vmatprep.mubr.bf16.mxu0 0
  %1159 = vmatmul.mubr.bf16.gmra.mrb[0].mxu0 %v674
  %v1160 = vpop.f32.mrb[0].mxu0
  %v1161 = vadd.f32 0.0, %v1160
  %v1162 = vpop.f32.mrb[0].mxu0
  %v1163 = vpop.f32.mrb[0].mxu0
  %v1164 = vadd.f32 0.0, %v1163
  %v1165 = vpop.f32.mrb[0].mxu0
  %1166 = vmatprep.mubr.bf16.mxu0 0
  %1167 = vmatmul.mubr.bf16.gmra.mrb[0].mxu0 %v677
  %v1168 = vpop.f32.mrb[0].mxu0
  %v1169 = vadd.f32 0.0, %v1168
  %v1170 = vpop.f32.mrb[0].mxu0
  %v1171 = vpop.f32.mrb[0].mxu0
  %v1172 = vadd.f32 0.0, %v1171
  %v1173 = vpop.f32.mrb[0].mxu0
  %1174 = vmatprep.mubr.bf16.mxu0 0
  %1175 = vmatmul.mubr.bf16.gmra.mrb[0].mxu0 %v680
  %v1176 = vpop.f32.mrb[0].mxu0
  %v1177 = vadd.f32 0.0, %v1176
  %v1178 = vpop.f32.mrb[0].mxu0
  %v1179 = vpop.f32.mrb[0].mxu0
  %v1180 = vadd.f32 0.0, %v1179
  %v1181 = vpop.f32.mrb[0].mxu0
  %1182 = vmatprep.mubr.bf16.mxu0 0
  %1183 = vmatmul.mubr.bf16.gmra.mrb[0].mxu0 %v683
  %v1184 = vpop.f32.mrb[0].mxu0
  %v1185 = vadd.f32 0.0, %v1184
  %v1186 = vpop.f32.mrb[0].mxu0
  %v1187 = vpop.f32.mrb[0].mxu0
  %v1188 = vadd.f32 0.0, %v1187
  %v1189 = vpop.f32.mrb[0].mxu0
  %1190 = vmatprep.mubr.bf16.mxu0 0
  %1191 = vmatmul.mubr.bf16.gmra.mrb[0].mxu0 %v686
  %v1192 = vpop.f32.mrb[0].mxu0
  %v1193 = vadd.f32 0.0, %v1192
  %v1194 = vpop.f32.mrb[0].mxu0
  %v1195 = vpop.f32.mrb[0].mxu0
  %v1196 = vadd.f32 0.0, %v1195
  %v1197 = vpop.f32.mrb[0].mxu0
  %1198 = vmatprep.mubr.bf16.mxu0 0
  %1199 = vmatmul.mubr.bf16.gmra.mrb[0].mxu0 %v689
  %v1200 = vpop.f32.mrb[0].mxu0
  %v1201 = vadd.f32 0.0, %v1200
  %v1202 = vpop.f32.mrb[0].mxu0
  %v1203 = vpop.f32.mrb[0].mxu0
  %v1204 = vadd.f32 0.0, %v1203
  %v1205 = vpop.f32.mrb[0].mxu0
  %1206 = vmatprep.mubr.bf16.mxu0 0
  %1207 = vmatmul.mubr.bf16.gmra.mrb[0].mxu0 %v692
  %v1208 = vpop.f32.mrb[0].mxu0
  %v1209 = vadd.f32 0.0, %v1208
  %v1210 = vpop.f32.mrb[0].mxu0
  %v1211 = vpop.f32.mrb[0].mxu0
  %v1212 = vadd.f32 0.0, %v1211
  %v1213 = vpop.f32.mrb[0].mxu0
  %1214 = vmatprep.mubr.bf16.mxu0 0
  %1215 = vmatmul.mubr.bf16.gmra.mrb[0].mxu0 %v695
  %v1216 = vpop.f32.mrb[0].mxu0
  %v1217 = vadd.f32 0.0, %v1216
  %v1218 = vpop.f32.mrb[0].mxu0
  %v1219 = vpop.f32.mrb[0].mxu0
  %v1220 = vadd.f32 0.0, %v1219
  %v1221 = vpop.f32.mrb[0].mxu0
  %1222 = vmatprep.mubr.bf16.mxu0 0
  %1223 = vmatmul.mubr.bf16.gmra.mrb[0].mxu0 %v698
  %v1224 = vpop.f32.mrb[0].mxu0
  %v1225 = vadd.f32 0.0, %v1224
  %v1226 = vpop.f32.mrb[0].mxu0
  %v1227 = vpop.f32.mrb[0].mxu0
  %v1228 = vadd.f32 0.0, %v1227
  %v1229 = vpop.f32.mrb[0].mxu0
  %1230 = vmatprep.mubr.bf16.mxu0 0
  %1231 = vmatmul.mubr.bf16.gmra.mrb[0].mxu0 %v701
  %v1232 = vpop.f32.mrb[0].mxu0
  %v1233 = vadd.f32 0.0, %v1232
  %v1234 = vpop.f32.mrb[0].mxu0
  %v1235 = vpop.f32.mrb[0].mxu0
  %v1236 = vadd.f32 0.0, %v1235
  %v1237 = vpop.f32.mrb[0].mxu0
  %1238 = vmatprep.mubr.bf16.mxu0 0
  %1239 = vmatmul.mubr.bf16.gmra.mrb[0].mxu0 %v704
  %v1240 = vpop.f32.mrb[0].mxu0
  %v1241 = vadd.f32 0.0, %v1240
  %v1242 = vpop.f32.mrb[0].mxu0
  %v1243 = vpop.f32.mrb[0].mxu0
  %v1244 = vadd.f32 0.0, %v1243
  %v1245 = vpop.f32.mrb[0].mxu0
  %1246 = vmatprep.mubr.bf16.mxu0 0
  %1247 = vmatmul.mubr.bf16.gmra.mrb[0].mxu0 %v707
  %v1248 = vpop.f32.mrb[0].mxu0
  %v1249 = vadd.f32 0.0, %v1248
  %v1250 = vpop.f32.mrb[0].mxu0
  %v1251 = vpop.f32.mrb[0].mxu0
  %v1252 = vadd.f32 0.0, %v1251
  %v1253 = vpop.f32.mrb[0].mxu0
  %1254 = vmatprep.mubr.bf16.mxu0 0
  %1255 = vmatmul.mubr.bf16.gmra.mrb[0].mxu0 %v710
  %v1256 = vpop.f32.mrb[0].mxu0
  %v1257 = vadd.f32 0.0, %v1256
  %v1258 = vpop.f32.mrb[0].mxu0
  %v1259 = vpop.f32.mrb[0].mxu0
  %v1260 = vadd.f32 0.0, %v1259
  %v1261 = vpop.f32.mrb[0].mxu0
  %1262 = vmatprep.mubr.bf16.mxu0 0
  %1263 = vmatmul.mubr.bf16.gmra.mrb[0].mxu0 %v713
  %v1264 = vpop.f32.mrb[0].mxu0
  %v1265 = vadd.f32 0.0, %v1264
  %v1266 = vpop.f32.mrb[0].mxu0
  %v1267 = vpop.f32.mrb[0].mxu0
  %v1268 = vadd.f32 0.0, %v1267
  %v1269 = vpop.f32.mrb[0].mxu0
  %1270 = vmatprep.mubr.bf16.mxu0 0
  %1271 = vmatmul.mubr.bf16.gmra.mrb[0].mxu0 %v716
  %v1272 = vpop.f32.mrb[0].mxu0
  %v1273 = vadd.f32 0.0, %v1272
  %v1274 = vpop.f32.mrb[0].mxu0
  %v1275 = vpop.f32.mrb[0].mxu0
  %v1276 = vadd.f32 0.0, %v1275
  %v1277 = vpop.f32.mrb[0].mxu0
  %1278 = vmatprep.mubr.bf16.mxu0 0
  %1279 = vmatmul.mubr.bf16.gmra.mrb[0].mxu0 %v719
  %v1280 = vpop.f32.mrb[0].mxu0
  %v1281 = vadd.f32 0.0, %v1280
  %v1282 = vpop.f32.mrb[0].mxu0
  %v1283 = vpop.f32.mrb[0].mxu0
  %v1284 = vadd.f32 0.0, %v1283
  %v1285 = vpop.f32.mrb[0].mxu0
  %1286 = vmatprep.mubr.bf16.mxu0 0
  %1287 = vmatmul.mubr.bf16.gmra.mrb[0].mxu0 %v722
  %v1288 = vpop.f32.mrb[0].mxu0
  %v1289 = vadd.f32 0.0, %v1288
  %v1290 = vpop.f32.mrb[0].mxu0
  %v1291 = vpop.f32.mrb[0].mxu0
  %v1292 = vadd.f32 0.0, %v1291
  %v1293 = vpop.f32.mrb[0].mxu0
  %1294 = vmatprep.mubr.bf16.mxu0 0
  %1295 = vmatmul.mubr.bf16.gmra.mrb[0].mxu0 %v725
  %v1296 = vpop.f32.mrb[0].mxu0
  %v1297 = vadd.f32 0.0, %v1296
  %v1298 = vpop.f32.mrb[0].mxu0
  %v1299 = vpop.f32.mrb[0].mxu0
  %v1300 = vadd.f32 0.0, %v1299
  %v1301 = vpop.f32.mrb[0].mxu0
  %1302 = vmatprep.mubr.bf16.mxu0 0
  %1303 = vmatmul.mubr.bf16.gmra.mrb[0].mxu0 %v728
  %v1304 = vpop.f32.mrb[0].mxu0
  %v1305 = vadd.f32 0.0, %v1304
  %v1306 = vpop.f32.mrb[0].mxu0
  %v1307 = vpop.f32.mrb[0].mxu0
  %v1308 = vadd.f32 0.0, %v1307
  %v1309 = vpop.f32.mrb[0].mxu0
  %1310 = vmatprep.mubr.bf16.mxu0 0
  %1311 = vmatmul.mubr.bf16.gmra.mrb[0].mxu0 %v731
  %v1312 = vpop.f32.mrb[0].mxu0
  %v1313 = vadd.f32 0.0, %v1312
  %v1314 = vpop.f32.mrb[0].mxu0
  %v1315 = vpop.f32.mrb[0].mxu0
  %v1316 = vadd.f32 0.0, %v1315
  %v1317 = vpop.f32.mrb[0].mxu0
  %1318 = vmatprep.mubr.bf16.mxu0 0
  %1319 = vmatmul.mubr.bf16.gmra.mrb[0].mxu0 %v734
  %v1320 = vpop.f32.mrb[0].mxu0
  %v1321 = vadd.f32 0.0, %v1320
  %v1322 = vpop.f32.mrb[0].mxu0
  %v1323 = vpop.f32.mrb[0].mxu0
  %v1324 = vadd.f32 0.0, %v1323
  %v1325 = vpop.f32.mrb[0].mxu0
  %1326 = vmatprep.mubr.bf16.mxu0 0
  %1327 = vmatmul.mubr.bf16.gmra.mrb[0].mxu0 %v737
  %v1328 = vpop.f32.mrb[0].mxu0
  %v1329 = vadd.f32 0.0, %v1328
  %v1330 = vpop.f32.mrb[0].mxu0
  %v1331 = vpop.f32.mrb[0].mxu0
  %v1332 = vadd.f32 0.0, %v1331
  %v1333 = vpop.f32.mrb[0].mxu0
  %1334 = vmatprep.mubr.bf16.mxu0 0
  %1335 = vmatmul.mubr.bf16.gmra.mrb[0].mxu0 %v740
  %v1336 = vpop.f32.mrb[0].mxu0
  %v1337 = vadd.f32 0.0, %v1336
  %v1338 = vpop.f32.mrb[0].mxu0
  %v1339 = vpop.f32.mrb[0].mxu0
  %v1340 = vadd.f32 0.0, %v1339
  %v1341 = vpop.f32.mrb[0].mxu0
  %1342 = vmatprep.mubr.bf16.mxu0 0
  %1343 = vmatmul.mubr.bf16.gmra.mrb[0].mxu0 %v743
  %v1344 = vpop.f32.mrb[0].mxu0
  %v1345 = vadd.f32 0.0, %v1344
  %v1346 = vpop.f32.mrb[0].mxu0
  %v1347 = vpop.f32.mrb[0].mxu0
  %v1348 = vadd.f32 0.0, %v1347
  %v1349 = vpop.f32.mrb[0].mxu0
  %1350 = vmatprep.mubr.bf16.mxu0 0
  %1351 = vmatmul.mubr.bf16.gmra.mrb[0].mxu0 %v746
  %v1352 = vpop.f32.mrb[0].mxu0
  %v1353 = vadd.f32 0.0, %v1352
  %v1354 = vpop.f32.mrb[0].mxu0
  %v1355 = vpop.f32.mrb[0].mxu0
  %v1356 = vadd.f32 0.0, %v1355
  %v1357 = vpop.f32.mrb[0].mxu0
  %1358 = vmatprep.mubr.bf16.mxu0 0
  %1359 = vmatmul.mubr.bf16.gmra.mrb[0].mxu0 %v749
  %v1360 = vpop.f32.mrb[0].mxu0
  %v1361 = vadd.f32 0.0, %v1360
  %v1362 = vpop.f32.mrb[0].mxu0
  %v1363 = vpop.f32.mrb[0].mxu0
  %v1364 = vadd.f32 0.0, %v1363
  %v1365 = vpop.f32.mrb[0].mxu0
  %1366 = vdwg.mxu0
  %vm1367 = vcmask 80896
  %v1368 = vsel %vm1367, %v793, -inf
  %v1369 = vsel %vm1367, %v937, -inf
  %v1370 = vmax.f32 %v1368, %v1369
  %v1371 = vsel %vm1367, %v1081, -inf
  %v1372 = vmax.f32 %v1370, %v1371
  %v1373 = vsel %vm1367, %v1225, -inf
  %v1374 = vmax.f32 %v1372, %v1373
  %v1375 = vsel %vm1367, %v796, -inf
  %v1376 = vsel %vm1367, %v940, -inf
  %v1377 = vmax.f32 %v1375, %v1376
  %v1378 = vsel %vm1367, %v1084, -inf
  %v1379 = vmax.f32 %v1377, %v1378
  %v1380 = vsel %vm1367, %v1228, -inf
  %v1381 = vmax.f32 %v1379, %v1380
  %v1382 = vsel %vm1367, %v801, -inf
  %v1383 = vsel %vm1367, %v945, -inf
  %v1384 = vmax.f32 %v1382, %v1383
  %v1385 = vsel %vm1367, %v1089, -inf
  %v1386 = vmax.f32 %v1384, %v1385
  %v1387 = vsel %vm1367, %v1233, -inf
  %v1388 = vmax.f32 %v1386, %v1387
  %v1389 = vsel %vm1367, %v804, -inf
  %v1390 = vsel %vm1367, %v948, -inf
  %v1391 = vmax.f32 %v1389, %v1390
  %v1392 = vsel %vm1367, %v1092, -inf
  %v1393 = vmax.f32 %v1391, %v1392
  %v1394 = vsel %vm1367, %v1236, -inf
  %v1395 = vmax.f32 %v1393, %v1394
  %v1396 = vsel %vm1367, %v809, -inf
  %v1397 = vsel %vm1367, %v953, -inf
  %v1398 = vmax.f32 %v1396, %v1397
  %v1399 = vsel %vm1367, %v1097, -inf
  %v1400 = vmax.f32 %v1398, %v1399
  %v1401 = vsel %vm1367, %v1241, -inf
  %v1402 = vmax.f32 %v1400, %v1401
  %v1403 = vsel %vm1367, %v812, -inf
  %v1404 = vsel %vm1367, %v956, -inf
  %v1405 = vmax.f32 %v1403, %v1404
  %v1406 = vsel %vm1367, %v1100, -inf
  %v1407 = vmax.f32 %v1405, %v1406
  %v1408 = vsel %vm1367, %v1244, -inf
  %v1409 = vmax.f32 %v1407, %v1408
  %v1410 = vsel %vm1367, %v817, -inf
  %v1411 = vsel %vm1367, %v961, -inf
  %v1412 = vmax.f32 %v1410, %v1411
  %v1413 = vsel %vm1367, %v1105, -inf
  %v1414 = vmax.f32 %v1412, %v1413
  %v1415 = vsel %vm1367, %v1249, -inf
  %v1416 = vmax.f32 %v1414, %v1415
  %v1417 = vsel %vm1367, %v820, -inf
  %v1418 = vsel %vm1367, %v964, -inf
  %v1419 = vmax.f32 %v1417, %v1418
  %v1420 = vsel %vm1367, %v1108, -inf
  %v1421 = vmax.f32 %v1419, %v1420
  %v1422 = vsel %vm1367, %v1252, -inf
  %v1423 = vmax.f32 %v1421, %v1422
  %v1424 = vsel %vm1367, %v825, -inf
  %v1425 = vsel %vm1367, %v969, -inf
  %v1426 = vmax.f32 %v1424, %v1425
  %v1427 = vsel %vm1367, %v1113, -inf
  %v1428 = vmax.f32 %v1426, %v1427
  %v1429 = vsel %vm1367, %v1257, -inf
  %v1430 = vmax.f32 %v1428, %v1429
  %v1431 = vsel %vm1367, %v828, -inf
  %v1432 = vsel %vm1367, %v972, -inf
  %v1433 = vmax.f32 %v1431, %v1432
  %v1434 = vsel %vm1367, %v1116, -inf
  %v1435 = vmax.f32 %v1433, %v1434
  %v1436 = vsel %vm1367, %v1260, -inf
  %v1437 = vmax.f32 %v1435, %v1436
  %v1438 = vsel %vm1367, %v833, -inf
  %v1439 = vsel %vm1367, %v977, -inf
  %v1440 = vmax.f32 %v1438, %v1439
  %v1441 = vsel %vm1367, %v1121, -inf
  %v1442 = vmax.f32 %v1440, %v1441
  %v1443 = vsel %vm1367, %v1265, -inf
  %v1444 = vmax.f32 %v1442, %v1443
  %v1445 = vsel %vm1367, %v836, -inf
  %v1446 = vsel %vm1367, %v980, -inf
  %v1447 = vmax.f32 %v1445, %v1446
  %v1448 = vsel %vm1367, %v1124, -inf
  %v1449 = vmax.f32 %v1447, %v1448
  %v1450 = vsel %vm1367, %v1268, -inf
  %v1451 = vmax.f32 %v1449, %v1450
  %v1452 = vsel %vm1367, %v841, -inf
  %v1453 = vsel %vm1367, %v985, -inf
  %v1454 = vmax.f32 %v1452, %v1453
  %v1455 = vsel %vm1367, %v1129, -inf
  %v1456 = vmax.f32 %v1454, %v1455
  %v1457 = vsel %vm1367, %v1273, -inf
  %v1458 = vmax.f32 %v1456, %v1457
  %v1459 = vsel %vm1367, %v844, -inf
  %v1460 = vsel %vm1367, %v988, -inf
  %v1461 = vmax.f32 %v1459, %v1460
  %v1462 = vsel %vm1367, %v1132, -inf
  %v1463 = vmax.f32 %v1461, %v1462
  %v1464 = vsel %vm1367, %v1276, -inf
  %v1465 = vmax.f32 %v1463, %v1464
  %v1466 = vsel %vm1367, %v849, -inf
  %v1467 = vsel %vm1367, %v993, -inf
  %v1468 = vmax.f32 %v1466, %v1467
  %v1469 = vsel %vm1367, %v1137, -inf
  %v1470 = vmax.f32 %v1468, %v1469
  %v1471 = vsel %vm1367, %v1281, -inf
  %v1472 = vmax.f32 %v1470, %v1471
  %v1473 = vsel %vm1367, %v852, -inf
  %v1474 = vsel %vm1367, %v996, -inf
  %v1475 = vmax.f32 %v1473, %v1474
  %v1476 = vsel %vm1367, %v1140, -inf
  %v1477 = vmax.f32 %v1475, %v1476
  %v1478 = vsel %vm1367, %v1284, -inf
  %v1479 = vmax.f32 %v1477, %v1478
  %v1480 = vsel %vm1367, %v857, -inf
  %v1481 = vsel %vm1367, %v1001, -inf
  %v1482 = vmax.f32 %v1480, %v1481
  %v1483 = vsel %vm1367, %v1145, -inf
  %v1484 = vmax.f32 %v1482, %v1483
  %v1485 = vsel %vm1367, %v1289, -inf
  %v1486 = vmax.f32 %v1484, %v1485
  %v1487 = vsel %vm1367, %v860, -inf
  %v1488 = vsel %vm1367, %v1004, -inf
  %v1489 = vmax.f32 %v1487, %v1488
  %v1490 = vsel %vm1367, %v1148, -inf
  %v1491 = vmax.f32 %v1489, %v1490
  %v1492 = vsel %vm1367, %v1292, -inf
  %v1493 = vmax.f32 %v1491, %v1492
  %v1494 = vsel %vm1367, %v865, -inf
  %v1495 = vsel %vm1367, %v1009, -inf
  %v1496 = vmax.f32 %v1494, %v1495
  %v1497 = vsel %vm1367, %v1153, -inf
  %v1498 = vmax.f32 %v1496, %v1497
  %v1499 = vsel %vm1367, %v1297, -inf
  %v1500 = vmax.f32 %v1498, %v1499
  %v1501 = vsel %vm1367, %v868, -inf
  %v1502 = vsel %vm1367, %v1012, -inf
  %v1503 = vmax.f32 %v1501, %v1502
  %v1504 = vsel %vm1367, %v1156, -inf
  %v1505 = vmax.f32 %v1503, %v1504
  %v1506 = vsel %vm1367, %v1300, -inf
  %v1507 = vmax.f32 %v1505, %v1506
  %v1508 = vsel %vm1367, %v873, -inf
  %v1509 = vsel %vm1367, %v1017, -inf
  %v1510 = vmax.f32 %v1508, %v1509
  %v1511 = vsel %vm1367, %v1161, -inf
  %v1512 = vmax.f32 %v1510, %v1511
  %v1513 = vsel %vm1367, %v1305, -inf
  %v1514 = vmax.f32 %v1512, %v1513
  %v1515 = vsel %vm1367, %v876, -inf
  %v1516 = vsel %vm1367, %v1020, -inf
  %v1517 = vmax.f32 %v1515, %v1516
  %v1518 = vsel %vm1367, %v1164, -inf
  %v1519 = vmax.f32 %v1517, %v1518
  %v1520 = vsel %vm1367, %v1308, -inf
  %v1521 = vmax.f32 %v1519, %v1520
  %v1522 = vsel %vm1367, %v881, -inf
  %v1523 = vsel %vm1367, %v1025, -inf
  %v1524 = vmax.f32 %v1522, %v1523
  %v1525 = vsel %vm1367, %v1169, -inf
  %v1526 = vmax.f32 %v1524, %v1525
  %v1527 = vsel %vm1367, %v1313, -inf
  %v1528 = vmax.f32 %v1526, %v1527
  %v1529 = vsel %vm1367, %v884, -inf
  %v1530 = vsel %vm1367, %v1028, -inf
  %v1531 = vmax.f32 %v1529, %v1530
  %v1532 = vsel %vm1367, %v1172, -inf
  %v1533 = vmax.f32 %v1531, %v1532
  %v1534 = vsel %vm1367, %v1316, -inf
  %v1535 = vmax.f32 %v1533, %v1534
  %v1536 = vsel %vm1367, %v889, -inf
  %v1537 = vsel %vm1367, %v1033, -inf
  %v1538 = vmax.f32 %v1536, %v1537
  %v1539 = vsel %vm1367, %v1177, -inf
  %v1540 = vmax.f32 %v1538, %v1539
  %v1541 = vsel %vm1367, %v1321, -inf
  %v1542 = vmax.f32 %v1540, %v1541
  %v1543 = vsel %vm1367, %v892, -inf
  %v1544 = vsel %vm1367, %v1036, -inf
  %v1545 = vmax.f32 %v1543, %v1544
  %v1546 = vsel %vm1367, %v1180, -inf
  %v1547 = vmax.f32 %v1545, %v1546
  %v1548 = vsel %vm1367, %v1324, -inf
  %v1549 = vmax.f32 %v1547, %v1548
  %v1550 = vsel %vm1367, %v897, -inf
  %v1551 = vsel %vm1367, %v1041, -inf
  %v1552 = vmax.f32 %v1550, %v1551
  %v1553 = vsel %vm1367, %v1185, -inf
  %v1554 = vmax.f32 %v1552, %v1553
  %v1555 = vsel %vm1367, %v1329, -inf
  %v1556 = vmax.f32 %v1554, %v1555
  %v1557 = vsel %vm1367, %v900, -inf
  %v1558 = vsel %vm1367, %v1044, -inf
  %v1559 = vmax.f32 %v1557, %v1558
  %v1560 = vsel %vm1367, %v1188, -inf
  %v1561 = vmax.f32 %v1559, %v1560
  %v1562 = vsel %vm1367, %v1332, -inf
  %v1563 = vmax.f32 %v1561, %v1562
  %v1564 = vsel %vm1367, %v905, -inf
  %v1565 = vsel %vm1367, %v1049, -inf
  %v1566 = vmax.f32 %v1564, %v1565
  %v1567 = vsel %vm1367, %v1193, -inf
  %v1568 = vmax.f32 %v1566, %v1567
  %v1569 = vsel %vm1367, %v1337, -inf
  %v1570 = vmax.f32 %v1568, %v1569
  %v1571 = vsel %vm1367, %v908, -inf
  %v1572 = vsel %vm1367, %v1052, -inf
  %v1573 = vmax.f32 %v1571, %v1572
  %v1574 = vsel %vm1367, %v1196, -inf
  %v1575 = vmax.f32 %v1573, %v1574
  %v1576 = vsel %vm1367, %v1340, -inf
  %v1577 = vmax.f32 %v1575, %v1576
  %v1578 = vsel %vm1367, %v913, -inf
  %v1579 = vsel %vm1367, %v1057, -inf
  %v1580 = vmax.f32 %v1578, %v1579
  %v1581 = vsel %vm1367, %v1201, -inf
  %v1582 = vmax.f32 %v1580, %v1581
  %v1583 = vsel %vm1367, %v1345, -inf
  %v1584 = vmax.f32 %v1582, %v1583
  %v1585 = vsel %vm1367, %v916, -inf
  %v1586 = vsel %vm1367, %v1060, -inf
  %v1587 = vmax.f32 %v1585, %v1586
  %v1588 = vsel %vm1367, %v1204, -inf
  %v1589 = vmax.f32 %v1587, %v1588
  %v1590 = vsel %vm1367, %v1348, -inf
  %v1591 = vmax.f32 %v1589, %v1590
  %v1592 = vsel %vm1367, %v921, -inf
  %v1593 = vsel %vm1367, %v1065, -inf
  %v1594 = vmax.f32 %v1592, %v1593
  %v1595 = vsel %vm1367, %v1209, -inf
  %v1596 = vmax.f32 %v1594, %v1595
  %v1597 = vsel %vm1367, %v1353, -inf
  %v1598 = vmax.f32 %v1596, %v1597
  %v1599 = vsel %vm1367, %v924, -inf
  %v1600 = vsel %vm1367, %v1068, -inf
  %v1601 = vmax.f32 %v1599, %v1600
  %v1602 = vsel %vm1367, %v1212, -inf
  %v1603 = vmax.f32 %v1601, %v1602
  %v1604 = vsel %vm1367, %v1356, -inf
  %v1605 = vmax.f32 %v1603, %v1604
  %v1606 = vsel %vm1367, %v929, -inf
  %v1607 = vsel %vm1367, %v1073, -inf
  %v1608 = vmax.f32 %v1606, %v1607
  %v1609 = vsel %vm1367, %v1217, -inf
  %v1610 = vmax.f32 %v1608, %v1609
  %v1611 = vsel %vm1367, %v1361, -inf
  %v1612 = vmax.f32 %v1610, %v1611
  %v1613 = vsel %vm1367, %v932, -inf
  %v1614 = vsel %vm1367, %v1076, -inf
  %v1615 = vmax.f32 %v1613, %v1614
  %v1616 = vsel %vm1367, %v1220, -inf
  %v1617 = vmax.f32 %v1615, %v1616
  %v1618 = vsel %vm1367, %v1364, -inf
  %v1619 = vmax.f32 %v1617, %v1618
  %v1620 = vld [vmem:[%s2] sm:$0x1]
  %v1622 = vlaneseq
  %v1623 = vshrl.u32 %v1622, 7
  %v1624 = vsub.s32 0, %v1623
  %v1625 = vrot.slane %v1620, %v1624
  %v1627 = vadd.f32 %v1374, %v1625
  %v1628 = vadd.f32 %v1381, %v1625
  %v1629 = vadd.f32 %v1388, %v1625
  %v1630 = vadd.f32 %v1395, %v1625
  %v1631 = vadd.f32 %v1402, %v1625
  %v1632 = vadd.f32 %v1409, %v1625
  %v1633 = vadd.f32 %v1416, %v1625
  %v1634 = vadd.f32 %v1423, %v1625
  %v1635 = vadd.f32 %v1430, %v1625
  %v1636 = vadd.f32 %v1437, %v1625
  %v1637 = vadd.f32 %v1444, %v1625
  %v1638 = vadd.f32 %v1451, %v1625
  %v1639 = vadd.f32 %v1458, %v1625
  %v1640 = vadd.f32 %v1465, %v1625
  %v1641 = vadd.f32 %v1472, %v1625
  %v1642 = vadd.f32 %v1479, %v1625
  %v1643 = vadd.f32 %v1486, %v1625
  %v1644 = vadd.f32 %v1493, %v1625
  %v1645 = vadd.f32 %v1500, %v1625
  %v1646 = vadd.f32 %v1507, %v1625
  %v1647 = vadd.f32 %v1514, %v1625
  %v1648 = vadd.f32 %v1521, %v1625
  %v1649 = vadd.f32 %v1528, %v1625
  %v1650 = vadd.f32 %v1535, %v1625
  %v1651 = vadd.f32 %v1542, %v1625
  %v1652 = vadd.f32 %v1549, %v1625
  %v1653 = vadd.f32 %v1556, %v1625
  %v1654 = vadd.f32 %v1563, %v1625
  %v1655 = vadd.f32 %v1570, %v1625
  %v1656 = vadd.f32 %v1577, %v1625
  %v1657 = vadd.f32 %v1584, %v1625
  %v1658 = vadd.f32 %v1591, %v1625
  %v1659 = vadd.f32 %v1598, %v1625
  %v1660 = vadd.f32 %v1605, %v1625
  %v1661 = vadd.f32 %v1612, %v1625
  %v1662 = vadd.f32 %v1619, %v1625
  %v1663 = vmax.f32 %v1627, 0.0
  %v1664 = vmax.f32 %v1628, 0.0
  %v1665 = vmax.f32 %v1629, 0.0
  %v1666 = vmax.f32 %v1630, 0.0
  %v1667 = vmax.f32 %v1631, 0.0
  %v1668 = vmax.f32 %v1632, 0.0
  %v1669 = vmax.f32 %v1633, 0.0
  %v1670 = vmax.f32 %v1634, 0.0
  %v1671 = vmax.f32 %v1635, 0.0
  %v1672 = vmax.f32 %v1636, 0.0
  %v1673 = vmax.f32 %v1637, 0.0
  %v1674 = vmax.f32 %v1638, 0.0
  %v1675 = vmax.f32 %v1639, 0.0
  %v1676 = vmax.f32 %v1640, 0.0
  %v1677 = vmax.f32 %v1641, 0.0
  %v1678 = vmax.f32 %v1642, 0.0
  %v1679 = vmax.f32 %v1643, 0.0
  %v1680 = vmax.f32 %v1644, 0.0
  %v1681 = vmax.f32 %v1645, 0.0
  %v1682 = vmax.f32 %v1646, 0.0
  %v1683 = vmax.f32 %v1647, 0.0
  %v1684 = vmax.f32 %v1648, 0.0
  %v1685 = vmax.f32 %v1649, 0.0
  %v1686 = vmax.f32 %v1650, 0.0
  %v1687 = vmax.f32 %v1651, 0.0
  %v1688 = vmax.f32 %v1652, 0.0
  %v1689 = vmax.f32 %v1653, 0.0
  %v1690 = vmax.f32 %v1654, 0.0
  %v1691 = vmax.f32 %v1655, 0.0
  %v1692 = vmax.f32 %v1656, 0.0
  %v1693 = vmax.f32 %v1657, 0.0
  %v1694 = vmax.f32 %v1658, 0.0
  %v1695 = vmax.f32 %v1659, 0.0
  %v1696 = vmax.f32 %v1660, 0.0
  %v1697 = vmax.f32 %v1661, 0.0
  %v1698 = vmax.f32 %v1662, 0.0
  %1699 = vst.msk [vmem:[%s3] sm:$0xff] %vm1367, %v1663
  %1700 = vst.msk [vmem:[%s3 + $0x8] sm:$0xff] %vm1367, %v1664
  %1701 = vst.msk [vmem:[%s3 + $0x10] sm:$0xff] %vm1367, %v1665
  %1702 = vst.msk [vmem:[%s3 + $0x18] sm:$0xff] %vm1367, %v1666
  %1703 = vst.msk [vmem:[%s3 + $0x20] sm:$0xff] %vm1367, %v1667
  %1704 = vst.msk [vmem:[%s3 + $0x28] sm:$0xff] %vm1367, %v1668
  %1705 = vst.msk [vmem:[%s3 + $0x30] sm:$0xff] %vm1367, %v1669
  %1706 = vst.msk [vmem:[%s3 + $0x38] sm:$0xff] %vm1367, %v1670
  %1707 = vst.msk [vmem:[%s3 + $0x40] sm:$0xff] %vm1367, %v1671
  %1708 = vst.msk [vmem:[%s3 + $0x48] sm:$0xff] %vm1367, %v1672
  %1709 = vst.msk [vmem:[%s3 + $0x50] sm:$0xff] %vm1367, %v1673
  %1710 = vst.msk [vmem:[%s3 + $0x58] sm:$0xff] %vm1367, %v1674
  %1711 = vst.msk [vmem:[%s3 + $0x60] sm:$0xff] %vm1367, %v1675
  %1712 = vst.msk [vmem:[%s3 + $0x68] sm:$0xff] %vm1367, %v1676
  %1713 = vst.msk [vmem:[%s3 + $0x70] sm:$0xff] %vm1367, %v1677
  %1714 = vst.msk [vmem:[%s3 + $0x78] sm:$0xff] %vm1367, %v1678
  %1715 = vst.msk [vmem:[%s3 + $0x80] sm:$0xff] %vm1367, %v1679
  %1716 = vst.msk [vmem:[%s3 + $0x88] sm:$0xff] %vm1367, %v1680
  %1717 = vst.msk [vmem:[%s3 + $0x90] sm:$0xff] %vm1367, %v1681
  %1718 = vst.msk [vmem:[%s3 + $0x98] sm:$0xff] %vm1367, %v1682
  %1719 = vst.msk [vmem:[%s3 + $0xa0] sm:$0xff] %vm1367, %v1683
  %1720 = vst.msk [vmem:[%s3 + $0xa8] sm:$0xff] %vm1367, %v1684
  %1721 = vst.msk [vmem:[%s3 + $0xb0] sm:$0xff] %vm1367, %v1685
  %1722 = vst.msk [vmem:[%s3 + $0xb8] sm:$0xff] %vm1367, %v1686
  %1723 = vst.msk [vmem:[%s3 + $0xc0] sm:$0xff] %vm1367, %v1687
  %1724 = vst.msk [vmem:[%s3 + $0xc8] sm:$0xff] %vm1367, %v1688
  %1725 = vst.msk [vmem:[%s3 + $0xd0] sm:$0xff] %vm1367, %v1689
  %1726 = vst.msk [vmem:[%s3 + $0xd8] sm:$0xff] %vm1367, %v1690
  %1727 = vst.msk [vmem:[%s3 + $0xe0] sm:$0xff] %vm1367, %v1691
  %1728 = vst.msk [vmem:[%s3 + $0xe8] sm:$0xff] %vm1367, %v1692
  %1729 = vst.msk [vmem:[%s3 + $0xf0] sm:$0xff] %vm1367, %v1693
  %1730 = vst.msk [vmem:[%s3 + $0xf8] sm:$0xff] %vm1367, %v1694
  %1731 = vst.msk [vmem:[%s3 + $0x100] sm:$0xff] %vm1367, %v1695
  %1732 = vst.msk [vmem:[%s3 + $0x108] sm:$0xff] %vm1367, %v1696
  %1733 = vst.msk [vmem:[%s3 + $0x110] sm:$0xff] %vm1367, %v1697
  %1734 = vst.msk [vmem:[%s3 + $0x118] sm:$0xff] %vm1367, %v1698
  // Predicated region
  $region14: #{cnn_forward.2} parent=0 // pred_check
    _
  $region15: #{cnn_forward.2} parent=0 // pred_check_branch
    %1736 = sbr.rel (0) target = $region17
  $region16: #{cnn_forward.2} parent=0 // pred_region
    _
  $region17: #{cnn_forward.2} parent=0 // pred_fallthru
    _
  // Predicated region
  $region18: #{cnn_forward.2} parent=0 // pred_check
    _
  $region19: #{cnn_forward.2} parent=0 // pred_check_branch
    %1738 = sbr.rel (0) target = $region21
  $region20: #{cnn_forward.2} parent=0 // pred_region
    _
  $region21: #{cnn_forward.2} parent=0 // pred_fallthru
    _

// kernel: cnn_forward.3
$region0: #{cnn_forward.3}
  #allocation0 [shape = 'u32[]', space=smem, size = 0x4, offset = 0x4, fixed_abs, tag = 'smem constant byte address 0x4 - core index']
  #allocation1 [shape = 'u32[144,128]{1,0:T(1,128)}', space=vmem, size = 0x12000, scoped, tag = 'internal scratch']
  #allocation2 [shape = 'f32[8,320]{1,0:T(8,128)}', space=vmem, size = 0x3000, scoped, tag = 'scratch operand']
  %s0 = inlined_call_operand.vmem [shape: bf16[4,128,250], index: 0, kind: input, shape index: {}]
  %s1 = inlined_call_operand.vmem [shape: bf16[250,20], index: 1, kind: input, shape index: {}]
  %s2 = inlined_call_operand.vmem [shape: f32[1,20], index: 2, kind: input, shape index: {}]
  %s3 = inlined_call_operand.vmem [shape: f32[320,100], index: 3, kind: input, shape index: {}]
  %s4 = inlined_call_operand.vmem [shape: f32[1,100], index: 4, kind: input, shape index: {}]
  %s5 = inlined_call_operand.vmem [shape: f32[100,10], index: 5, kind: input, shape index: {}]
  %s6 = inlined_call_operand.vmem [shape: f32[1,10], index: 6, kind: input, shape index: {}]
  %s7 = inlined_call_operand.vmem [shape: f32[8,10], index: 7, kind: output, shape index: {}]
  %s8 = sld [smem:[#allocation0]]
  $region38: #{cnn_forward.3} parent=0
    _
  %s10 = ssub.s32 1, %s8
  %s11 = scalar_select 0, %s10, %s8
  // Predicated region
  $region2: #{cnn_forward.3} parent=0 // pred_check
    _
  $region3: #{cnn_forward.3} parent=0 // pred_check_branch
    %13 = sbr.rel (0) target = $region5
  $region4: #{cnn_forward.3} parent=0 // pred_region
    _
  $region5: #{cnn_forward.3} parent=0 // pred_fallthru
    _
  // Predicated region
  $region6: #{cnn_forward.3} parent=0 // pred_check
    _
  $region7: #{cnn_forward.3} parent=0 // pred_check_branch
    %15 = sbr.rel (0) target = $region9
  $region8: #{cnn_forward.3} parent=0 // pred_region
    _
  $region9: #{cnn_forward.3} parent=0 // pred_fallthru
    _
  // Predicated region
  $region10: #{cnn_forward.3} parent=0 // pred_check
    _
  $region11: #{cnn_forward.3} parent=0 // pred_check_branch
    %17 = sbr.rel (0) target = $region13
  $region12: #{cnn_forward.3} parent=0 // pred_region
    _
  $region13: #{cnn_forward.3} parent=0 // pred_fallthru
    _
  // Predicated region
  $region14: #{cnn_forward.3} parent=0 // pred_check
    _
  $region15: #{cnn_forward.3} parent=0 // pred_check_branch
    %19 = sbr.rel (0) target = $region17
  $region16: #{cnn_forward.3} parent=0 // pred_region
    _
  $region17: #{cnn_forward.3} parent=0 // pred_fallthru
    _
  // Predicated region
  $region18: #{cnn_forward.3} parent=0 // pred_check
    _
  $region19: #{cnn_forward.3} parent=0 // pred_check_branch
    %21 = sbr.rel (0) target = $region21
  $region20: #{cnn_forward.3} parent=0 // pred_region
    _
  $region21: #{cnn_forward.3} parent=0 // pred_fallthru
    _
  // Predicated region
  $region22: #{cnn_forward.3} parent=0 // pred_check
    _
  $region23: #{cnn_forward.3} parent=0 // pred_check_branch
    %23 = sbr.rel (0) target = $region25
  $region24: #{cnn_forward.3} parent=0 // pred_region
    _
  $region25: #{cnn_forward.3} parent=0 // pred_fallthru
    _
  // Predicated region
  $region26: #{cnn_forward.3} parent=0 // pred_check
    _
  $region27: #{cnn_forward.3} parent=0 // pred_check_branch
    %25 = sbr.rel (0) target = $region29
  $region28: #{cnn_forward.3} parent=0 // pred_region
    _
  $region29: #{cnn_forward.3} parent=0 // pred_fallthru
    _
  %v27 = vld [vmem:[%s0] sm:$0xff]
  %v28 = vld [vmem:[%s0 + $0x8] sm:$0xff]
  %v29 = vld [vmem:[%s0 + $0x10] sm:$0xff]
  %v30 = vld [vmem:[%s0 + $0x18] sm:$0xff]
  %v31 = vld [vmem:[%s0 + $0x20] sm:$0xff]
  %v32 = vld [vmem:[%s0 + $0x28] sm:$0xff]
  %v33 = vld [vmem:[%s0 + $0x30] sm:$0xff]
  %v34 = vld [vmem:[%s0 + $0x38] sm:$0xff]
  %v35 = vld [vmem:[%s0 + $0x40] sm:$0xff]
  %v36 = vld [vmem:[%s0 + $0x48] sm:$0xff]
  %v37 = vld [vmem:[%s0 + $0x50] sm:$0xff]
  %v38 = vld [vmem:[%s0 + $0x58] sm:$0xff]
  %v39 = vld [vmem:[%s0 + $0x60] sm:$0xff]
  %v40 = vld [vmem:[%s0 + $0x68] sm:$0xff]
  %v41 = vld [vmem:[%s0 + $0x70] sm:$0xff]
  %v42 = vld [vmem:[%s0 + $0x78] sm:$0xff]
  %v43 = vld [vmem:[%s0 + $0x80] sm:$0xff]
  %v44 = vld [vmem:[%s0 + $0x88] sm:$0xff]
  %v45 = vld [vmem:[%s0 + $0x90] sm:$0xff]
  %v46 = vld [vmem:[%s0 + $0x98] sm:$0xff]
  %v47 = vld [vmem:[%s0 + $0xa0] sm:$0xff]
  %v48 = vld [vmem:[%s0 + $0xa8] sm:$0xff]
  %v49 = vld [vmem:[%s0 + $0xb0] sm:$0xff]
  %v50 = vld [vmem:[%s0 + $0xb8] sm:$0xff]
  %v51 = vld [vmem:[%s0 + $0xc0] sm:$0xff]
  %v52 = vld [vmem:[%s0 + $0xc8] sm:$0xff]
  %v53 = vld [vmem:[%s0 + $0xd0] sm:$0xff]
  %v54 = vld [vmem:[%s0 + $0xd8] sm:$0xff]
  %v55 = vld [vmem:[%s0 + $0xe0] sm:$0xff]
  %v56 = vld [vmem:[%s0 + $0xe8] sm:$0xff]
  %v57 = vld [vmem:[%s0 + $0xf0] sm:$0xff]
  %v58 = vld [vmem:[%s0 + $0xf8] sm:$0xff]
  %v59 = vld [vmem:[%s0 + $0x100] sm:$0xff]
  %v60 = vld [vmem:[%s0 + $0x108] sm:$0xff]
  %v61 = vld [vmem:[%s0 + $0x110] sm:$0xff]
  %v62 = vld [vmem:[%s0 + $0x118] sm:$0xff]
  %v63 = vld [vmem:[%s0 + $0x120] sm:$0xff]
  %v64 = vld [vmem:[%s0 + $0x128] sm:$0xff]
  %v65 = vld [vmem:[%s0 + $0x130] sm:$0xff]
  %v66 = vld [vmem:[%s0 + $0x138] sm:$0xff]
  %v67 = vld [vmem:[%s0 + $0x140] sm:$0xff]
  %v68 = vld [vmem:[%s0 + $0x148] sm:$0xff]
  %v69 = vld [vmem:[%s0 + $0x150] sm:$0xff]
  %v70 = vld [vmem:[%s0 + $0x158] sm:$0xff]
  %v71 = vld [vmem:[%s0 + $0x160] sm:$0xff]
  %v72 = vld [vmem:[%s0 + $0x168] sm:$0xff]
  %v73 = vld [vmem:[%s0 + $0x170] sm:$0xff]
  %v74 = vld [vmem:[%s0 + $0x178] sm:$0xff]
  %v75 = vld [vmem:[%s0 + $0x180] sm:$0xff]
  %v76 = vld [vmem:[%s0 + $0x188] sm:$0xff]
  %v77 = vld [vmem:[%s0 + $0x190] sm:$0xff]
  %v78 = vld [vmem:[%s0 + $0x198] sm:$0xff]
  %v79 = vld [vmem:[%s0 + $0x1a0] sm:$0xff]
  %v80 = vld [vmem:[%s0 + $0x1a8] sm:$0xff]
  %v81 = vld [vmem:[%s0 + $0x1b0] sm:$0xff]
  %v82 = vld [vmem:[%s0 + $0x1b8] sm:$0xff]
  %v83 = vld [vmem:[%s0 + $0x1c0] sm:$0xff]
  %v84 = vld [vmem:[%s0 + $0x1c8] sm:$0xff]
  %v85 = vld [vmem:[%s0 + $0x1d0] sm:$0xff]
  %v86 = vld [vmem:[%s0 + $0x1d8] sm:$0xff]
  %v87 = vld [vmem:[%s0 + $0x1e0] sm:$0xff]
  %v88 = vld [vmem:[%s0 + $0x1e8] sm:$0xff]
  %v89 = vld [vmem:[%s0 + $0x1f0] sm:$0xff]
  %v90 = vld [vmem:[%s0 + $0x1f8] sm:$0xff]
  %v91 = vld [vmem:[%s1] sm:$0xf]
  %v92 = vld [vmem:[%s1 + $0x4] sm:$0xf]
  %v93 = vld [vmem:[%s1 + $0x8] sm:$0xf]
  %v94 = vld [vmem:[%s1 + $0xc] sm:$0xf]
  %v95 = vld [vmem:[%s1 + $0x10] sm:$0xf]
  %v96 = vld [vmem:[%s1 + $0x14] sm:$0xf]
  %v97 = vld [vmem:[%s1 + $0x18] sm:$0xf]
  %v98 = vld [vmem:[%s1 + $0x1c] sm:$0xf]
  %v99 = vld [vmem:[%s1 + $0x20] sm:$0xf]
  %v100 = vld [vmem:[%s1 + $0x24] sm:$0xf]
  %v101 = vld [vmem:[%s1 + $0x28] sm:$0xf]
  %v102 = vld [vmem:[%s1 + $0x2c] sm:$0xf]
  %v103 = vld [vmem:[%s1 + $0x30] sm:$0xf]
  %v104 = vld [vmem:[%s1 + $0x34] sm:$0xf]
  %v105 = vld [vmem:[%s1 + $0x38] sm:$0xf]
  %v106 = vld [vmem:[%s1 + $0x3c] sm:$0xf]
  %v107 = vld [vmem:[%s1 + $0x40] sm:$0xf]
  %v108 = vld [vmem:[%s1 + $0x44] sm:$0xf]
  %v109 = vld [vmem:[%s1 + $0x48] sm:$0xf]
  %v110 = vld [vmem:[%s1 + $0x4c] sm:$0xf]
  %v111 = vld [vmem:[%s1 + $0x50] sm:$0xf]
  %v112 = vld [vmem:[%s1 + $0x54] sm:$0xf]
  %v113 = vld [vmem:[%s1 + $0x58] sm:$0xf]
  %v114 = vld [vmem:[%s1 + $0x5c] sm:$0xf]
  %v115 = vld [vmem:[%s1 + $0x60] sm:$0xf]
  %v116 = vld [vmem:[%s1 + $0x64] sm:$0xf]
  %v117 = vld [vmem:[%s1 + $0x68] sm:$0xf]
  %v118 = vld [vmem:[%s1 + $0x6c] sm:$0xf]
  %v119 = vld [vmem:[%s1 + $0x70] sm:$0xf]
  %v120 = vld [vmem:[%s1 + $0x74] sm:$0xf]
  %v121 = vld [vmem:[%s1 + $0x78] sm:$0xf]
  %v122 = vld [vmem:[%s1 + $0x7c] sm:$0x1]
  %v187 = vunpack.c.l.b16 %v27
  %v188 = vunpack.c.h.b16 %v27
  %v189 = vunpack.c.l.b16 %v28
  %v190 = vunpack.c.h.b16 %v28
  %v191 = vunpack.c.l.b16 %v29
  %v192 = vunpack.c.h.b16 %v29
  %v193 = vunpack.c.l.b16 %v30
  %v194 = vunpack.c.h.b16 %v30
  %v195 = vunpack.c.l.b16 %v31
  %v196 = vunpack.c.h.b16 %v31
  %v197 = vunpack.c.l.b16 %v32
  %v198 = vunpack.c.h.b16 %v32
  %v199 = vunpack.c.l.b16 %v33
  %v200 = vunpack.c.h.b16 %v33
  %v201 = vunpack.c.l.b16 %v34
  %v202 = vunpack.c.h.b16 %v34
  %v203 = vunpack.c.l.b16 %v35
  %v204 = vunpack.c.h.b16 %v35
  %v205 = vunpack.c.l.b16 %v36
  %v206 = vunpack.c.h.b16 %v36
  %v207 = vunpack.c.l.b16 %v37
  %v208 = vunpack.c.h.b16 %v37
  %v209 = vunpack.c.l.b16 %v38
  %v210 = vunpack.c.h.b16 %v38
  %v211 = vunpack.c.l.b16 %v39
  %v212 = vunpack.c.h.b16 %v39
  %v213 = vunpack.c.l.b16 %v40
  %v214 = vunpack.c.h.b16 %v40
  %v215 = vunpack.c.l.b16 %v41
  %v216 = vunpack.c.h.b16 %v41
  %v217 = vunpack.c.l.b16 %v42
  %v218 = vunpack.c.h.b16 %v42
  %v219 = vunpack.c.l.b16 %v43
  %v220 = vunpack.c.h.b16 %v43
  %v221 = vunpack.c.l.b16 %v44
  %v222 = vunpack.c.h.b16 %v44
  %v223 = vunpack.c.l.b16 %v45
  %v224 = vunpack.c.h.b16 %v45
  %v225 = vunpack.c.l.b16 %v46
  %v226 = vunpack.c.h.b16 %v46
  %v227 = vunpack.c.l.b16 %v47
  %v228 = vunpack.c.h.b16 %v47
  %v229 = vunpack.c.l.b16 %v48
  %v230 = vunpack.c.h.b16 %v48
  %v231 = vunpack.c.l.b16 %v49
  %v232 = vunpack.c.h.b16 %v49
  %v233 = vunpack.c.l.b16 %v50
  %v234 = vunpack.c.h.b16 %v50
  %v235 = vunpack.c.l.b16 %v51
  %v236 = vunpack.c.h.b16 %v51
  %v237 = vunpack.c.l.b16 %v52
  %v238 = vunpack.c.h.b16 %v52
  %v239 = vunpack.c.l.b16 %v53
  %v240 = vunpack.c.h.b16 %v53
  %v241 = vunpack.c.l.b16 %v54
  %v242 = vunpack.c.h.b16 %v54
  %v243 = vunpack.c.l.b16 %v55
  %v244 = vunpack.c.h.b16 %v55
  %v245 = vunpack.c.l.b16 %v56
  %v246 = vunpack.c.h.b16 %v56
  %v247 = vunpack.c.l.b16 %v57
  %v248 = vunpack.c.h.b16 %v57
  %v249 = vunpack.c.l.b16 %v58
  %v250 = vunpack.c.h.b16 %v58
  %v251 = vunpack.c.l.b16 %v59
  %v252 = vunpack.c.h.b16 %v59
  %v253 = vunpack.c.l.b16 %v60
  %v254 = vunpack.c.h.b16 %v60
  %v255 = vunpack.c.l.b16 %v61
  %v256 = vunpack.c.h.b16 %v61
  %v257 = vunpack.c.l.b16 %v62
  %v258 = vunpack.c.h.b16 %v62
  %v259 = vunpack.c.l.b16 %v63
  %v260 = vunpack.c.h.b16 %v63
  %v261 = vunpack.c.l.b16 %v64
  %v262 = vunpack.c.h.b16 %v64
  %v263 = vunpack.c.l.b16 %v65
  %v264 = vunpack.c.h.b16 %v65
  %v265 = vunpack.c.l.b16 %v66
  %v266 = vunpack.c.h.b16 %v66
  %v267 = vunpack.c.l.b16 %v67
  %v268 = vunpack.c.h.b16 %v67
  %v269 = vunpack.c.l.b16 %v68
  %v270 = vunpack.c.h.b16 %v68
  %v271 = vunpack.c.l.b16 %v69
  %v272 = vunpack.c.h.b16 %v69
  %v273 = vunpack.c.l.b16 %v70
  %v274 = vunpack.c.h.b16 %v70
  %v275 = vunpack.c.l.b16 %v71
  %v276 = vunpack.c.h.b16 %v71
  %v277 = vunpack.c.l.b16 %v72
  %v278 = vunpack.c.h.b16 %v72
  %v279 = vunpack.c.l.b16 %v73
  %v280 = vunpack.c.h.b16 %v73
  %v281 = vunpack.c.l.b16 %v74
  %v282 = vunpack.c.h.b16 %v74
  %v283 = vunpack.c.l.b16 %v75
  %v284 = vunpack.c.h.b16 %v75
  %v285 = vunpack.c.l.b16 %v76
  %v286 = vunpack.c.h.b16 %v76
  %v287 = vunpack.c.l.b16 %v77
  %v288 = vunpack.c.h.b16 %v77
  %v289 = vunpack.c.l.b16 %v78
  %v290 = vunpack.c.h.b16 %v78
  %v291 = vunpack.c.l.b16 %v79
  %v292 = vunpack.c.h.b16 %v79
  %v293 = vunpack.c.l.b16 %v80
  %v294 = vunpack.c.h.b16 %v80
  %v295 = vunpack.c.l.b16 %v81
  %v296 = vunpack.c.h.b16 %v81
  %v297 = vunpack.c.l.b16 %v82
  %v298 = vunpack.c.h.b16 %v82
  %v299 = vunpack.c.l.b16 %v83
  %v300 = vunpack.c.h.b16 %v83
  %v301 = vunpack.c.l.b16 %v84
  %v302 = vunpack.c.h.b16 %v84
  %v303 = vunpack.c.l.b16 %v85
  %v304 = vunpack.c.h.b16 %v85
  %v305 = vunpack.c.l.b16 %v86
  %v306 = vunpack.c.h.b16 %v86
  %v307 = vunpack.c.l.b16 %v87
  %v308 = vunpack.c.h.b16 %v87
  %v309 = vunpack.c.l.b16 %v88
  %v310 = vunpack.c.h.b16 %v88
  %v311 = vunpack.c.l.b16 %v89
  %v312 = vunpack.c.h.b16 %v89
  %v313 = vunpack.c.l.b16 %v90
  %v314 = vunpack.c.h.b16 %v90
  %v315 = vpack.c.b16 %v189, %v187
  %v316 = vpack.c.b16 %v190, %v188
  %v317 = vpack.c.b16 %v193, %v191
  %v318 = vpack.c.b16 %v194, %v192
  %v319 = vpack.c.b16 %v197, %v195
  %v320 = vpack.c.b16 %v198, %v196
  %v321 = vpack.c.b16 %v201, %v199
  %v322 = vpack.c.b16 %v202, %v200
  %v323 = vpack.c.b16 %v205, %v203
  %v324 = vpack.c.b16 %v206, %v204
  %v325 = vpack.c.b16 %v209, %v207
  %v326 = vpack.c.b16 %v210, %v208
  %v327 = vpack.c.b16 %v213, %v211
  %v328 = vpack.c.b16 %v214, %v212
  %v329 = vpack.c.b16 %v217, %v215
  %v330 = vpack.c.b16 %v218, %v216
  %v331 = vpack.c.b16 %v221, %v219
  %v332 = vpack.c.b16 %v222, %v220
  %v333 = vpack.c.b16 %v225, %v223
  %v334 = vpack.c.b16 %v226, %v224
  %v335 = vpack.c.b16 %v229, %v227
  %v336 = vpack.c.b16 %v230, %v228
  %v337 = vpack.c.b16 %v233, %v231
  %v338 = vpack.c.b16 %v234, %v232
  %v339 = vpack.c.b16 %v237, %v235
  %v340 = vpack.c.b16 %v238, %v236
  %v341 = vpack.c.b16 %v241, %v239
  %v342 = vpack.c.b16 %v242, %v240
  %v343 = vpack.c.b16 %v245, %v243
  %v344 = vpack.c.b16 %v246, %v244
  %v345 = vpack.c.b16 %v249, %v247
  %v346 = vpack.c.b16 %v250, %v248
  %v347 = vpack.c.b16 %v253, %v251
  %v348 = vpack.c.b16 %v254, %v252
  %v349 = vpack.c.b16 %v257, %v255
  %v350 = vpack.c.b16 %v258, %v256
  %v351 = vpack.c.b16 %v261, %v259
  %v352 = vpack.c.b16 %v262, %v260
  %v353 = vpack.c.b16 %v265, %v263
  %v354 = vpack.c.b16 %v266, %v264
  %v355 = vpack.c.b16 %v269, %v267
  %v356 = vpack.c.b16 %v270, %v268
  %v357 = vpack.c.b16 %v273, %v271
  %v358 = vpack.c.b16 %v274, %v272
  %v359 = vpack.c.b16 %v277, %v275
  %v360 = vpack.c.b16 %v278, %v276
  %v361 = vpack.c.b16 %v281, %v279
  %v362 = vpack.c.b16 %v282, %v280
  %v363 = vpack.c.b16 %v285, %v283
  %v364 = vpack.c.b16 %v286, %v284
  %v365 = vpack.c.b16 %v289, %v287
  %v366 = vpack.c.b16 %v290, %v288
  %v367 = vpack.c.b16 %v293, %v291
  %v368 = vpack.c.b16 %v294, %v292
  %v369 = vpack.c.b16 %v297, %v295
  %v370 = vpack.c.b16 %v298, %v296
  %v371 = vpack.c.b16 %v301, %v299
  %v372 = vpack.c.b16 %v302, %v300
  %v373 = vpack.c.b16 %v305, %v303
  %v374 = vpack.c.b16 %v306, %v304
  %v375 = vpack.c.b16 %v309, %v307
  %v376 = vpack.c.b16 %v310, %v308
  %v377 = vpack.c.b16 %v313, %v311
  %v378 = vpack.c.b16 %v314, %v312
  %v443 = vunpack.c.l.b16 %v91
  %v444 = vunpack.c.l.b16 %v92
  %v445 = vunpack.c.l.b16 %v93
  %v446 = vunpack.c.l.b16 %v94
  %v447 = vunpack.c.l.b16 %v95
  %v448 = vunpack.c.l.b16 %v96
  %v449 = vunpack.c.l.b16 %v97
  %v450 = vunpack.c.l.b16 %v98
  %v451 = vunpack.c.l.b16 %v99
  %v452 = vunpack.c.l.b16 %v100
  %v453 = vunpack.c.l.b16 %v101
  %v454 = vunpack.c.l.b16 %v102
  %v455 = vunpack.c.l.b16 %v103
  %v456 = vunpack.c.l.b16 %v104
  %v457 = vunpack.c.l.b16 %v105
  %v458 = vunpack.c.l.b16 %v106
  %v459 = vunpack.c.l.b16 %v107
  %v460 = vunpack.c.l.b16 %v108
  %v461 = vunpack.c.l.b16 %v109
  %v462 = vunpack.c.l.b16 %v110
  %v463 = vunpack.c.l.b16 %v111
  %v464 = vunpack.c.l.b16 %v112
  %v465 = vunpack.c.l.b16 %v113
  %v466 = vunpack.c.l.b16 %v114
  %v467 = vunpack.c.l.b16 %v115
  %v468 = vunpack.c.l.b16 %v116
  %v469 = vunpack.c.l.b16 %v117
  %v470 = vunpack.c.l.b16 %v118
  %v471 = vunpack.c.l.b16 %v119
  %v472 = vunpack.c.l.b16 %v120
  %v473 = vunpack.c.l.b16 %v121
  %v474 = vunpack.c.l.b16 %v122
  %v475 = vpack.c.b16 %v444, %v443
  %v476 = vpack.c.b16 %v446, %v445
  %v477 = vpack.c.b16 %v448, %v447
  %v478 = vpack.c.b16 %v450, %v449
  %v479 = vpack.c.b16 %v452, %v451
  %v480 = vpack.c.b16 %v454, %v453
  %v481 = vpack.c.b16 %v456, %v455
  %v482 = vpack.c.b16 %v458, %v457
  %v483 = vpack.c.b16 %v460, %v459
  %v484 = vpack.c.b16 %v462, %v461
  %v485 = vpack.c.b16 %v464, %v463
  %v486 = vpack.c.b16 %v466, %v465
  %v487 = vpack.c.b16 %v468, %v467
  %v488 = vpack.c.b16 %v470, %v469
  %v489 = vpack.c.b16 %v472, %v471
  %v490 = vpack.c.b16 %v474, %v473
  %vm506 = vcmask 998400
  %v508 = vsel %vm506, %v316, 0
  %v511 = vsel %vm506, %v318, 0
  %v514 = vsel %vm506, %v320, 0
  %v517 = vsel %vm506, %v322, 0
  %v520 = vsel %vm506, %v324, 0
  %v523 = vsel %vm506, %v326, 0
  %v526 = vsel %vm506, %v328, 0
  %v529 = vsel %vm506, %v330, 0
  %v532 = vsel %vm506, %v332, 0
  %v535 = vsel %vm506, %v334, 0
  %v538 = vsel %vm506, %v336, 0
  %v541 = vsel %vm506, %v338, 0
  %v544 = vsel %vm506, %v340, 0
  %v547 = vsel %vm506, %v342, 0
  %v550 = vsel %vm506, %v344, 0
  %v553 = vsel %vm506, %v346, 0
  %v556 = vsel %vm506, %v348, 0
  %v559 = vsel %vm506, %v350, 0
  %v562 = vsel %vm506, %v352, 0
  %v565 = vsel %vm506, %v354, 0
  %v568 = vsel %vm506, %v356, 0
  %v571 = vsel %vm506, %v358, 0
  %v574 = vsel %vm506, %v360, 0
  %v577 = vsel %vm506, %v362, 0
  %v580 = vsel %vm506, %v364, 0
  %v583 = vsel %vm506, %v366, 0
  %v586 = vsel %vm506, %v368, 0
  %v589 = vsel %vm506, %v370, 0
  %v592 = vsel %vm506, %v372, 0
  %v595 = vsel %vm506, %v374, 0
  %v598 = vsel %vm506, %v376, 0
  %v601 = vsel %vm506, %v378, 0
  %vm603 = vcmask 1044480
  %v605 = vsel %vm603, %v490, 0
  %607 = vmatprep.subr.bf16.mxu0 0
  %608 = vmatpush1.bf16.msra.mxu0 %v475
  %609 = vmatprep.subr.bf16.mxu0 0
  %610 = vmatpush1.bf16.msra.mxu0 %v476
  %611 = vmatprep.subr.bf16.mxu0 0
  %612 = vmatpush1.bf16.msra.mxu0 %v477
  %613 = vmatprep.subr.bf16.mxu0 0
  %614 = vmatpush1.bf16.msra.mxu0 %v478
  %615 = vmatprep.subr.bf16.mxu0 0
  %616 = vmatpush1.bf16.msra.mxu0 %v479
  %617 = vmatprep.subr.bf16.mxu0 0
  %618 = vmatpush1.bf16.msra.mxu0 %v480
  %619 = vmatprep.subr.bf16.mxu0 0
  %620 = vmatpush1.bf16.msra.mxu0 %v481
  %621 = vmatprep.subr.bf16.mxu0 0
  %622 = vmatpush1.bf16.msra.mxu0 %v482
  %623 = vmatprep.subr.bf16.mxu0 0
  %624 = vmatpush1.bf16.msra.mxu0 %v483
  %625 = vmatprep.subr.bf16.mxu0 0
  %626 = vmatpush1.bf16.msra.mxu0 %v484
  %627 = vmatprep.subr.bf16.mxu0 0
  %628 = vmatpush1.bf16.msra.mxu0 %v485
  %629 = vmatprep.subr.bf16.mxu0 0
  %630 = vmatpush1.bf16.msra.mxu0 %v486
  %631 = vmatprep.subr.bf16.mxu0 0
  %632 = vmatpush1.bf16.msra.mxu0 %v487
  %633 = vmatprep.subr.bf16.mxu0 0
  %634 = vmatpush1.bf16.msra.mxu0 %v488
  %635 = vmatprep.subr.bf16.mxu0 0
  %636 = vmatpush1.bf16.msra.mxu0 %v489
  %637 = vmatprep.subr.bf16.mxu0 0
  %638 = vmatpush1.bf16.msra.mxu0 %v605
  %639 = vmatprep.mubr.bf16.mxu0 %v508
  %640 = vmatmul.mubr.bf16.gmra.mrb[0].mxu0 %v315
  %v641 = vpop.f32.mrb[0].mxu0
  %v642 = vadd.f32 0.0, %v641
  %v643 = vpop.f32.mrb[0].mxu0
  %v644 = vpop.f32.mrb[0].mxu0
  %v645 = vadd.f32 0.0, %v644
  %v646 = vpop.f32.mrb[0].mxu0
  %647 = vmatprep.mubr.bf16.mxu0 %v511
  %648 = vmatmul.mubr.bf16.gmra.mrb[0].mxu0 %v317
  %v649 = vpop.f32.mrb[0].mxu0
  %v650 = vadd.f32 0.0, %v649
  %v651 = vpop.f32.mrb[0].mxu0
  %v652 = vpop.f32.mrb[0].mxu0
  %v653 = vadd.f32 0.0, %v652
  %v654 = vpop.f32.mrb[0].mxu0
  %655 = vmatprep.mubr.bf16.mxu0 %v514
  %656 = vmatmul.mubr.bf16.gmra.mrb[0].mxu0 %v319
  %v657 = vpop.f32.mrb[0].mxu0
  %v658 = vadd.f32 0.0, %v657
  %v659 = vpop.f32.mrb[0].mxu0
  %v660 = vpop.f32.mrb[0].mxu0
  %v661 = vadd.f32 0.0, %v660
  %v662 = vpop.f32.mrb[0].mxu0
  %663 = vmatprep.mubr.bf16.mxu0 %v517
  %664 = vmatmul.mubr.bf16.gmra.mrb[0].mxu0 %v321
  %v665 = vpop.f32.mrb[0].mxu0
  %v666 = vadd.f32 0.0, %v665
  %v667 = vpop.f32.mrb[0].mxu0
  %v668 = vpop.f32.mrb[0].mxu0
  %v669 = vadd.f32 0.0, %v668
  %v670 = vpop.f32.mrb[0].mxu0
  %671 = vmatprep.mubr.bf16.mxu0 %v520
  %672 = vmatmul.mubr.bf16.gmra.mrb[0].mxu0 %v323
  %v673 = vpop.f32.mrb[0].mxu0
  %v674 = vadd.f32 0.0, %v673
  %v675 = vpop.f32.mrb[0].mxu0
  %v676 = vpop.f32.mrb[0].mxu0
  %v677 = vadd.f32 0.0, %v676
  %v678 = vpop.f32.mrb[0].mxu0
  %679 = vmatprep.mubr.bf16.mxu0 %v523
  %680 = vmatmul.mubr.bf16.gmra.mrb[0].mxu0 %v325
  %v681 = vpop.f32.mrb[0].mxu0
  %v682 = vadd.f32 0.0, %v681
  %v683 = vpop.f32.mrb[0].mxu0
  %v684 = vpop.f32.mrb[0].mxu0
  %v685 = vadd.f32 0.0, %v684
  %v686 = vpop.f32.mrb[0].mxu0
  %687 = vmatprep.mubr.bf16.mxu0 %v526
  %688 = vmatmul.mubr.bf16.gmra.mrb[0].mxu0 %v327
  %v689 = vpop.f32.mrb[0].mxu0
  %v690 = vadd.f32 0.0, %v689
  %v691 = vpop.f32.mrb[0].mxu0
  %v692 = vpop.f32.mrb[0].mxu0
  %v693 = vadd.f32 0.0, %v692
  %v694 = vpop.f32.mrb[0].mxu0
  %695 = vmatprep.mubr.bf16.mxu0 %v529
  %696 = vmatmul.mubr.bf16.gmra.mrb[0].mxu0 %v329
  %v697 = vpop.f32.mrb[0].mxu0
  %v698 = vadd.f32 0.0, %v697
  %v699 = vpop.f32.mrb[0].mxu0
  %v700 = vpop.f32.mrb[0].mxu0
  %v701 = vadd.f32 0.0, %v700
  %v702 = vpop.f32.mrb[0].mxu0
  %703 = vmatprep.mubr.bf16.mxu0 %v532
  %704 = vmatmul.mubr.bf16.gmra.mrb[0].mxu0 %v331
  %v705 = vpop.f32.mrb[0].mxu0
  %v706 = vadd.f32 0.0, %v705
  %v707 = vpop.f32.mrb[0].mxu0
  %v708 = vpop.f32.mrb[0].mxu0
  %v709 = vadd.f32 0.0, %v708
  %v710 = vpop.f32.mrb[0].mxu0
  %711 = vmatprep.mubr.bf16.mxu0 %v535
  %712 = vmatmul.mubr.bf16.gmra.mrb[0].mxu0 %v333
  %v713 = vpop.f32.mrb[0].mxu0
  %v714 = vadd.f32 0.0, %v713
  %v715 = vpop.f32.mrb[0].mxu0
  %v716 = vpop.f32.mrb[0].mxu0
  %v717 = vadd.f32 0.0, %v716
  %v718 = vpop.f32.mrb[0].mxu0
  %719 = vmatprep.mubr.bf16.mxu0 %v538
  %720 = vmatmul.mubr.bf16.gmra.mrb[0].mxu0 %v335
  %v721 = vpop.f32.mrb[0].mxu0
  %v722 = vadd.f32 0.0, %v721
  %v723 = vpop.f32.mrb[0].mxu0
  %v724 = vpop.f32.mrb[0].mxu0
  %v725 = vadd.f32 0.0, %v724
  %v726 = vpop.f32.mrb[0].mxu0
  %727 = vmatprep.mubr.bf16.mxu0 %v541
  %728 = vmatmul.mubr.bf16.gmra.mrb[0].mxu0 %v337
  %v729 = vpop.f32.mrb[0].mxu0
  %v730 = vadd.f32 0.0, %v729
  %v731 = vpop.f32.mrb[0].mxu0
  %v732 = vpop.f32.mrb[0].mxu0
  %v733 = vadd.f32 0.0, %v732
  %v734 = vpop.f32.mrb[0].mxu0
  %735 = vmatprep.mubr.bf16.mxu0 %v544
  %736 = vmatmul.mubr.bf16.gmra.mrb[0].mxu0 %v339
  %v737 = vpop.f32.mrb[0].mxu0
  %v738 = vadd.f32 0.0, %v737
  %v739 = vpop.f32.mrb[0].mxu0
  %v740 = vpop.f32.mrb[0].mxu0
  %v741 = vadd.f32 0.0, %v740
  %v742 = vpop.f32.mrb[0].mxu0
  %743 = vmatprep.mubr.bf16.mxu0 %v547
  %744 = vmatmul.mubr.bf16.gmra.mrb[0].mxu0 %v341
  %v745 = vpop.f32.mrb[0].mxu0
  %v746 = vadd.f32 0.0, %v745
  %v747 = vpop.f32.mrb[0].mxu0
  %v748 = vpop.f32.mrb[0].mxu0
  %v749 = vadd.f32 0.0, %v748
  %v750 = vpop.f32.mrb[0].mxu0
  %751 = vmatprep.mubr.bf16.mxu0 %v550
  %752 = vmatmul.mubr.bf16.gmra.mrb[0].mxu0 %v343
  %v753 = vpop.f32.mrb[0].mxu0
  %v754 = vadd.f32 0.0, %v753
  %v755 = vpop.f32.mrb[0].mxu0
  %v756 = vpop.f32.mrb[0].mxu0
  %v757 = vadd.f32 0.0, %v756
  %v758 = vpop.f32.mrb[0].mxu0
  %759 = vmatprep.mubr.bf16.mxu0 %v553
  %760 = vmatmul.mubr.bf16.gmra.mrb[0].mxu0 %v345
  %v761 = vpop.f32.mrb[0].mxu0
  %v762 = vadd.f32 0.0, %v761
  %v763 = vpop.f32.mrb[0].mxu0
  %v764 = vpop.f32.mrb[0].mxu0
  %v765 = vadd.f32 0.0, %v764
  %v766 = vpop.f32.mrb[0].mxu0
  %767 = vmatprep.mubr.bf16.mxu0 %v556
  %768 = vmatmul.mubr.bf16.gmra.mrb[0].mxu0 %v347
  %v769 = vpop.f32.mrb[0].mxu0
  %v770 = vadd.f32 0.0, %v769
  %v771 = vpop.f32.mrb[0].mxu0
  %v772 = vpop.f32.mrb[0].mxu0
  %v773 = vadd.f32 0.0, %v772
  %v774 = vpop.f32.mrb[0].mxu0
  %775 = vmatprep.mubr.bf16.mxu0 %v559
  %776 = vmatmul.mubr.bf16.gmra.mrb[0].mxu0 %v349
  %v777 = vpop.f32.mrb[0].mxu0
  %v778 = vadd.f32 0.0, %v777
  %v779 = vpop.f32.mrb[0].mxu0
  %v780 = vpop.f32.mrb[0].mxu0
  %v781 = vadd.f32 0.0, %v780
  %v782 = vpop.f32.mrb[0].mxu0
  %783 = vmatprep.mubr.bf16.mxu0 %v562
  %784 = vmatmul.mubr.bf16.gmra.mrb[0].mxu0 %v351
  %v785 = vpop.f32.mrb[0].mxu0
  %v786 = vadd.f32 0.0, %v785
  %v787 = vpop.f32.mrb[0].mxu0
  %v788 = vpop.f32.mrb[0].mxu0
  %v789 = vadd.f32 0.0, %v788
  %v790 = vpop.f32.mrb[0].mxu0
  %791 = vmatprep.mubr.bf16.mxu0 %v565
  %792 = vmatmul.mubr.bf16.gmra.mrb[0].mxu0 %v353
  %v793 = vpop.f32.mrb[0].mxu0
  %v794 = vadd.f32 0.0, %v793
  %v795 = vpop.f32.mrb[0].mxu0
  %v796 = vpop.f32.mrb[0].mxu0
  %v797 = vadd.f32 0.0, %v796
  %v798 = vpop.f32.mrb[0].mxu0
  %799 = vmatprep.mubr.bf16.mxu0 %v568
  %800 = vmatmul.mubr.bf16.gmra.mrb[0].mxu0 %v355
  %v801 = vpop.f32.mrb[0].mxu0
  %v802 = vadd.f32 0.0, %v801
  %v803 = vpop.f32.mrb[0].mxu0
  %v804 = vpop.f32.mrb[0].mxu0
  %v805 = vadd.f32 0.0, %v804
  %v806 = vpop.f32.mrb[0].mxu0
  %807 = vmatprep.mubr.bf16.mxu0 %v571
  %808 = vmatmul.mubr.bf16.gmra.mrb[0].mxu0 %v357
  %v809 = vpop.f32.mrb[0].mxu0
  %v810 = vadd.f32 0.0, %v809
  %v811 = vpop.f32.mrb[0].mxu0
  %v812 = vpop.f32.mrb[0].mxu0
  %v813 = vadd.f32 0.0, %v812
  %v814 = vpop.f32.mrb[0].mxu0
  %815 = vmatprep.mubr.bf16.mxu0 %v574
  %816 = vmatmul.mubr.bf16.gmra.mrb[0].mxu0 %v359
  %v817 = vpop.f32.mrb[0].mxu0
  %v818 = vadd.f32 0.0, %v817
  %v819 = vpop.f32.mrb[0].mxu0
  %v820 = vpop.f32.mrb[0].mxu0
  %v821 = vadd.f32 0.0, %v820
  %v822 = vpop.f32.mrb[0].mxu0
  %823 = vmatprep.mubr.bf16.mxu0 %v577
  %824 = vmatmul.mubr.bf16.gmra.mrb[0].mxu0 %v361
  %v825 = vpop.f32.mrb[0].mxu0
  %v826 = vadd.f32 0.0, %v825
  %v827 = vpop.f32.mrb[0].mxu0
  %v828 = vpop.f32.mrb[0].mxu0
  %v829 = vadd.f32 0.0, %v828
  %v830 = vpop.f32.mrb[0].mxu0
  %831 = vmatprep.mubr.bf16.mxu0 %v580
  %832 = vmatmul.mubr.bf16.gmra.mrb[0].mxu0 %v363
  %v833 = vpop.f32.mrb[0].mxu0
  %v834 = vadd.f32 0.0, %v833
  %v835 = vpop.f32.mrb[0].mxu0
  %v836 = vpop.f32.mrb[0].mxu0
  %v837 = vadd.f32 0.0, %v836
  %v838 = vpop.f32.mrb[0].mxu0
  %839 = vmatprep.mubr.bf16.mxu0 %v583
  %840 = vmatmul.mubr.bf16.gmra.mrb[0].mxu0 %v365
  %v841 = vpop.f32.mrb[0].mxu0
  %v842 = vadd.f32 0.0, %v841
  %v843 = vpop.f32.mrb[0].mxu0
  %v844 = vpop.f32.mrb[0].mxu0
  %v845 = vadd.f32 0.0, %v844
  %v846 = vpop.f32.mrb[0].mxu0
  %847 = vmatprep.mubr.bf16.mxu0 %v586
  %848 = vmatmul.mubr.bf16.gmra.mrb[0].mxu0 %v367
  %v849 = vpop.f32.mrb[0].mxu0
  %v850 = vadd.f32 0.0, %v849
  %v851 = vpop.f32.mrb[0].mxu0
  %v852 = vpop.f32.mrb[0].mxu0
  %v853 = vadd.f32 0.0, %v852
  %v854 = vpop.f32.mrb[0].mxu0
  %855 = vmatprep.mubr.bf16.mxu0 %v589
  %856 = vmatmul.mubr.bf16.gmra.mrb[0].mxu0 %v369
  %v857 = vpop.f32.mrb[0].mxu0
  %v858 = vadd.f32 0.0, %v857
  %v859 = vpop.f32.mrb[0].mxu0
  %v860 = vpop.f32.mrb[0].mxu0
  %v861 = vadd.f32 0.0, %v860
  %v862 = vpop.f32.mrb[0].mxu0
  %863 = vmatprep.mubr.bf16.mxu0 %v592
  %864 = vmatmul.mubr.bf16.gmra.mrb[0].mxu0 %v371
  %v865 = vpop.f32.mrb[0].mxu0
  %v866 = vadd.f32 0.0, %v865
  %v867 = vpop.f32.mrb[0].mxu0
  %v868 = vpop.f32.mrb[0].mxu0
  %v869 = vadd.f32 0.0, %v868
  %v870 = vpop.f32.mrb[0].mxu0
  %871 = vmatprep.mubr.bf16.mxu0 %v595
  %872 = vmatmul.mubr.bf16.gmra.mrb[0].mxu0 %v373
  %v873 = vpop.f32.mrb[0].mxu0
  %v874 = vadd.f32 0.0, %v873
  %v875 = vpop.f32.mrb[0].mxu0
  %v876 = vpop.f32.mrb[0].mxu0
  %v877 = vadd.f32 0.0, %v876
  %v878 = vpop.f32.mrb[0].mxu0
  %879 = vmatprep.mubr.bf16.mxu0 %v598
  %880 = vmatmul.mubr.bf16.gmra.mrb[0].mxu0 %v375
  %v881 = vpop.f32.mrb[0].mxu0
  %v882 = vadd.f32 0.0, %v881
  %v883 = vpop.f32.mrb[0].mxu0
  %v884 = vpop.f32.mrb[0].mxu0
  %v885 = vadd.f32 0.0, %v884
  %v886 = vpop.f32.mrb[0].mxu0
  %887 = vmatprep.mubr.bf16.mxu0 %v601
  %888 = vmatmul.mubr.bf16.gmra.mrb[0].mxu0 %v377
  %v889 = vpop.f32.mrb[0].mxu0
  %v890 = vadd.f32 0.0, %v889
  %v891 = vpop.f32.mrb[0].mxu0
  %v892 = vpop.f32.mrb[0].mxu0
  %v893 = vadd.f32 0.0, %v892
  %v894 = vpop.f32.mrb[0].mxu0
  %895 = vdwg.mxu0
  %vm896 = vcmask 162816
  %v897 = vsel %vm896, %v642, -inf
  %v898 = vsel %vm896, %v706, -inf
  %v899 = vmax.f32 %v897, %v898
  %v900 = vsel %vm896, %v770, -inf
  %v901 = vmax.f32 %v899, %v900
  %v902 = vsel %vm896, %v834, -inf
  %v903 = vmax.f32 %v901, %v902
  %v904 = vsel %vm896, %v645, -inf
  %v905 = vsel %vm896, %v709, -inf
  %v906 = vmax.f32 %v904, %v905
  %v907 = vsel %vm896, %v773, -inf
  %v908 = vmax.f32 %v906, %v907
  %v909 = vsel %vm896, %v837, -inf
  %v910 = vmax.f32 %v908, %v909
  %v911 = vsel %vm896, %v650, -inf
  %v912 = vsel %vm896, %v714, -inf
  %v913 = vmax.f32 %v911, %v912
  %v914 = vsel %vm896, %v778, -inf
  %v915 = vmax.f32 %v913, %v914
  %v916 = vsel %vm896, %v842, -inf
  %v917 = vmax.f32 %v915, %v916
  %v918 = vsel %vm896, %v653, -inf
  %v919 = vsel %vm896, %v717, -inf
  %v920 = vmax.f32 %v918, %v919
  %v921 = vsel %vm896, %v781, -inf
  %v922 = vmax.f32 %v920, %v921
  %v923 = vsel %vm896, %v845, -inf
  %v924 = vmax.f32 %v922, %v923
  %v925 = vsel %vm896, %v658, -inf
  %v926 = vsel %vm896, %v722, -inf
  %v927 = vmax.f32 %v925, %v926
  %v928 = vsel %vm896, %v786, -inf
  %v929 = vmax.f32 %v927, %v928
  %v930 = vsel %vm896, %v850, -inf
  %v931 = vmax.f32 %v929, %v930
  %v932 = vsel %vm896, %v661, -inf
  %v933 = vsel %vm896, %v725, -inf
  %v934 = vmax.f32 %v932, %v933
  %v935 = vsel %vm896, %v789, -inf
  %v936 = vmax.f32 %v934, %v935
  %v937 = vsel %vm896, %v853, -inf
  %v938 = vmax.f32 %v936, %v937
  %v939 = vsel %vm896, %v666, -inf
  %v940 = vsel %vm896, %v730, -inf
  %v941 = vmax.f32 %v939, %v940
  %v942 = vsel %vm896, %v794, -inf
  %v943 = vmax.f32 %v941, %v942
  %v944 = vsel %vm896, %v858, -inf
  %v945 = vmax.f32 %v943, %v944
  %v946 = vsel %vm896, %v669, -inf
  %v947 = vsel %vm896, %v733, -inf
  %v948 = vmax.f32 %v946, %v947
  %v949 = vsel %vm896, %v797, -inf
  %v950 = vmax.f32 %v948, %v949
  %v951 = vsel %vm896, %v861, -inf
  %v952 = vmax.f32 %v950, %v951
  %v953 = vsel %vm896, %v674, -inf
  %v954 = vsel %vm896, %v738, -inf
  %v955 = vmax.f32 %v953, %v954
  %v956 = vsel %vm896, %v802, -inf
  %v957 = vmax.f32 %v955, %v956
  %v958 = vsel %vm896, %v866, -inf
  %v959 = vmax.f32 %v957, %v958
  %v960 = vsel %vm896, %v677, -inf
  %v961 = vsel %vm896, %v741, -inf
  %v962 = vmax.f32 %v960, %v961
  %v963 = vsel %vm896, %v805, -inf
  %v964 = vmax.f32 %v962, %v963
  %v965 = vsel %vm896, %v869, -inf
  %v966 = vmax.f32 %v964, %v965
  %v967 = vsel %vm896, %v682, -inf
  %v968 = vsel %vm896, %v746, -inf
  %v969 = vmax.f32 %v967, %v968
  %v970 = vsel %vm896, %v810, -inf
  %v971 = vmax.f32 %v969, %v970
  %v972 = vsel %vm896, %v874, -inf
  %v973 = vmax.f32 %v971, %v972
  %v974 = vsel %vm896, %v685, -inf
  %v975 = vsel %vm896, %v749, -inf
  %v976 = vmax.f32 %v974, %v975
  %v977 = vsel %vm896, %v813, -inf
  %v978 = vmax.f32 %v976, %v977
  %v979 = vsel %vm896, %v877, -inf
  %v980 = vmax.f32 %v978, %v979
  %v981 = vsel %vm896, %v690, -inf
  %v982 = vsel %vm896, %v754, -inf
  %v983 = vmax.f32 %v981, %v982
  %v984 = vsel %vm896, %v818, -inf
  %v985 = vmax.f32 %v983, %v984
  %v986 = vsel %vm896, %v882, -inf
  %v987 = vmax.f32 %v985, %v986
  %v988 = vsel %vm896, %v693, -inf
  %v989 = vsel %vm896, %v757, -inf
  %v990 = vmax.f32 %v988, %v989
  %v991 = vsel %vm896, %v821, -inf
  %v992 = vmax.f32 %v990, %v991
  %v993 = vsel %vm896, %v885, -inf
  %v994 = vmax.f32 %v992, %v993
  %v995 = vsel %vm896, %v698, -inf
  %v996 = vsel %vm896, %v762, -inf
  %v997 = vmax.f32 %v995, %v996
  %v998 = vsel %vm896, %v826, -inf
  %v999 = vmax.f32 %v997, %v998
  %v1000 = vsel %vm896, %v890, -inf
  %v1001 = vmax.f32 %v999, %v1000
  %v1002 = vsel %vm896, %v701, -inf
  %v1003 = vsel %vm896, %v765, -inf
  %v1004 = vmax.f32 %v1002, %v1003
  %v1005 = vsel %vm896, %v829, -inf
  %v1006 = vmax.f32 %v1004, %v1005
  %v1007 = vsel %vm896, %v893, -inf
  %v1008 = vmax.f32 %v1006, %v1007
  %v1009 = vld [vmem:[%s2] sm:$0x1]
  %v1011 = vlaneseq
  %v1012 = vshrl.u32 %v1011, 7
  %v1013 = vsub.s32 0, %v1012
  %v1014 = vrot.slane %v1009, %v1013
  %v1016 = vadd.f32 %v903, %v1014
  %v1017 = vadd.f32 %v910, %v1014
  %v1018 = vadd.f32 %v917, %v1014
  %v1019 = vadd.f32 %v924, %v1014
  %v1020 = vadd.f32 %v931, %v1014
  %v1021 = vadd.f32 %v938, %v1014
  %v1022 = vadd.f32 %v945, %v1014
  %v1023 = vadd.f32 %v952, %v1014
  %v1024 = vadd.f32 %v959, %v1014
  %v1025 = vadd.f32 %v966, %v1014
  %v1026 = vadd.f32 %v973, %v1014
  %v1027 = vadd.f32 %v980, %v1014
  %v1028 = vadd.f32 %v987, %v1014
  %v1029 = vadd.f32 %v994, %v1014
  %v1030 = vadd.f32 %v1001, %v1014
  %v1031 = vadd.f32 %v1008, %v1014
  %v1032 = vmax.f32 %v1016, 0.0
  %v1033 = vmax.f32 %v1017, 0.0
  %v1034 = vmax.f32 %v1018, 0.0
  %v1035 = vmax.f32 %v1019, 0.0
  %v1036 = vmax.f32 %v1020, 0.0
  %v1037 = vmax.f32 %v1021, 0.0
  %v1038 = vmax.f32 %v1022, 0.0
  %v1039 = vmax.f32 %v1023, 0.0
  %v1040 = vmax.f32 %v1024, 0.0
  %v1041 = vmax.f32 %v1025, 0.0
  %v1042 = vmax.f32 %v1026, 0.0
  %v1043 = vmax.f32 %v1027, 0.0
  %v1044 = vmax.f32 %v1028, 0.0
  %v1045 = vmax.f32 %v1029, 0.0
  %v1046 = vmax.f32 %v1030, 0.0
  %v1047 = vmax.f32 %v1031, 0.0
  %v1056 = vrot.slane %v1034, 7
  %vm1057 = vcmask 1041409
  %v1058 = vsel %vm1057, %v1056, %v1032
  %v1059 = vrot.slane %v1036, 6
  %vm1060 = vcmask 1042434
  %v1061 = vsel %vm1060, %v1059, %v1058
  %v1062 = vrot.slane %v1038, 5
  %vm1063 = vcmask 1043459
  %v1064 = vsel %vm1063, %v1062, %v1061
  %v1065 = vrot.slane %v1040, 4
  %vm1066 = vcmask 1044484
  %v1067 = vsel %vm1066, %v1065, %v1064
  %v1068 = vrot.slane %v1042, 3
  %vm1069 = vcmask 1045509
  %v1070 = vsel %vm1069, %v1068, %v1067
  %v1071 = vrot.slane %v1044, 2
  %vm1072 = vcmask 1046534
  %v1073 = vsel %vm1072, %v1071, %v1070
  %v1074 = vrot.slane %v1046, 1
  %vm1075 = vcmask 1047559
  %v1076 = vsel %vm1075, %v1074, %v1073
  %1078 = vst.msk [vmem:[#allocation2] sm:$0xff] %vm896, %v1076
  %v1079 = vrot.slane %v1032, 1
  %v1080 = vsel %vm1057, %v1034, %v1079
  %v1081 = vrot.slane %v1036, 7
  %v1082 = vsel %vm1060, %v1081, %v1080
  %v1083 = vrot.slane %v1038, 6
  %v1084 = vsel %vm1063, %v1083, %v1082
  %v1085 = vrot.slane %v1040, 5
  %v1086 = vsel %vm1066, %v1085, %v1084
  %v1087 = vrot.slane %v1042, 4
  %v1088 = vsel %vm1069, %v1087, %v1086
  %v1089 = vrot.slane %v1044, 3
  %v1090 = vsel %vm1072, %v1089, %v1088
  %v1091 = vrot.slane %v1046, 2
  %v1092 = vsel %vm1075, %v1091, %v1090
  %1093 = vrot.lane.b32.xlu0 %v1092, 20
  %v1094 = vpop.permute.xlu0 %1093
  %vm1096 = vcmask 326816
  %1097 = vst.msk [vmem:[#allocation2] sm:$0xff] %vm1096, %v1094
  %v1098 = vrot.slane %v1032, 2
  %v1099 = vrot.slane %v1034, 1
  %v1100 = vsel %vm1057, %v1099, %v1098
  %v1101 = vsel %vm1060, %v1036, %v1100
  %v1102 = vrot.slane %v1038, 7
  %v1103 = vsel %vm1063, %v1102, %v1101
  %v1104 = vrot.slane %v1040, 6
  %v1105 = vsel %vm1066, %v1104, %v1103
  %v1106 = vrot.slane %v1042, 5
  %v1107 = vsel %vm1069, %v1106, %v1105
  %v1108 = vrot.slane %v1044, 4
  %v1109 = vsel %vm1072, %v1108, %v1107
  %v1110 = vrot.slane %v1046, 3
  %v1111 = vsel %vm1075, %v1110, %v1109
  %1112 = vrot.lane.b32.xlu0 %v1111, 40
  %v1113 = vpop.permute.xlu0 %1112
  %vm1115 = vcmask 490816
  %1116 = vst.msk [vmem:[#allocation2] sm:$0xff] %vm1115, %v1113
  %v1117 = vrot.slane %v1032, 3
  %v1118 = vrot.slane %v1034, 2
  %v1119 = vsel %vm1057, %v1118, %v1117
  %v1120 = vrot.slane %v1036, 1
  %v1121 = vsel %vm1060, %v1120, %v1119
  %v1122 = vsel %vm1063, %v1038, %v1121
  %v1123 = vrot.slane %v1040, 7
  %v1124 = vsel %vm1066, %v1123, %v1122
  %v1125 = vrot.slane %v1042, 6
  %v1126 = vsel %vm1069, %v1125, %v1124
  %v1127 = vrot.slane %v1044, 5
  %v1128 = vsel %vm1072, %v1127, %v1126
  %v1129 = vrot.slane %v1046, 4
  %v1130 = vsel %vm1075, %v1129, %v1128
  %1131 = vrot.lane.b32.xlu0 %v1130, 60
  %v1132 = vpop.permute.xlu0 %1131
  %vm1134 = vcmask 654816
  %1135 = vst.msk [vmem:[#allocation2] sm:$0xff] %vm1134, %v1132
  %v1136 = vrot.slane %v1032, 4
  %v1137 = vrot.slane %v1034, 3
  %v1138 = vsel %vm1057, %v1137, %v1136
  %v1139 = vrot.slane %v1036, 2
  %v1140 = vsel %vm1060, %v1139, %v1138
  %v1141 = vrot.slane %v1038, 1
  %v1142 = vsel %vm1063, %v1141, %v1140
  %v1143 = vsel %vm1066, %v1040, %v1142
  %v1144 = vrot.slane %v1042, 7
  %v1145 = vsel %vm1069, %v1144, %v1143
  %v1146 = vrot.slane %v1044, 6
  %v1147 = vsel %vm1072, %v1146, %v1145
  %v1148 = vrot.slane %v1046, 5
  %v1149 = vsel %vm1075, %v1148, %v1147
  %1150 = vrot.lane.b32.xlu0 %v1149, 80
  %v1151 = vpop.permute.xlu0 %1150
  %vm1153 = vcmask 818816
  %1154 = vst.msk [vmem:[#allocation2] sm:$0xff] %vm1153, %v1151
  %v1155 = vrot.slane %v1032, 5
  %v1156 = vrot.slane %v1034, 4
  %v1157 = vsel %vm1057, %v1156, %v1155
  %v1158 = vrot.slane %v1036, 3
  %v1159 = vsel %vm1060, %v1158, %v1157
  %v1160 = vrot.slane %v1038, 2
  %v1161 = vsel %vm1063, %v1160, %v1159
  %v1162 = vrot.slane %v1040, 1
  %v1163 = vsel %vm1066, %v1162, %v1161
  %v1164 = vsel %vm1069, %v1042, %v1163
  %v1165 = vrot.slane %v1044, 7
  %v1166 = vsel %vm1072, %v1165, %v1164
  %v1167 = vrot.slane %v1046, 6
  %v1168 = vsel %vm1075, %v1167, %v1166
  %1169 = vrot.lane.b32.xlu0 %v1168, 100
  %v1170 = vpop.permute.xlu0 %1169
  %vm1172 = vcmask 982816
  %1173 = vst.msk [vmem:[#allocation2] sm:$0xff] %vm1172, %v1170
  %v1174 = vrot.slane %v1032, 6
  %v1175 = vrot.slane %v1034, 5
  %v1176 = vsel %vm1057, %v1175, %v1174
  %v1177 = vrot.slane %v1036, 4
  %v1178 = vsel %vm1060, %v1177, %v1176
  %v1179 = vrot.slane %v1038, 3
  %v1180 = vsel %vm1063, %v1179, %v1178
  %v1181 = vrot.slane %v1040, 2
  %v1182 = vsel %vm1066, %v1181, %v1180
  %v1183 = vrot.slane %v1042, 1
  %v1184 = vsel %vm1069, %v1183, %v1182
  %v1185 = vsel %vm1072, %v1044, %v1184
  %v1186 = vrot.slane %v1046, 7
  %v1187 = vsel %vm1075, %v1186, %v1185
  %1188 = vrot.lane.b32.xlu0 %v1187, 120
  %v1189 = vpop.permute.xlu0 %1188
  %vm1191 = vcmask 1048512
  %1192 = vst.msk [vmem:[#allocation2] sm:$0xff] %vm1191, %v1189
  %vm1193 = vcmask 97280
  %1194 = vst.msk [vmem:[#allocation2 + $0x8] sm:$0xff] %vm1193, %v1189
  %v1195 = vrot.slane %v1032, 7
  %v1196 = vrot.slane %v1034, 6
  %v1197 = vsel %vm1057, %v1196, %v1195
  %v1198 = vrot.slane %v1036, 5
  %v1199 = vsel %vm1060, %v1198, %v1197
  %v1200 = vrot.slane %v1038, 4
  %v1201 = vsel %vm1063, %v1200, %v1199
  %v1202 = vrot.slane %v1040, 3
  %v1203 = vsel %vm1066, %v1202, %v1201
  %v1204 = vrot.slane %v1042, 2
  %v1205 = vsel %vm1069, %v1204, %v1203
  %v1206 = vrot.slane %v1044, 1
  %v1207 = vsel %vm1072, %v1206, %v1205
  %v1208 = vsel %vm1075, %v1046, %v1207
  %1209 = vrot.lane.b32.xlu0 %v1208, 12
  %v1210 = vpop.permute.xlu0 %1209
  %vm1212 = vcmask 261216
  %1213 = vst.msk [vmem:[#allocation2 + $0x8] sm:$0xff] %vm1212, %v1210
  %v1222 = vrot.slane %v1035, 7
  %v1223 = vsel %vm1057, %v1222, %v1033
  %v1224 = vrot.slane %v1037, 6
  %v1225 = vsel %vm1060, %v1224, %v1223
  %v1226 = vrot.slane %v1039, 5
  %v1227 = vsel %vm1063, %v1226, %v1225
  %v1228 = vrot.slane %v1041, 4
  %v1229 = vsel %vm1066, %v1228, %v1227
  %v1230 = vrot.slane %v1043, 3
  %v1231 = vsel %vm1069, %v1230, %v1229
  %v1232 = vrot.slane %v1045, 2
  %v1233 = vsel %vm1072, %v1232, %v1231
  %v1234 = vrot.slane %v1047, 1
  %v1235 = vsel %vm1075, %v1234, %v1233
  %1236 = vrot.lane.b32.xlu0 %v1235, 32
  %v1237 = vpop.permute.xlu0 %1236
  %vm1239 = vcmask 425216
  %1240 = vst.msk [vmem:[#allocation2 + $0x8] sm:$0xff] %vm1239, %v1237
  %v1241 = vrot.slane %v1033, 1
  %v1242 = vsel %vm1057, %v1035, %v1241
  %v1243 = vrot.slane %v1037, 7
  %v1244 = vsel %vm1060, %v1243, %v1242
  %v1245 = vrot.slane %v1039, 6
  %v1246 = vsel %vm1063, %v1245, %v1244
  %v1247 = vrot.slane %v1041, 5
  %v1248 = vsel %vm1066, %v1247, %v1246
  %v1249 = vrot.slane %v1043, 4
  %v1250 = vsel %vm1069, %v1249, %v1248
  %v1251 = vrot.slane %v1045, 3
  %v1252 = vsel %vm1072, %v1251, %v1250
  %v1253 = vrot.slane %v1047, 2
  %v1254 = vsel %vm1075, %v1253, %v1252
  %1255 = vrot.lane.b32.xlu0 %v1254, 52
  %v1256 = vpop.permute.xlu0 %1255
  %vm1258 = vcmask 589216
  %1259 = vst.msk [vmem:[#allocation2 + $0x8] sm:$0xff] %vm1258, %v1256
  %v1260 = vrot.slane %v1033, 2
  %v1261 = vrot.slane %v1035, 1
  %v1262 = vsel %vm1057, %v1261, %v1260
  %v1263 = vsel %vm1060, %v1037, %v1262
  %v1264 = vrot.slane %v1039, 7
  %v1265 = vsel %vm1063, %v1264, %v1263
  %v1266 = vrot.slane %v1041, 6
  %v1267 = vsel %vm1066, %v1266, %v1265
  %v1268 = vrot.slane %v1043, 5
  %v1269 = vsel %vm1069, %v1268, %v1267
  %v1270 = vrot.slane %v1045, 4
  %v1271 = vsel %vm1072, %v1270, %v1269
  %v1272 = vrot.slane %v1047, 3
  %v1273 = vsel %vm1075, %v1272, %v1271
  %1274 = vrot.lane.b32.xlu0 %v1273, 72
  %v1275 = vpop.permute.xlu0 %1274
  %vm1277 = vcmask 753216
  %1278 = vst.msk [vmem:[#allocation2 + $0x8] sm:$0xff] %vm1277, %v1275
  %v1279 = vrot.slane %v1033, 3
  %v1280 = vrot.slane %v1035, 2
  %v1281 = vsel %vm1057, %v1280, %v1279
  %v1282 = vrot.slane %v1037, 1
  %v1283 = vsel %vm1060, %v1282, %v1281
  %v1284 = vsel %vm1063, %v1039, %v1283
  %v1285 = vrot.slane %v1041, 7
  %v1286 = vsel %vm1066, %v1285, %v1284
  %v1287 = vrot.slane %v1043, 6
  %v1288 = vsel %vm1069, %v1287, %v1286
  %v1289 = vrot.slane %v1045, 5
  %v1290 = vsel %vm1072, %v1289, %v1288
  %v1291 = vrot.slane %v1047, 4
  %v1292 = vsel %vm1075, %v1291, %v1290
  %1293 = vrot.lane.b32.xlu0 %v1292, 92
  %v1294 = vpop.permute.xlu0 %1293
  %vm1296 = vcmask 917216
  %1297 = vst.msk [vmem:[#allocation2 + $0x8] sm:$0xff] %vm1296, %v1294
  %v1298 = vrot.slane %v1033, 4
  %v1299 = vrot.slane %v1035, 3
  %v1300 = vsel %vm1057, %v1299, %v1298
  %v1301 = vrot.slane %v1037, 2
  %v1302 = vsel %vm1060, %v1301, %v1300
  %v1303 = vrot.slane %v1039, 1
  %v1304 = vsel %vm1063, %v1303, %v1302
  %v1305 = vsel %vm1066, %v1041, %v1304
  %v1306 = vrot.slane %v1043, 7
  %v1307 = vsel %vm1069, %v1306, %v1305
  %v1308 = vrot.slane %v1045, 6
  %v1309 = vsel %vm1072, %v1308, %v1307
  %v1310 = vrot.slane %v1047, 5
  %v1311 = vsel %vm1075, %v1310, %v1309
  %1312 = vrot.lane.b32.xlu0 %v1311, 112
  %v1313 = vpop.permute.xlu0 %1312
  %vm1315 = vcmask 1048448
  %1316 = vst.msk [vmem:[#allocation2 + $0x8] sm:$0xff] %vm1315, %v1313
  %vm1317 = vcmask 31744
  %1318 = vst.msk [vmem:[#allocation2 + $0x10] sm:$0xff] %vm1317, %v1313
  %v1319 = vrot.slane %v1033, 5
  %v1320 = vrot.slane %v1035, 4
  %v1321 = vsel %vm1057, %v1320, %v1319
  %v1322 = vrot.slane %v1037, 3
  %v1323 = vsel %vm1060, %v1322, %v1321
  %v1324 = vrot.slane %v1039, 2
  %v1325 = vsel %vm1063, %v1324, %v1323
  %v1326 = vrot.slane %v1041, 1
  %v1327 = vsel %vm1066, %v1326, %v1325
  %v1328 = vsel %vm1069, %v1043, %v1327
  %v1329 = vrot.slane %v1045, 7
  %v1330 = vsel %vm1072, %v1329, %v1328
  %v1331 = vrot.slane %v1047, 6
  %v1332 = vsel %vm1075, %v1331, %v1330
  %1333 = vrot.lane.b32.xlu0 %v1332, 4
  %v1334 = vpop.permute.xlu0 %1333
  %vm1336 = vcmask 195616
  %1337 = vst.msk [vmem:[#allocation2 + $0x10] sm:$0xff] %vm1336, %v1334
  %v1338 = vrot.slane %v1033, 6
  %v1339 = vrot.slane %v1035, 5
  %v1340 = vsel %vm1057, %v1339, %v1338
  %v1341 = vrot.slane %v1037, 4
  %v1342 = vsel %vm1060, %v1341, %v1340
  %v1343 = vrot.slane %v1039, 3
  %v1344 = vsel %vm1063, %v1343, %v1342
  %v1345 = vrot.slane %v1041, 2
  %v1346 = vsel %vm1066, %v1345, %v1344
  %v1347 = vrot.slane %v1043, 1
  %v1348 = vsel %vm1069, %v1347, %v1346
  %v1349 = vsel %vm1072, %v1045, %v1348
  %v1350 = vrot.slane %v1047, 7
  %v1351 = vsel %vm1075, %v1350, %v1349
  %1352 = vrot.lane.b32.xlu0 %v1351, 24
  %v1353 = vpop.permute.xlu0 %1352
  %vm1355 = vcmask 359616
  %1356 = vst.msk [vmem:[#allocation2 + $0x10] sm:$0xff] %vm1355, %v1353
  %v1357 = vrot.slane %v1033, 7
  %v1358 = vrot.slane %v1035, 6
  %v1359 = vsel %vm1057, %v1358, %v1357
  %v1360 = vrot.slane %v1037, 5
  %v1361 = vsel %vm1060, %v1360, %v1359
  %v1362 = vrot.slane %v1039, 4
  %v1363 = vsel %vm1063, %v1362, %v1361
  %v1364 = vrot.slane %v1041, 3
  %v1365 = vsel %vm1066, %v1364, %v1363
  %v1366 = vrot.slane %v1043, 2
  %v1367 = vsel %vm1069, %v1366, %v1365
  %v1368 = vrot.slane %v1045, 1
  %v1369 = vsel %vm1072, %v1368, %v1367
  %v1370 = vsel %vm1075, %v1047, %v1369
  %1371 = vrot.lane.b32.xlu0 %v1370, 44
  %v1372 = vpop.permute.xlu0 %1371
  %vm1374 = vcmask 523616
  %1375 = vst.msk [vmem:[#allocation2 + $0x10] sm:$0xff] %vm1374, %v1372
  %v1376 = vld [vmem:[#allocation2] sm:$0xff]
  %v1377 = vld [vmem:[#allocation2 + $0x8] sm:$0xff]
  %v1378 = vld [vmem:[#allocation2 + $0x10] sm:$0xff]
  %v1379 = vld [vmem:[%s3] sm:$0xff]
  %v1380 = vld [vmem:[%s3 + $0x8] sm:$0xff]
  %v1381 = vld [vmem:[%s3 + $0x10] sm:$0xff]
  %v1382 = vld [vmem:[%s3 + $0x18] sm:$0xff]
  %v1383 = vld [vmem:[%s3 + $0x20] sm:$0xff]
  %v1384 = vld [vmem:[%s3 + $0x28] sm:$0xff]
  %v1385 = vld [vmem:[%s3 + $0x30] sm:$0xff]
  %v1386 = vld [vmem:[%s3 + $0x38] sm:$0xff]
  %v1387 = vld [vmem:[%s3 + $0x40] sm:$0xff]
  %v1388 = vld [vmem:[%s3 + $0x48] sm:$0xff]
  %v1389 = vld [vmem:[%s3 + $0x50] sm:$0xff]
  %v1390 = vld [vmem:[%s3 + $0x58] sm:$0xff]
  %v1391 = vld [vmem:[%s3 + $0x60] sm:$0xff]
  %v1392 = vld [vmem:[%s3 + $0x68] sm:$0xff]
  %v1393 = vld [vmem:[%s3 + $0x70] sm:$0xff]
  %v1394 = vld [vmem:[%s3 + $0x78] sm:$0xff]
  %v1395 = vld [vmem:[%s3 + $0x80] sm:$0xff]
  %v1396 = vld [vmem:[%s3 + $0x88] sm:$0xff]
  %v1397 = vld [vmem:[%s3 + $0x90] sm:$0xff]
  %v1398 = vld [vmem:[%s3 + $0x98] sm:$0xff]
  %v1399 = vld [vmem:[%s3 + $0xa0] sm:$0xff]
  %v1400 = vld [vmem:[%s3 + $0xa8] sm:$0xff]
  %v1401 = vld [vmem:[%s3 + $0xb0] sm:$0xff]
  %v1402 = vld [vmem:[%s3 + $0xb8] sm:$0xff]
  %v1403 = vld [vmem:[%s3 + $0xc0] sm:$0xff]
  %v1404 = vld [vmem:[%s3 + $0xc8] sm:$0xff]
  %v1405 = vld [vmem:[%s3 + $0xd0] sm:$0xff]
  %v1406 = vld [vmem:[%s3 + $0xd8] sm:$0xff]
  %v1407 = vld [vmem:[%s3 + $0xe0] sm:$0xff]
  %v1408 = vld [vmem:[%s3 + $0xe8] sm:$0xff]
  %v1409 = vld [vmem:[%s3 + $0xf0] sm:$0xff]
  %v1410 = vld [vmem:[%s3 + $0xf8] sm:$0xff]
  %v1411 = vld [vmem:[%s3 + $0x100] sm:$0xff]
  %v1412 = vld [vmem:[%s3 + $0x108] sm:$0xff]
  %v1413 = vld [vmem:[%s3 + $0x110] sm:$0xff]
  %v1414 = vld [vmem:[%s3 + $0x118] sm:$0xff]
  %v1415 = vld [vmem:[%s3 + $0x120] sm:$0xff]
  %v1416 = vld [vmem:[%s3 + $0x128] sm:$0xff]
  %v1417 = vld [vmem:[%s3 + $0x130] sm:$0xff]
  %v1418 = vld [vmem:[%s3 + $0x138] sm:$0xff]
  %v1419 = vld [vmem:[%s4] sm:$0x1]
  %v1421 = vlaneseq
  %v1422 = vshrl.u32 %v1421, 7
  %v1423 = vsub.s32 0, %v1422
  %v1424 = vrot.slane %v1419, %v1423
  %vm1426 = vcmask 523264
  %v1428 = vsel %vm1426, %v1378, 0
  %1430 = vmatprep.subr.mxu0 0.0
  %1431 = vmatpush1.msra.mxu0 %v1379
  %1432 = vmatprep.subr.mxu0 0.0
  %1433 = vmatpush1.msra.mxu0 %v1380
  %1434 = vmatprep.subr.mxu0 0.0
  %1435 = vmatpush1.msra.mxu0 %v1381
  %1436 = vmatprep.subr.mxu0 0.0
  %1437 = vmatpush1.msra.mxu0 %v1382
  %1438 = vmatprep.subr.mxu0 0.0
  %1439 = vmatpush1.msra.mxu0 %v1383
  %1440 = vmatprep.subr.mxu0 0.0
  %1441 = vmatpush1.msra.mxu0 %v1384
  %1442 = vmatprep.subr.mxu0 0.0
  %1443 = vmatpush1.msra.mxu0 %v1385
  %1444 = vmatprep.subr.mxu0 0.0
  %1445 = vmatpush1.msra.mxu0 %v1386
  %1446 = vmatprep.subr.mxu0 0.0
  %1447 = vmatpush1.msra.mxu0 %v1387
  %1448 = vmatprep.subr.mxu0 0.0
  %1449 = vmatpush1.msra.mxu0 %v1388
  %1450 = vmatprep.subr.mxu0 0.0
  %1451 = vmatpush1.msra.mxu0 %v1389
  %1452 = vmatprep.subr.mxu0 0.0
  %1453 = vmatpush1.msra.mxu0 %v1390
  %1454 = vmatprep.subr.mxu0 0.0
  %1455 = vmatpush1.msra.mxu0 %v1391
  %1456 = vmatprep.subr.mxu0 0.0
  %1457 = vmatpush1.msra.mxu0 %v1392
  %1458 = vmatprep.subr.mxu0 0.0
  %1459 = vmatpush1.msra.mxu0 %v1393
  %1460 = vmatprep.subr.mxu0 0.0
  %1461 = vmatpush1.msra.mxu0 %v1394
  %1462 = vmatprep.subr.mxu0 0.0
  %1463 = vmatpush1.msra.mxu0 %v1395
  %1464 = vmatprep.subr.mxu0 0.0
  %1465 = vmatpush1.msra.mxu0 %v1396
  %1466 = vmatprep.subr.mxu0 0.0
  %1467 = vmatpush1.msra.mxu0 %v1397
  %1468 = vmatprep.subr.mxu0 0.0
  %1469 = vmatpush1.msra.mxu0 %v1398
  %1470 = vmatprep.subr.mxu0 0.0
  %1471 = vmatpush1.msra.mxu0 %v1399
  %1472 = vmatprep.subr.mxu0 0.0
  %1473 = vmatpush1.msra.mxu0 %v1400
  %1474 = vmatprep.subr.mxu0 0.0
  %1475 = vmatpush1.msra.mxu0 %v1401
  %1476 = vmatprep.subr.mxu0 0.0
  %1477 = vmatpush1.msra.mxu0 %v1402
  %1478 = vmatprep.subr.mxu0 0.0
  %1479 = vmatpush1.msra.mxu0 %v1403
  %1480 = vmatprep.subr.mxu0 0.0
  %1481 = vmatpush1.msra.mxu0 %v1404
  %1482 = vmatprep.subr.mxu0 0.0
  %1483 = vmatpush1.msra.mxu0 %v1405
  %1484 = vmatprep.subr.mxu0 0.0
  %1485 = vmatpush1.msra.mxu0 %v1406
  %1486 = vmatprep.subr.mxu0 0.0
  %1487 = vmatpush1.msra.mxu0 %v1407
  %1488 = vmatprep.subr.mxu0 0.0
  %1489 = vmatpush1.msra.mxu0 %v1408
  %1490 = vmatprep.subr.mxu0 0.0
  %1491 = vmatpush1.msra.mxu0 %v1409
  %1492 = vmatprep.subr.mxu0 0.0
  %1493 = vmatpush1.msra.mxu0 %v1410
  %1494 = vmatprep.mubr.f32.mxu0 %v1377
  %1495 = vmatmul.mubr.f32.gmra.mrb[0].mxu0 %v1376
  %v1496 = vpop.f32.mrb[0].mxu0
  %v1497 = vadd.f32 %v1424, %v1496
  %v1498 = vpop.f32.mrb[0].mxu0
  %1499 = vdwg.mxu0
  %1500 = vmatprep.subr.mxu0 0.0
  %1501 = vmatpush1.msra.mxu0 %v1411
  %1502 = vmatprep.subr.mxu0 0.0
  %1503 = vmatpush1.msra.mxu0 %v1412
  %1504 = vmatprep.subr.mxu0 0.0
  %1505 = vmatpush1.msra.mxu0 %v1413
  %1506 = vmatprep.subr.mxu0 0.0
  %1507 = vmatpush1.msra.mxu0 %v1414
  %1508 = vmatprep.subr.mxu0 0.0
  %1509 = vmatpush1.msra.mxu0 %v1415
  %1510 = vmatprep.subr.mxu0 0.0
  %1511 = vmatpush1.msra.mxu0 %v1416
  %1512 = vmatprep.subr.mxu0 0.0
  %1513 = vmatpush1.msra.mxu0 %v1417
  %1514 = vmatprep.subr.mxu0 0.0
  %1515 = vmatpush1.msra.mxu0 %v1418
  %1516 = vmatprep.subr.mxu0 0.0
  %1517 = vmatpush1.msra.mxu0 0.0
  %1518 = vmatprep.subr.mxu0 0.0
  %1519 = vmatpush1.msra.mxu0 0.0
  %1520 = vmatprep.subr.mxu0 0.0
  %1521 = vmatpush1.msra.mxu0 0.0
  %1522 = vmatprep.subr.mxu0 0.0
  %1523 = vmatpush1.msra.mxu0 0.0
  %1524 = vmatprep.subr.mxu0 0.0
  %1525 = vmatpush1.msra.mxu0 0.0
  %1526 = vmatprep.subr.mxu0 0.0
  %1527 = vmatpush1.msra.mxu0 0.0
  %1528 = vmatprep.subr.mxu0 0.0
  %1529 = vmatpush1.msra.mxu0 0.0
  %1530 = vmatprep.subr.mxu0 0.0
  %1531 = vmatpush1.msra.mxu0 0.0
  %1532 = vmatprep.subr.mxu0 0.0
  %1533 = vmatpush1.msra.mxu0 0.0
  %1534 = vmatprep.subr.mxu0 0.0
  %1535 = vmatpush1.msra.mxu0 0.0
  %1536 = vmatprep.subr.mxu0 0.0
  %1537 = vmatpush1.msra.mxu0 0.0
  %1538 = vmatprep.subr.mxu0 0.0
  %1539 = vmatpush1.msra.mxu0 0.0
  %1540 = vmatprep.subr.mxu0 0.0
  %1541 = vmatpush1.msra.mxu0 0.0
  %1542 = vmatprep.subr.mxu0 0.0
  %1543 = vmatpush1.msra.mxu0 0.0
  %1544 = vmatprep.subr.mxu0 0.0
  %1545 = vmatpush1.msra.mxu0 0.0
  %1546 = vmatprep.subr.mxu0 0.0
  %1547 = vmatpush1.msra.mxu0 0.0
  %1548 = vmatprep.subr.mxu0 0.0
  %1549 = vmatpush1.msra.mxu0 0.0
  %1550 = vmatprep.subr.mxu0 0.0
  %1551 = vmatpush1.msra.mxu0 0.0
  %1552 = vmatprep.subr.mxu0 0.0
  %1553 = vmatpush1.msra.mxu0 0.0
  %1554 = vmatprep.subr.mxu0 0.0
  %1555 = vmatpush1.msra.mxu0 0.0
  %1556 = vmatprep.subr.mxu0 0.0
  %1557 = vmatpush1.msra.mxu0 0.0
  %1558 = vmatprep.subr.mxu0 0.0
  %1559 = vmatpush1.msra.mxu0 0.0
  %1560 = vmatprep.subr.mxu0 0.0
  %1561 = vmatpush1.msra.mxu0 0.0
  %1562 = vmatprep.subr.mxu0 0.0
  %1563 = vmatpush1.msra.mxu0 0.0
  %1564 = vmatprep.mubr.f32.mxu0 0.0
  %1565 = vmatmul.mubr.f32.gmra.mrb[0].mxu0 %v1428
  %v1566 = vpop.f32.mrb[0].mxu0
  %v1567 = vadd.f32 %v1497, %v1566
  %v1568 = vpop.f32.mrb[0].mxu0
  %1569 = vdwg.mxu0
  %v1570 = vmax.f32 %v1567, 0.0
  %v1571 = vld [vmem:[%s5] sm:$0xff]
  %v1572 = vld [vmem:[%s5 + $0x8] sm:$0xff]
  %v1573 = vld [vmem:[%s5 + $0x10] sm:$0xff]
  %v1574 = vld [vmem:[%s5 + $0x18] sm:$0xff]
  %v1575 = vld [vmem:[%s5 + $0x20] sm:$0xff]
  %v1576 = vld [vmem:[%s5 + $0x28] sm:$0xff]
  %v1577 = vld [vmem:[%s5 + $0x30] sm:$0xff]
  %v1578 = vld [vmem:[%s5 + $0x38] sm:$0xff]
  %v1579 = vld [vmem:[%s5 + $0x40] sm:$0xff]
  %v1580 = vld [vmem:[%s5 + $0x48] sm:$0xff]
  %v1581 = vld [vmem:[%s5 + $0x50] sm:$0xff]
  %v1582 = vld [vmem:[%s5 + $0x58] sm:$0xff]
  %v1583 = vld [vmem:[%s5 + $0x60] sm:$0xf]
  %v1584 = vld [vmem:[%s6] sm:$0x1]
  %v1586 = vlaneseq
  %v1587 = vshrl.u32 %v1586, 7
  %v1588 = vsub.s32 0, %v1587
  %v1589 = vrot.slane %v1584, %v1588
  %vm1591 = vcmask 818176
  %v1593 = vsel %vm1591, %v1570, 0
  %vm1595 = vcmask 1043456
  %v1597 = vsel %vm1595, %v1583, 0
  %1599 = vmatprep.subr.mxu0 0.0
  %1600 = vmatpush1.msra.mxu0 %v1571
  %1601 = vmatprep.subr.mxu0 0.0
  %1602 = vmatpush1.msra.mxu0 %v1572
  %1603 = vmatprep.subr.mxu0 0.0
  %1604 = vmatpush1.msra.mxu0 %v1573
  %1605 = vmatprep.subr.mxu0 0.0
  %1606 = vmatpush1.msra.mxu0 %v1574
  %1607 = vmatprep.subr.mxu0 0.0
  %1608 = vmatpush1.msra.mxu0 %v1575
  %1609 = vmatprep.subr.mxu0 0.0
  %1610 = vmatpush1.msra.mxu0 %v1576
  %1611 = vmatprep.subr.mxu0 0.0
  %1612 = vmatpush1.msra.mxu0 %v1577
  %1613 = vmatprep.subr.mxu0 0.0
  %1614 = vmatpush1.msra.mxu0 %v1578
  %1615 = vmatprep.subr.mxu0 0.0
  %1616 = vmatpush1.msra.mxu0 %v1579
  %1617 = vmatprep.subr.mxu0 0.0
  %1618 = vmatpush1.msra.mxu0 %v1580
  %1619 = vmatprep.subr.mxu0 0.0
  %1620 = vmatpush1.msra.mxu0 %v1581
  %1621 = vmatprep.subr.mxu0 0.0
  %1622 = vmatpush1.msra.mxu0 %v1582
  %1623 = vmatprep.subr.mxu0 0.0
  %1624 = vmatpush1.msra.mxu0 %v1597
  %1625 = vmatprep.subr.mxu0 0.0
  %1626 = vmatpush1.msra.mxu0 0.0
  %1627 = vmatprep.subr.mxu0 0.0
  %1628 = vmatpush1.msra.mxu0 0.0
  %1629 = vmatprep.subr.mxu0 0.0
  %1630 = vmatpush1.msra.mxu0 0.0
  %1631 = vmatprep.subr.mxu0 0.0
  %1632 = vmatpush1.msra.mxu0 0.0
  %1633 = vmatprep.subr.mxu0 0.0
  %1634 = vmatpush1.msra.mxu0 0.0
  %1635 = vmatprep.subr.mxu0 0.0
  %1636 = vmatpush1.msra.mxu0 0.0
  %1637 = vmatprep.subr.mxu0 0.0
  %1638 = vmatpush1.msra.mxu0 0.0
  %1639 = vmatprep.subr.mxu0 0.0
  %1640 = vmatpush1.msra.mxu0 0.0
  %1641 = vmatprep.subr.mxu0 0.0
  %1642 = vmatpush1.msra.mxu0 0.0
  %1643 = vmatprep.subr.mxu0 0.0
  %1644 = vmatpush1.msra.mxu0 0.0
  %1645 = vmatprep.subr.mxu0 0.0
  %1646 = vmatpush1.msra.mxu0 0.0
  %1647 = vmatprep.subr.mxu0 0.0
  %1648 = vmatpush1.msra.mxu0 0.0
  %1649 = vmatprep.subr.mxu0 0.0
  %1650 = vmatpush1.msra.mxu0 0.0
  %1651 = vmatprep.subr.mxu0 0.0
  %1652 = vmatpush1.msra.mxu0 0.0
  %1653 = vmatprep.subr.mxu0 0.0
  %1654 = vmatpush1.msra.mxu0 0.0
  %1655 = vmatprep.subr.mxu0 0.0
  %1656 = vmatpush1.msra.mxu0 0.0
  %1657 = vmatprep.subr.mxu0 0.0
  %1658 = vmatpush1.msra.mxu0 0.0
  %1659 = vmatprep.subr.mxu0 0.0
  %1660 = vmatpush1.msra.mxu0 0.0
  %1661 = vmatprep.subr.mxu0 0.0
  %1662 = vmatpush1.msra.mxu0 0.0
  %1663 = vmatprep.mubr.f32.mxu0 0.0
  %1664 = vmatmul.mubr.f32.gmra.mrb[0].mxu0 %v1593
  %v1665 = vpop.f32.mrb[0].mxu0
  %v1666 = vadd.f32 %v1589, %v1665
  %v1667 = vpop.f32.mrb[0].mxu0
  %1668 = vdwg.mxu0
  %v1669 = vmax.f32 %v1666, 0.0
  %vm1670 = vcmask 80896
  %v1671 = vsel %vm1670, %v1669, -inf
  %1672 = vmax.xlane.f32.xlu0 %v1671
  %v1673 = vpop.xlane.xlu0 %1672
  %v1674 = vsub.f32 %v1669, %v1673
  %v1675 = vmul.f32 %v1674, 1.442695
  %v1676 = vpow.pop %v1675
  %v1677 = vsel %vm1670, %v1676, 0.0
  %1678 = vadd.xlane.f32.xlu0 %v1677
  %v1679 = vpop.xlane.xlu0 %1678
  %v1680 = vlog2.pop %v1679
  %v1681 = vmul.f32 %v1680, 0.6931472
  %v1682 = vadd.f32 %v1673, %v1681
  %v1683 = vsub.f32 %v1669, %v1682
  %1684 = vst.msk [vmem:[%s7] sm:$0xff] %vm1670, %v1683
  // Predicated region
  $region30: #{cnn_forward.3} parent=0 // pred_check
    _
  $region31: #{cnn_forward.3} parent=0 // pred_check_branch
    %1686 = sbr.rel (0) target = $region33
  $region32: #{cnn_forward.3} parent=0 // pred_region
    _
  $region33: #{cnn_forward.3} parent=0 // pred_fallthru
    _
  // Predicated region
  $region34: #{cnn_forward.3} parent=0 // pred_check
    _
  $region35: #{cnn_forward.3} parent=0 // pred_check_branch
    %1688 = sbr.rel (0) target = $region37
  $region36: #{cnn_forward.3} parent=0 // pred_region
    _
  $region37: #{cnn_forward.3} parent=0 // pred_fallthru
    _

</llo_original>
